<compile_context>
chip_gen: v7x
topology: tpu7x:2x2x1
jax: 0.10.0
libtpu: 0.0.40
codegen_flags: <defaults>
</compile_context>

<pallas_src>
import functools
import math

import numpy as np
import jax
import jax.numpy as jnp
from jax import lax
from jax.experimental import pallas as pl
from jax.experimental.pallas import tpu as pltpu


# ----------------------------------------------------------------------------
# Device-derived VMEM budget
# ----------------------------------------------------------------------------
def _phys_vmem_bytes():
    try:
        return int(pltpu.get_tpu_info().vmem_capacity_bytes)
    except Exception:
        return 64 * 1024 * 1024          # conservative fallback (v7x-sized)


_PHYS_VMEM = _phys_vmem_bytes()
# Working-set target for tile picking: ~64 MiB on v5e/v6e (128 MiB physical),
# ~32 MiB on v7x (64 MiB physical).
_VMEM_BUDGET = min(_PHYS_VMEM // 2, 64 * 1024 * 1024)
_VMEM_LIMIT = min(_VMEM_BUDGET + 16 * 1024 * 1024, _PHYS_VMEM * 3 // 4)

_MAX_TM = 512            # matmul rows per grid step
_MAX_ROWS = 1024         # BN / elementwise / stats rows per grid step


def _pick_tile(max_rows, n_rows, bytes_per_row, fixed_bytes=0):
    """Largest row tile (multiple of 8, capped) keeping the double-buffered
    working set under the device budget; full extent when all rows fit."""
    budget = max(_VMEM_BUDGET - fixed_bytes, 512 * 1024)
    t = max(8, min(max_rows, budget // max(bytes_per_row, 1)))
    t = (t // 8) * 8
    if n_rows <= t:
        return n_rows                  # full array extent (always legal)
    return t


def _cparams(*semantics):
    return pltpu.CompilerParams(dimension_semantics=tuple(semantics),
                                vmem_limit_bytes=_VMEM_LIMIT)


# ----------------------------------------------------------------------------
# Pallas kernels
# ----------------------------------------------------------------------------
def _matmul_bias_act_kernel(a_ref, b_ref, bias_ref, o_ref, *, apply_relu):
    # Whole weight / bias VMEM-resident (constant index_map); one dot per step.
    out = jnp.dot(a_ref[...], b_ref[...], preferred_element_type=jnp.float32)
    out = out + bias_ref[...]
    if apply_relu:
        out = jnp.maximum(out, 0.0)
    o_ref[...] = out.astype(o_ref.dtype)


def _matmul_stats_kernel(a_ref, b_ref, o_ref, sum_ref, sq_ref, *, tail_rows):
    # Bias-free conv (ResidualBlock convs) + fused per-channel sum / sum-sq of
    # the output (this conv feeds a BatchNorm) while the tile is in VMEM.
    i = pl.program_id(0)

    @pl.when(i == 0)
    def _():
        sum_ref[...] = jnp.zeros_like(sum_ref)
        sq_ref[...] = jnp.zeros_like(sq_ref)

    out = jnp.dot(a_ref[...], b_ref[...], preferred_element_type=jnp.float32)
    o_ref[...] = out.astype(o_ref.dtype)

    if tail_rows is None:                       # statically aligned: no mask
        v = out
    else:                                       # mask only the ragged tail
        r = lax.broadcasted_iota(jnp.int32, out.shape, 0)
        keep = jnp.logical_or(i != pl.num_programs(0) - 1, r < tail_rows)
        v = jnp.where(keep, out, 0.0)
    sum_ref[...] += jnp.sum(v, axis=0, keepdims=True)
    sq_ref[...] += jnp.sum(v * v, axis=0, keepdims=True)


def _stats_kernel(x_ref, sum_ref, sq_ref, *, tail_rows):
    i = pl.program_id(0)

    @pl.when(i == 0)
    def _():
        sum_ref[...] = jnp.zeros_like(sum_ref)
        sq_ref[...] = jnp.zeros_like(sq_ref)

    x = x_ref[...].astype(jnp.float32)
    if tail_rows is not None:
        r = lax.broadcasted_iota(jnp.int32, x.shape, 0)
        keep = jnp.logical_or(i != pl.num_programs(0) - 1, r < tail_rows)
        x = jnp.where(keep, x, 0.0)
    sum_ref[...] += jnp.sum(x, axis=0, keepdims=True)
    sq_ref[...] += jnp.sum(x * x, axis=0, keepdims=True)


def _bn_relu_kernel(x_ref, scale_ref, shift_ref, o_ref):
    out = jnp.maximum(x_ref[...] * scale_ref[...] + shift_ref[...], 0.0)
    o_ref[...] = out.astype(o_ref.dtype)


def _bn_relu_residual_stats_kernel(x_ref, scale_ref, shift_ref, res_ref,
                                   o_ref, sum_ref, sq_ref, *, tail_rows):
    i = pl.program_id(0)

    @pl.when(i == 0)
    def _():
        sum_ref[...] = jnp.zeros_like(sum_ref)
        sq_ref[...] = jnp.zeros_like(sq_ref)

    out = res_ref[...].astype(jnp.float32) + jnp.maximum(
        x_ref[...] * scale_ref[...] + shift_ref[...], 0.0)
    o_ref[...] = out.astype(o_ref.dtype)

    if tail_rows is None:
        v = out
    else:
        r = lax.broadcasted_iota(jnp.int32, out.shape, 0)
        keep = jnp.logical_or(i != pl.num_programs(0) - 1, r < tail_rows)
        v = jnp.where(keep, out, 0.0)
    sum_ref[...] += jnp.sum(v, axis=0, keepdims=True)
    sq_ref[...] += jnp.sum(v * v, axis=0, keepdims=True)


# ----------------------------------------------------------------------------
# Matmul wrappers (bf16 MXU operands, f32 accumulation, weight VMEM-resident)
# ----------------------------------------------------------------------------
def matmul_bias_act(a, b, bias, apply_relu, out_dtype):
    """relu?(a @ b + bias): a [M,K], b [K,N]; grid only over M."""
    M, K = a.shape
    _, Ncol = b.shape
    a16 = a.astype(jnp.bfloat16)
    b16 = b.astype(jnp.bfloat16)
    bias2 = bias.reshape(1, Ncol).astype(jnp.float32)
    out_bytes = jnp.dtype(out_dtype).itemsize
    tm = _pick_tile(_MAX_TM, M,
                    bytes_per_row=2 * (2 * K) + 2 * Ncol * out_bytes,
                    fixed_bytes=2 * K * Ncol * 2 + 8 * Ncol)
    return pl.pallas_call(
        functools.partial(_matmul_bias_act_kernel, apply_relu=apply_relu),
        out_shape=jax.ShapeDtypeStruct((M, Ncol), out_dtype),
        grid_spec=pltpu.PrefetchScalarGridSpec(
            num_scalar_prefetch=0,
            grid=(pl.cdiv(M, tm),),
            in_specs=[pl.BlockSpec((tm, K), lambda i: (i, 0)),
                      pl.BlockSpec((K, Ncol), lambda i: (0, 0)),   # full weight
                      pl.BlockSpec((1, Ncol), lambda i: (0, 0))],  # full bias
            out_specs=pl.BlockSpec((tm, Ncol), lambda i: (i, 0)),
        ),
        compiler_params=_cparams("parallel"),
    )(a16, b16, bias2)


def matmul_with_stats(a, b):
    """a @ b (bf16 out) plus fused per-column sum / sum-of-squares (f32)."""
    M, K = a.shape
    _, Ncol = b.shape
    a16 = a.astype(jnp.bfloat16)
    b16 = b.astype(jnp.bfloat16)
    tm = _pick_tile(_MAX_TM, M,
                    bytes_per_row=2 * (2 * K) + 2 * Ncol * 2,
                    fixed_bytes=2 * K * Ncol * 2 + 16 * Ncol)
    tail = M % tm
    out, s, sq = pl.pallas_call(
        functools.partial(_matmul_stats_kernel,
                          tail_rows=tail if tail else None),
        out_shape=(jax.ShapeDtypeStruct((M, Ncol), jnp.bfloat16),
                   jax.ShapeDtypeStruct((1, Ncol), jnp.float32),
                   jax.ShapeDtypeStruct((1, Ncol), jnp.float32)),
        grid_spec=pltpu.PrefetchScalarGridSpec(
            num_scalar_prefetch=0,
            grid=(pl.cdiv(M, tm),),
            in_specs=[pl.BlockSpec((tm, K), lambda i: (i, 0)),
                      pl.BlockSpec((K, Ncol), lambda i: (0, 0))],
            out_specs=(pl.BlockSpec((tm, Ncol), lambda i: (i, 0)),
                       pl.BlockSpec((1, Ncol), lambda i: (0, 0)),
                       pl.BlockSpec((1, Ncol), lambda i: (0, 0))),
        ),
        compiler_params=_cparams("arbitrary"),   # stats accumulate across i
    )(a16, b16)
    return out, (s[0], sq[0])


# ----------------------------------------------------------------------------
# Conv wrappers
# ----------------------------------------------------------------------------
def _im2col_s1(xp, kT, kH, kW):
    """Stride-1 valid-conv patch matrix, tap-major / channel-minor columns."""
    N, Tp, Hp, Wp, Cin = xp.shape
    To, Ho, Wo = Tp - kT + 1, Hp - kH + 1, Wp - kW + 1
    if (kT, kH, kW) == (1, 1, 1):
        return xp.reshape(N * To * Ho * Wo, Cin), (N, To, Ho, Wo)
    cols = [xp[:, a:a + To, b:b + Ho, c:c + Wo, :]
            for a in range(kT) for b in range(kH) for c in range(kW)]
    col = jnp.stack(cols, axis=-2).reshape(N * To * Ho * Wo, kT * kH * kW * Cin)
    return col, (N, To, Ho, Wo)


def same_pad_conv3d_stats(x, w):
    """Stride-1 SamePadConv3d (bias=False, as in ResidualBlock) with fused
    per-channel sum / sum-of-squares of the output (it feeds a BatchNorm)."""
    kT, kH, kW, _, Cout = w.shape
    if (kT, kH, kW) == (1, 1, 1):
        col = x.reshape(-1, x.shape[-1])
        shape = x.shape[:4]
    else:
        pads = [(p // 2 + p % 2, p // 2) for p in (kT - 1, kH - 1, kW - 1)]
        xp = jnp.pad(x, ((0, 0), pads[0], pads[1], pads[2], (0, 0)))
        col, shape = _im2col_s1(xp, kT, kH, kW)
    out, stats = matmul_with_stats(col, w.reshape(-1, Cout))
    return out.reshape(shape + (Cout,)), stats


def _convt_phase_weights(w, b, kernel, stride):
    """Phase-packed B matrix [27*Cin, P*Cout] and bias [P*Cout] for
    SamePadConvTranspose3d via sub-pixel decomposition.  Per-dim (k, s) is
    either (4, 2) or (3, 1) in this module, so the union patch is always 3."""
    kT, kH, kW = kernel
    sT, sH, sW = stride
    Cin, Cout = w.shape[3], w.shape[4]

    def sel(k, s):
        # S[o, r, j]: union-offset o of phase r reads ConvTranspose tap j.
        S = np.zeros((3, s, k), np.float32)
        for r in range(s):
            delta = 0 if r == 0 else 1
            rr = (s - r) % s
            for o in range(3):
                m = o - delta
                if m < 0:
                    continue
                j = m * s + rr
                if j >= k:
                    continue
                S[o, r, k - 1 - j] = 1.0      # spatial flip (transpose <-> conv)
        return jnp.asarray(S)

    St, Sh, Sw = sel(kT, sT), sel(kH, sH), sel(kW, sW)
    B = jnp.einsum('apt,bqh,cru,thuio->abcipqro', St, Sh, Sw, w)
    B = B.reshape(27 * Cin, sT * sH * sW * Cout)
    bias = jnp.tile(b, sT * sH * sW)
    return B, bias


def same_pad_conv_transpose3d(x, w, b, kernel, stride, apply_relu, out_dtype):
    """SamePadConvTranspose3d via phase decomposition: pad (1,1) per dim, one
    stride-1 matmul over the non-upsampled input against the phase-packed
    weights, then depth-to-space interleave of the phases."""
    for k, s in zip(kernel, stride):
        assert (k, s) in ((4, 2), (3, 1)), "Decoder only emits k4/s2 or k3/s1"
    sT, sH, sW = stride
    N, Dt, Dh, Dw, _ = x.shape
    Cout = w.shape[-1]

    xp = jnp.pad(x, ((0, 0), (1, 1), (1, 1), (1, 1), (0, 0)))
    col, _ = _im2col_s1(xp, 3, 3, 3)                     # M = N*Dt*Dh*Dw rows
    B, bias = _convt_phase_weights(w, b, kernel, stride)
    out = matmul_bias_act(col, B, bias, apply_relu, out_dtype)

    out = out.reshape(N, Dt, Dh, Dw, sT, sH, sW, Cout)
    out = out.transpose(0, 1, 4, 2, 5, 3, 6, 7)
    return out.reshape(N, Dt * sT, Dh * sH, Dw * sW, Cout)


# ----------------------------------------------------------------------------
# BatchNorm (+ReLU, + residual) on a lane-dense [N*T*H, W*C] view
# ----------------------------------------------------------------------------
def _lane_dense_view(x):
    N, T, H, W, C = x.shape
    return x.reshape(N * T * H, W * C), (W, C)


def channel_stats(x):
    """Per-channel sum / sum-of-squares over N*T*H*W via a Pallas reduction."""
    x2, (W, C) = _lane_dense_view(x)
    rows, WC = x2.shape
    tm = _pick_tile(_MAX_ROWS, rows, bytes_per_row=2 * WC * 2)
    tail = rows % tm
    s, sq = pl.pallas_call(
        functools.partial(_stats_kernel, tail_rows=tail if tail else None),
        out_shape=(jax.ShapeDtypeStruct((1, WC), jnp.float32),
                   jax.ShapeDtypeStruct((1, WC), jnp.float32)),
        grid_spec=pltpu.PrefetchScalarGridSpec(
            num_scalar_prefetch=0,
            grid=(pl.cdiv(rows, tm),),
            in_specs=[pl.BlockSpec((tm, WC), lambda i: (i, 0))],
            out_specs=(pl.BlockSpec((1, WC), lambda i: (0, 0)),
                       pl.BlockSpec((1, WC), lambda i: (0, 0))),
        ),
        compiler_params=_cparams("arbitrary"),
    )(x2)
    return s.reshape(W, C).sum(axis=0), sq.reshape(W, C).sum(axis=0)


def _bn_scale_shift(gamma, beta, stats, count, eps=1e-5):
    sum_c, sq_c = stats
    mean = sum_c / count
    var = sq_c / count - mean * mean       # biased variance (training-mode BN)
    scale = gamma * lax.rsqrt(var + eps)
    shift = beta - mean * scale
    return scale, shift


def batchnorm_relu(x, gamma, beta, stats, residual=None):
    """Training-mode BatchNorm3d + ReLU (+ residual add), bf16 output.  With
    `residual`, also returns fused per-channel stats of the result."""
    shape = x.shape
    W, C = shape[-2], shape[-1]
    count = float(np.prod(shape[:-1]))
    scale, shift = _bn_scale_shift(gamma, beta, stats, count)
    scale2 = jnp.tile(scale, W).reshape(1, W * C)
    shift2 = jnp.tile(shift, W).reshape(1, W * C)
    x2, _ = _lane_dense_view(x)
    rows, WC = x2.shape

    if residual is None:
        tm = _pick_tile(_MAX_ROWS, rows, bytes_per_row=8 * WC)
        out = pl.pallas_call(
            _bn_relu_kernel,
            out_shape=jax.ShapeDtypeStruct((rows, WC), jnp.bfloat16),
            grid_spec=pltpu.PrefetchScalarGridSpec(
                num_scalar_prefetch=0,
                grid=(pl.cdiv(rows, tm),),
                in_specs=[pl.BlockSpec((tm, WC), lambda i: (i, 0)),
                          pl.BlockSpec((1, WC), lambda i: (0, 0)),
                          pl.BlockSpec((1, WC), lambda i: (0, 0))],
                out_specs=pl.BlockSpec((tm, WC), lambda i: (i, 0)),
            ),
            compiler_params=_cparams("parallel"),
        )(x2, scale2, shift2)
        return out.reshape(shape)

    res2, _ = _lane_dense_view(residual)
    tm = _pick_tile(_MAX_ROWS, rows, bytes_per_row=12 * WC)
    tail = rows % tm
    out, s, sq = pl.pallas_call(
        functools.partial(_bn_relu_residual_stats_kernel,
                          tail_rows=tail if tail else None),
        out_shape=(jax.ShapeDtypeStruct((rows, WC), jnp.bfloat16),
                   jax.ShapeDtypeStruct((1, WC), jnp.float32),
                   jax.ShapeDtypeStruct((1, WC), jnp.float32)),
        grid_spec=pltpu.PrefetchScalarGridSpec(
            num_scalar_prefetch=0,
            grid=(pl.cdiv(rows, tm),),
            in_specs=[pl.BlockSpec((tm, WC), lambda i: (i, 0)),
                      pl.BlockSpec((1, WC), lambda i: (0, 0)),
                      pl.BlockSpec((1, WC), lambda i: (0, 0)),
                      pl.BlockSpec((tm, WC), lambda i: (i, 0))],
            out_specs=(pl.BlockSpec((tm, WC), lambda i: (i, 0)),
                       pl.BlockSpec((1, WC), lambda i: (0, 0)),
                       pl.BlockSpec((1, WC), lambda i: (0, 0))),
        ),
        compiler_params=_cparams("arbitrary"),
    )(x2, scale2, shift2, res2)
    out_stats = (s.reshape(W, C).sum(axis=0), sq.reshape(W, C).sum(axis=0))
    return out.reshape(shape), out_stats


# ----------------------------------------------------------------------------
# Decoder parameters & forward
# ----------------------------------------------------------------------------
def init_decoder_params(key, n_hiddens, n_res_layers, upsample):
    n_times = np.array([int(math.log2(d)) for d in upsample])
    max_us = int(n_times.max())
    keys = jax.random.split(key, 2 * n_res_layers + 2 * max_us + 2)
    ki = 0
    params = {"res": []}
    h2 = n_hiddens // 2
    for _ in range(n_res_layers):
        blk = {
            "bn1_g": jnp.ones((n_hiddens,), jnp.float32),
            "bn1_b": jnp.zeros((n_hiddens,), jnp.float32),
            "conv1_w": jax.random.normal(keys[ki], (3, 3, 3, n_hiddens, h2),
                                         jnp.float32) / np.sqrt(n_hiddens * 27),
            "bn2_g": jnp.ones((h2,), jnp.float32),
            "bn2_b": jnp.zeros((h2,), jnp.float32),
            "conv2_w": jax.random.normal(keys[ki + 1], (1, 1, 1, h2, n_hiddens),
                                         jnp.float32) / np.sqrt(h2),
            "bn3_g": jnp.ones((n_hiddens,), jnp.float32),
            "bn3_b": jnp.zeros((n_hiddens,), jnp.float32),
        }
        ki += 2
        params["res"].append(blk)
    params["bn_final_g"] = jnp.ones((n_hiddens,), jnp.float32)
    params["bn_final_b"] = jnp.zeros((n_hiddens,), jnp.float32)

    convts = []
    convt_cfg = []
    for i in range(max_us):
        out_ch = 3 if i == max_us - 1 else n_hiddens
        stride = tuple(2 if d > 0 else 1 for d in n_times)
        kernel = tuple(4 if d > 0 else 3 for d in n_times)
        fan_in = n_hiddens * int(np.prod(kernel))
        w = jax.random.normal(keys[ki], kernel + (n_hiddens, out_ch),
                              jnp.float32) / np.sqrt(fan_in)
        b = 0.01 * jax.random.normal(keys[ki + 1], (out_ch,), jnp.float32)
        ki += 2
        convts.append({"w": w, "b": b})
        convt_cfg.append((kernel, stride))     # static metadata (not a pytree)
        n_times = n_times - 1
    params["convts"] = convts
    return params, tuple(convt_cfg)


def decoder_forward(params, x_ncdhw, convt_cfg):
    # NCDHW (PyTorch) -> channels-last, carried in bf16 between kernels.
    h = jnp.transpose(x_ncdhw, (0, 2, 3, 4, 1)).astype(jnp.bfloat16)

    # per-channel stats of the current `h` (input of the next BatchNorm); after
    # the first block they come fused out of the residual-add kernel.
    h_stats = channel_stats(h)

    # res_stack: ResidualBlocks, then final BN + ReLU
    for blk in params["res"]:
        t = batchnorm_relu(h, blk["bn1_g"], blk["bn1_b"], h_stats)
        t, t_stats = same_pad_conv3d_stats(t, blk["conv1_w"])
        t = batchnorm_relu(t, blk["bn2_g"], blk["bn2_b"], t_stats)
        t, t_stats = same_pad_conv3d_stats(t, blk["conv2_w"])
        h, h_stats = batchnorm_relu(t, blk["bn3_g"], blk["bn3_b"], t_stats,
                                    residual=h)

    h = batchnorm_relu(h, params["bn_final_g"], params["bn_final_b"], h_stats)

    # transposed convs (phase-decomposed); ReLU fused on all but the last,
    # the last one writes f32 (the module output dtype).
    n_ct = len(params["convts"])
    for i, (ct, (kernel, stride)) in enumerate(zip(params["convts"],
                                                   convt_cfg)):
        last = i == n_ct - 1
        h = same_pad_conv_transpose3d(
            h, ct["w"], ct["b"], kernel, stride,
            apply_relu=not last,
            out_dtype=jnp.float32 if last else jnp.bfloat16)

    # back to NCDHW to match the PyTorch module's output convention
    return jnp.transpose(h, (0, 4, 1, 2, 3))


if __name__ == "__main__":
    key = jax.random.PRNGKey(0)
    k_x, k_p = jax.random.split(key)

    n_hiddens, n_res_layers, upsample = 32, 2, (2, 4, 4)
    # decoder input: NCDHW latent [batch, n_hiddens, T, H, W]
    x = jax.random.normal(k_x, (2, n_hiddens, 2, 4, 4), jnp.float32)

    params, convt_cfg = init_decoder_params(k_p, n_hiddens, n_res_layers,
                                            upsample)
    fwd = jax.jit(functools.partial(decoder_forward, convt_cfg=convt_cfg))
    out = jax.block_until_ready(fwd(params, x))

    # upsample (2,4,4): T 2->4, H 4->16, W 4->16, channels -> 3
    assert out.shape == (2, 3, 4, 16, 16), out.shape
    assert bool(jnp.all(jnp.isfinite(out)))
    print("KERNEL_OK")
</pallas_src>

<mosaic_0001>
module attributes {stable_mosaic.version = 11 : i64} {
  func.func @_stats_kernel(%arg0: i32, %arg1: memref<16x128xbf16, #tpu.memory_space<vmem>>, %arg2: memref<1x128xf32, #tpu.memory_space<vmem>>, %arg3: memref<1x128xf32, #tpu.memory_space<vmem>>) attributes {dimension_semantics = [#tpu.dimension_semantics<arbitrary>], iteration_bounds = array<i64: 1>, scalar_prefetch = 0 : i64, scratch_operands = 0 : i64, tpu.core_type = #tpu.core_type<tc>, window_params = [{transform_indices = @transform_0, window_bounds = array<i64: 16, 128>}, {pipeline_mode = #tpu.pipeline_mode<synchronous>, transform_indices = @transform_1, window_bounds = array<i64: 1, 128>}, {pipeline_mode = #tpu.pipeline_mode<synchronous>, transform_indices = @transform_2, window_bounds = array<i64: 1, 128>}]} {
    %c0_i32 = arith.constant 0 : i32
    %0 = arith.cmpi eq, %arg0, %c0_i32 : i32
    %1 = arith.extui %0 : i1 to i32
    %c0_i32_0 = arith.constant 0 : i32
    %2 = arith.cmpi ne, %1, %c0_i32_0 : i32
    scf.if %2 {
      %cst_11 = arith.constant 0.000000e+00 : f32
      %16 = vector.broadcast %cst_11 : f32 to vector<1x128xf32>
      %c0_12 = arith.constant 0 : index
      %c0_13 = arith.constant 0 : index
      %17 = vector.load %arg2[%c0_12, %c0_13] : memref<1x128xf32, #tpu.memory_space<vmem>>, vector<1x128xf32>
      tpu.vector_store %arg2[%c0_12, %c0_13], %16 {strides = array<i32>} : memref<1x128xf32, #tpu.memory_space<vmem>>, vector<1x128xf32>,
      %cst_14 = arith.constant 0.000000e+00 : f32
      %18 = vector.broadcast %cst_14 : f32 to vector<1x128xf32>
      %c0_15 = arith.constant 0 : index
      %c0_16 = arith.constant 0 : index
      %19 = vector.load %arg3[%c0_15, %c0_16] : memref<1x128xf32, #tpu.memory_space<vmem>>, vector<1x128xf32>
      tpu.vector_store %arg3[%c0_15, %c0_16], %18 {strides = array<i32>} : memref<1x128xf32, #tpu.memory_space<vmem>>, vector<1x128xf32>,
    } else {
    }
    %c0 = arith.constant 0 : index
    %c0_1 = arith.constant 0 : index
    %3 = vector.load %arg1[%c0, %c0_1] : memref<16x128xbf16, #tpu.memory_space<vmem>>, vector<16x128xbf16>
    %4 = arith.extf %3 : vector<16x128xbf16> to vector<16x128xf32>
    %c0_2 = arith.constant 0 : index
    %c0_3 = arith.constant 0 : index
    %5 = vector.load %arg2[%c0_2, %c0_3] : memref<1x128xf32, #tpu.memory_space<vmem>>, vector<1x128xf32>
    %cst = arith.constant dense<0.000000e+00> : vector<128xf32>
    %6 = vector.multi_reduction <add>, %4, %cst [0] : vector<16x128xf32> to vector<128xf32>
    %7 = vector.shape_cast %6 : vector<128xf32> to vector<1x128xf32>
    %8 = arith.addf %5, %7 : vector<1x128xf32>
    %c0_4 = arith.constant 0 : index
    %c0_5 = arith.constant 0 : index
    %9 = vector.load %arg2[%c0_4, %c0_5] : memref<1x128xf32, #tpu.memory_space<vmem>>, vector<1x128xf32>
    tpu.vector_store %arg2[%c0_4, %c0_5], %8 {strides = array<i32>} : memref<1x128xf32, #tpu.memory_space<vmem>>, vector<1x128xf32>,
    %c0_6 = arith.constant 0 : index
    %c0_7 = arith.constant 0 : index
    %10 = vector.load %arg3[%c0_6, %c0_7] : memref<1x128xf32, #tpu.memory_space<vmem>>, vector<1x128xf32>
    %11 = arith.mulf %4, %4 : vector<16x128xf32>
    %cst_8 = arith.constant dense<0.000000e+00> : vector<128xf32>
    %12 = vector.multi_reduction <add>, %11, %cst_8 [0] : vector<16x128xf32> to vector<128xf32>
    %13 = vector.shape_cast %12 : vector<128xf32> to vector<1x128xf32>
    %14 = arith.addf %10, %13 : vector<1x128xf32>
    %c0_9 = arith.constant 0 : index
    %c0_10 = arith.constant 0 : index
    %15 = vector.load %arg3[%c0_9, %c0_10] : memref<1x128xf32, #tpu.memory_space<vmem>>, vector<1x128xf32>
    tpu.vector_store %arg3[%c0_9, %c0_10], %14 {strides = array<i32>} : memref<1x128xf32, #tpu.memory_space<vmem>>, vector<1x128xf32>,
    return
  }
  func.func @transform_0(%arg0: i32) -> (i32, i32) {
    %c0_i32 = arith.constant 0 : i32
    %c0_i32_0 = arith.constant 0 : i32
    return %arg0, %c0_i32 : i32, i32
  }
  func.func @transform_1(%arg0: i32) -> (i32, i32) {
    %c0_i32 = arith.constant 0 : i32
    %c0_i32_0 = arith.constant 0 : i32
    %c0_i32_1 = arith.constant 0 : i32
    return %c0_i32, %c0_i32_0 : i32, i32
  }
  func.func @transform_2(%arg0: i32) -> (i32, i32) {
    %c0_i32 = arith.constant 0 : i32
    %c0_i32_0 = arith.constant 0 : i32
    %c0_i32_1 = arith.constant 0 : i32
    return %c0_i32, %c0_i32_0 : i32, i32
  }
}

module attributes {stable_mosaic.version = 11 : i64} {
  func.func @_bn_relu_kernel(%arg0: i32, %arg1: memref<16x128xbf16, #tpu.memory_space<vmem>>, %arg2: memref<1x128xf32, #tpu.memory_space<vmem>>, %arg3: memref<1x128xf32, #tpu.memory_space<vmem>>, %arg4: memref<16x128xbf16, #tpu.memory_space<vmem>>) attributes {dimension_semantics = [#tpu.dimension_semantics<parallel>], iteration_bounds = array<i64: 1>, scalar_prefetch = 0 : i64, scratch_operands = 0 : i64, tpu.core_type = #tpu.core_type<tc>, window_params = [{transform_indices = @transform_0, window_bounds = array<i64: 16, 128>}, {pipeline_mode = #tpu.pipeline_mode<synchronous>, transform_indices = @transform_1, window_bounds = array<i64: 1, 128>}, {pipeline_mode = #tpu.pipeline_mode<synchronous>, transform_indices = @transform_2, window_bounds = array<i64: 1, 128>}, {transform_indices = @transform_3, window_bounds = array<i64: 16, 128>}]} {
    %c0 = arith.constant 0 : index
    %c0_0 = arith.constant 0 : index
    %0 = vector.load %arg1[%c0, %c0_0] : memref<16x128xbf16, #tpu.memory_space<vmem>>, vector<16x128xbf16>
    %c0_1 = arith.constant 0 : index
    %c0_2 = arith.constant 0 : index
    %1 = vector.load %arg2[%c0_1, %c0_2] : memref<1x128xf32, #tpu.memory_space<vmem>>, vector<1x128xf32>
    %2 = arith.extf %0 : vector<16x128xbf16> to vector<16x128xf32>
    %3 = vector.broadcast %1 : vector<1x128xf32> to vector<16x128xf32>
    %4 = arith.mulf %2, %3 : vector<16x128xf32>
    %c0_3 = arith.constant 0 : index
    %c0_4 = arith.constant 0 : index
    %5 = vector.load %arg3[%c0_3, %c0_4] : memref<1x128xf32, #tpu.memory_space<vmem>>, vector<1x128xf32>
    %6 = vector.broadcast %5 : vector<1x128xf32> to vector<16x128xf32>
    %7 = arith.addf %4, %6 : vector<16x128xf32>
    %cst = arith.constant 0.000000e+00 : f32
    %8 = vector.broadcast %cst : f32 to vector<16x128xf32>
    %9 = arith.maximumf %7, %8 : vector<16x128xf32>
    %10 = arith.truncf %9 : vector<16x128xf32> to vector<16x128xbf16>
    %c0_5 = arith.constant 0 : index
    %c0_6 = arith.constant 0 : index
    %11 = vector.load %arg4[%c0_5, %c0_6] : memref<16x128xbf16, #tpu.memory_space<vmem>>, vector<16x128xbf16>
    tpu.vector_store %arg4[%c0_5, %c0_6], %10 {strides = array<i32>} : memref<16x128xbf16, #tpu.memory_space<vmem>>, vector<16x128xbf16>,
    return
  }
  func.func @transform_0(%arg0: i32) -> (i32, i32) {
    %c0_i32 = arith.constant 0 : i32
    %c0_i32_0 = arith.constant 0 : i32
    return %arg0, %c0_i32 : i32, i32
  }
  func.func @transform_1(%arg0: i32) -> (i32, i32) {
    %c0_i32 = arith.constant 0 : i32
    %c0_i32_0 = arith.constant 0 : i32
    %c0_i32_1 = arith.constant 0 : i32
    return %c0_i32, %c0_i32_0 : i32, i32
  }
  func.func @transform_2(%arg0: i32) -> (i32, i32) {
    %c0_i32 = arith.constant 0 : i32
    %c0_i32_0 = arith.constant 0 : i32
    %c0_i32_1 = arith.constant 0 : i32
    return %c0_i32, %c0_i32_0 : i32, i32
  }
  func.func @transform_3(%arg0: i32) -> (i32, i32) {
    %c0_i32 = arith.constant 0 : i32
    %c0_i32_0 = arith.constant 0 : i32
    return %arg0, %c0_i32 : i32, i32
  }
}

module attributes {stable_mosaic.version = 11 : i64} {
  func.func @_matmul_stats_kernel(%arg0: i32, %arg1: memref<64x864xbf16, #tpu.memory_space<vmem>>, %arg2: memref<864x16xbf16, #tpu.memory_space<vmem>>, %arg3: memref<64x16xbf16, #tpu.memory_space<vmem>>, %arg4: memref<1x16xf32, #tpu.memory_space<vmem>>, %arg5: memref<1x16xf32, #tpu.memory_space<vmem>>) attributes {dimension_semantics = [#tpu.dimension_semantics<arbitrary>], iteration_bounds = array<i64: 1>, scalar_prefetch = 0 : i64, scratch_operands = 0 : i64, tpu.core_type = #tpu.core_type<tc>, window_params = [{transform_indices = @transform_0, window_bounds = array<i64: 64, 864>}, {pipeline_mode = #tpu.pipeline_mode<synchronous>, transform_indices = @transform_1, window_bounds = array<i64: 864, 16>}, {transform_indices = @transform_2, window_bounds = array<i64: 64, 16>}, {pipeline_mode = #tpu.pipeline_mode<synchronous>, transform_indices = @transform_3, window_bounds = array<i64: 1, 16>}, {pipeline_mode = #tpu.pipeline_mode<synchronous>, transform_indices = @transform_4, window_bounds = array<i64: 1, 16>}]} {
    %c0_i32 = arith.constant 0 : i32
    %0 = arith.cmpi eq, %arg0, %c0_i32 : i32
    %1 = arith.extui %0 : i1 to i32
    %c0_i32_0 = arith.constant 0 : i32
    %2 = arith.cmpi ne, %1, %c0_i32_0 : i32
    scf.if %2 {
      %cst_16 = arith.constant 0.000000e+00 : f32
      %19 = vector.broadcast %cst_16 : f32 to vector<1x16xf32>
      %c0_17 = arith.constant 0 : index
      %c0_18 = arith.constant 0 : index
      %20 = vector.load %arg4[%c0_17, %c0_18] : memref<1x16xf32, #tpu.memory_space<vmem>>, vector<1x16xf32>
      tpu.vector_store %arg4[%c0_17, %c0_18], %19 {strides = array<i32>} : memref<1x16xf32, #tpu.memory_space<vmem>>, vector<1x16xf32>,
      %cst_19 = arith.constant 0.000000e+00 : f32
      %21 = vector.broadcast %cst_19 : f32 to vector<1x16xf32>
      %c0_20 = arith.constant 0 : index
      %c0_21 = arith.constant 0 : index
      %22 = vector.load %arg5[%c0_20, %c0_21] : memref<1x16xf32, #tpu.memory_space<vmem>>, vector<1x16xf32>
      tpu.vector_store %arg5[%c0_20, %c0_21], %21 {strides = array<i32>} : memref<1x16xf32, #tpu.memory_space<vmem>>, vector<1x16xf32>,
    } else {
    }
    %c0 = arith.constant 0 : index
    %c0_1 = arith.constant 0 : index
    %3 = vector.load %arg1[%c0, %c0_1] : memref<64x864xbf16, #tpu.memory_space<vmem>>, vector<64x864xbf16>
    %c0_2 = arith.constant 0 : index
    %c0_3 = arith.constant 0 : index
    %4 = vector.load %arg2[%c0_2, %c0_3] : memref<864x16xbf16, #tpu.memory_space<vmem>>, vector<864x16xbf16>
    %cst = arith.constant dense<0.000000e+00> : vector<64x16xf32>
    %5 = tpu.matmul %3, %4, %cst {dimension_numbers = #tpu.dot_dimension_numbers<[1], [0], [0], [1], [0, 0, 1, 1], [], []>} : vector<64x864xbf16>, vector<864x16xbf16>, vector<64x16xf32> -> vector<64x16xf32>
    %6 = arith.truncf %5 : vector<64x16xf32> to vector<64x16xbf16>
    %c0_4 = arith.constant 0 : index
    %c0_5 = arith.constant 0 : index
    %7 = vector.load %arg3[%c0_4, %c0_5] : memref<64x16xbf16, #tpu.memory_space<vmem>>, vector<64x16xbf16>
    tpu.vector_store %arg3[%c0_4, %c0_5], %6 {strides = array<i32>} : memref<64x16xbf16, #tpu.memory_space<vmem>>, vector<64x16xbf16>,
    %c0_6 = arith.constant 0 : index
    %c0_7 = arith.constant 0 : index
    %8 = vector.load %arg4[%c0_6, %c0_7] : memref<1x16xf32, #tpu.memory_space<vmem>>, vector<1x16xf32>
    %cst_8 = arith.constant dense<0.000000e+00> : vector<16xf32>
    %9 = vector.multi_reduction <add>, %5, %cst_8 [0] : vector<64x16xf32> to vector<16xf32>
    %10 = vector.shape_cast %9 : vector<16xf32> to vector<1x16xf32>
    %11 = arith.addf %8, %10 : vector<1x16xf32>
    %c0_9 = arith.constant 0 : index
    %c0_10 = arith.constant 0 : index
    %12 = vector.load %arg4[%c0_9, %c0_10] : memref<1x16xf32, #tpu.memory_space<vmem>>, vector<1x16xf32>
    tpu.vector_store %arg4[%c0_9, %c0_10], %11 {strides = array<i32>} : memref<1x16xf32, #tpu.memory_space<vmem>>, vector<1x16xf32>,
    %c0_11 = arith.constant 0 : index
    %c0_12 = arith.constant 0 : index
    %13 = vector.load %arg5[%c0_11, %c0_12] : memref<1x16xf32, #tpu.memory_space<vmem>>, vector<1x16xf32>
    %14 = arith.mulf %5, %5 : vector<64x16xf32>
    %cst_13 = arith.constant dense<0.000000e+00> : vector<16xf32>
    %15 = vector.multi_reduction <add>, %14, %cst_13 [0] : vector<64x16xf32> to vector<16xf32>
    %16 = vector.shape_cast %15 : vector<16xf32> to vector<1x16xf32>
    %17 = arith.addf %13, %16 : vector<1x16xf32>
    %c0_14 = arith.constant 0 : index
    %c0_15 = arith.constant 0 : index
    %18 = vector.load %arg5[%c0_14, %c0_15] : memref<1x16xf32, #tpu.memory_space<vmem>>, vector<1x16xf32>
    tpu.vector_store %arg5[%c0_14, %c0_15], %17 {strides = array<i32>} : memref<1x16xf32, #tpu.memory_space<vmem>>, vector<1x16xf32>,
    return
  }
  func.func @transform_0(%arg0: i32) -> (i32, i32) {
    %c0_i32 = arith.constant 0 : i32
    %c0_i32_0 = arith.constant 0 : i32
    return %arg0, %c0_i32 : i32, i32
  }
  func.func @transform_1(%arg0: i32) -> (i32, i32) {
    %c0_i32 = arith.constant 0 : i32
    %c0_i32_0 = arith.constant 0 : i32
    %c0_i32_1 = arith.constant 0 : i32
    return %c0_i32, %c0_i32_0 : i32, i32
  }
  func.func @transform_2(%arg0: i32) -> (i32, i32) {
    %c0_i32 = arith.constant 0 : i32
    %c0_i32_0 = arith.constant 0 : i32
    return %arg0, %c0_i32 : i32, i32
  }
  func.func @transform_3(%arg0: i32) -> (i32, i32) {
    %c0_i32 = arith.constant 0 : i32
    %c0_i32_0 = arith.constant 0 : i32
    %c0_i32_1 = arith.constant 0 : i32
    return %c0_i32, %c0_i32_0 : i32, i32
  }
  func.func @transform_4(%arg0: i32) -> (i32, i32) {
    %c0_i32 = arith.constant 0 : i32
    %c0_i32_0 = arith.constant 0 : i32
    %c0_i32_1 = arith.constant 0 : i32
    return %c0_i32, %c0_i32_0 : i32, i32
  }
}

module attributes {stable_mosaic.version = 11 : i64} {
  func.func @_bn_relu_kernel(%arg0: i32, %arg1: memref<16x64xbf16, #tpu.memory_space<vmem>>, %arg2: memref<1x64xf32, #tpu.memory_space<vmem>>, %arg3: memref<1x64xf32, #tpu.memory_space<vmem>>, %arg4: memref<16x64xbf16, #tpu.memory_space<vmem>>) attributes {dimension_semantics = [#tpu.dimension_semantics<parallel>], iteration_bounds = array<i64: 1>, scalar_prefetch = 0 : i64, scratch_operands = 0 : i64, tpu.core_type = #tpu.core_type<tc>, window_params = [{transform_indices = @transform_0, window_bounds = array<i64: 16, 64>}, {pipeline_mode = #tpu.pipeline_mode<synchronous>, transform_indices = @transform_1, window_bounds = array<i64: 1, 64>}, {pipeline_mode = #tpu.pipeline_mode<synchronous>, transform_indices = @transform_2, window_bounds = array<i64: 1, 64>}, {transform_indices = @transform_3, window_bounds = array<i64: 16, 64>}]} {
    %c0 = arith.constant 0 : index
    %c0_0 = arith.constant 0 : index
    %0 = vector.load %arg1[%c0, %c0_0] : memref<16x64xbf16, #tpu.memory_space<vmem>>, vector<16x64xbf16>
    %c0_1 = arith.constant 0 : index
    %c0_2 = arith.constant 0 : index
    %1 = vector.load %arg2[%c0_1, %c0_2] : memref<1x64xf32, #tpu.memory_space<vmem>>, vector<1x64xf32>
    %2 = arith.extf %0 : vector<16x64xbf16> to vector<16x64xf32>
    %3 = vector.broadcast %1 : vector<1x64xf32> to vector<16x64xf32>
    %4 = arith.mulf %2, %3 : vector<16x64xf32>
    %c0_3 = arith.constant 0 : index
    %c0_4 = arith.constant 0 : index
    %5 = vector.load %arg3[%c0_3, %c0_4] : memref<1x64xf32, #tpu.memory_space<vmem>>, vector<1x64xf32>
    %6 = vector.broadcast %5 : vector<1x64xf32> to vector<16x64xf32>
    %7 = arith.addf %4, %6 : vector<16x64xf32>
    %cst = arith.constant 0.000000e+00 : f32
    %8 = vector.broadcast %cst : f32 to vector<16x64xf32>
    %9 = arith.maximumf %7, %8 : vector<16x64xf32>
    %10 = arith.truncf %9 : vector<16x64xf32> to vector<16x64xbf16>
    %c0_5 = arith.constant 0 : index
    %c0_6 = arith.constant 0 : index
    %11 = vector.load %arg4[%c0_5, %c0_6] : memref<16x64xbf16, #tpu.memory_space<vmem>>, vector<16x64xbf16>
    tpu.vector_store %arg4[%c0_5, %c0_6], %10 {strides = array<i32>} : memref<16x64xbf16, #tpu.memory_space<vmem>>, vector<16x64xbf16>,
    return
  }
  func.func @transform_0(%arg0: i32) -> (i32, i32) {
    %c0_i32 = arith.constant 0 : i32
    %c0_i32_0 = arith.constant 0 : i32
    return %arg0, %c0_i32 : i32, i32
  }
  func.func @transform_1(%arg0: i32) -> (i32, i32) {
    %c0_i32 = arith.constant 0 : i32
    %c0_i32_0 = arith.constant 0 : i32
    %c0_i32_1 = arith.constant 0 : i32
    return %c0_i32, %c0_i32_0 : i32, i32
  }
  func.func @transform_2(%arg0: i32) -> (i32, i32) {
    %c0_i32 = arith.constant 0 : i32
    %c0_i32_0 = arith.constant 0 : i32
    %c0_i32_1 = arith.constant 0 : i32
    return %c0_i32, %c0_i32_0 : i32, i32
  }
  func.func @transform_3(%arg0: i32) -> (i32, i32) {
    %c0_i32 = arith.constant 0 : i32
    %c0_i32_0 = arith.constant 0 : i32
    return %arg0, %c0_i32 : i32, i32
  }
}

module attributes {stable_mosaic.version = 11 : i64} {
  func.func @_matmul_stats_kernel(%arg0: i32, %arg1: memref<64x16xbf16, #tpu.memory_space<vmem>>, %arg2: memref<16x32xbf16, #tpu.memory_space<vmem>>, %arg3: memref<64x32xbf16, #tpu.memory_space<vmem>>, %arg4: memref<1x32xf32, #tpu.memory_space<vmem>>, %arg5: memref<1x32xf32, #tpu.memory_space<vmem>>) attributes {dimension_semantics = [#tpu.dimension_semantics<arbitrary>], iteration_bounds = array<i64: 1>, scalar_prefetch = 0 : i64, scratch_operands = 0 : i64, tpu.core_type = #tpu.core_type<tc>, window_params = [{transform_indices = @transform_0, window_bounds = array<i64: 64, 16>}, {pipeline_mode = #tpu.pipeline_mode<synchronous>, transform_indices = @transform_1, window_bounds = array<i64: 16, 32>}, {transform_indices = @transform_2, window_bounds = array<i64: 64, 32>}, {pipeline_mode = #tpu.pipeline_mode<synchronous>, transform_indices = @transform_3, window_bounds = array<i64: 1, 32>}, {pipeline_mode = #tpu.pipeline_mode<synchronous>, transform_indices = @transform_4, window_bounds = array<i64: 1, 32>}]} {
    %c0_i32 = arith.constant 0 : i32
    %0 = arith.cmpi eq, %arg0, %c0_i32 : i32
    %1 = arith.extui %0 : i1 to i32
    %c0_i32_0 = arith.constant 0 : i32
    %2 = arith.cmpi ne, %1, %c0_i32_0 : i32
    scf.if %2 {
      %cst_16 = arith.constant 0.000000e+00 : f32
      %19 = vector.broadcast %cst_16 : f32 to vector<1x32xf32>
      %c0_17 = arith.constant 0 : index
      %c0_18 = arith.constant 0 : index
      %20 = vector.load %arg4[%c0_17, %c0_18] : memref<1x32xf32, #tpu.memory_space<vmem>>, vector<1x32xf32>
      tpu.vector_store %arg4[%c0_17, %c0_18], %19 {strides = array<i32>} : memref<1x32xf32, #tpu.memory_space<vmem>>, vector<1x32xf32>,
      %cst_19 = arith.constant 0.000000e+00 : f32
      %21 = vector.broadcast %cst_19 : f32 to vector<1x32xf32>
      %c0_20 = arith.constant 0 : index
      %c0_21 = arith.constant 0 : index
      %22 = vector.load %arg5[%c0_20, %c0_21] : memref<1x32xf32, #tpu.memory_space<vmem>>, vector<1x32xf32>
      tpu.vector_store %arg5[%c0_20, %c0_21], %21 {strides = array<i32>} : memref<1x32xf32, #tpu.memory_space<vmem>>, vector<1x32xf32>,
    } else {
    }
    %c0 = arith.constant 0 : index
    %c0_1 = arith.constant 0 : index
    %3 = vector.load %arg1[%c0, %c0_1] : memref<64x16xbf16, #tpu.memory_space<vmem>>, vector<64x16xbf16>
    %c0_2 = arith.constant 0 : index
    %c0_3 = arith.constant 0 : index
    %4 = vector.load %arg2[%c0_2, %c0_3] : memref<16x32xbf16, #tpu.memory_space<vmem>>, vector<16x32xbf16>
    %cst = arith.constant dense<0.000000e+00> : vector<64x32xf32>
    %5 = tpu.matmul %3, %4, %cst {dimension_numbers = #tpu.dot_dimension_numbers<[1], [0], [0], [1], [0, 0, 1, 1], [], []>} : vector<64x16xbf16>, vector<16x32xbf16>, vector<64x32xf32> -> vector<64x32xf32>
    %6 = arith.truncf %5 : vector<64x32xf32> to vector<64x32xbf16>
    %c0_4 = arith.constant 0 : index
    %c0_5 = arith.constant 0 : index
    %7 = vector.load %arg3[%c0_4, %c0_5] : memref<64x32xbf16, #tpu.memory_space<vmem>>, vector<64x32xbf16>
    tpu.vector_store %arg3[%c0_4, %c0_5], %6 {strides = array<i32>} : memref<64x32xbf16, #tpu.memory_space<vmem>>, vector<64x32xbf16>,
    %c0_6 = arith.constant 0 : index
    %c0_7 = arith.constant 0 : index
    %8 = vector.load %arg4[%c0_6, %c0_7] : memref<1x32xf32, #tpu.memory_space<vmem>>, vector<1x32xf32>
    %cst_8 = arith.constant dense<0.000000e+00> : vector<32xf32>
    %9 = vector.multi_reduction <add>, %5, %cst_8 [0] : vector<64x32xf32> to vector<32xf32>
    %10 = vector.shape_cast %9 : vector<32xf32> to vector<1x32xf32>
    %11 = arith.addf %8, %10 : vector<1x32xf32>
    %c0_9 = arith.constant 0 : index
    %c0_10 = arith.constant 0 : index
    %12 = vector.load %arg4[%c0_9, %c0_10] : memref<1x32xf32, #tpu.memory_space<vmem>>, vector<1x32xf32>
    tpu.vector_store %arg4[%c0_9, %c0_10], %11 {strides = array<i32>} : memref<1x32xf32, #tpu.memory_space<vmem>>, vector<1x32xf32>,
    %c0_11 = arith.constant 0 : index
    %c0_12 = arith.constant 0 : index
    %13 = vector.load %arg5[%c0_11, %c0_12] : memref<1x32xf32, #tpu.memory_space<vmem>>, vector<1x32xf32>
    %14 = arith.mulf %5, %5 : vector<64x32xf32>
    %cst_13 = arith.constant dense<0.000000e+00> : vector<32xf32>
    %15 = vector.multi_reduction <add>, %14, %cst_13 [0] : vector<64x32xf32> to vector<32xf32>
    %16 = vector.shape_cast %15 : vector<32xf32> to vector<1x32xf32>
    %17 = arith.addf %13, %16 : vector<1x32xf32>
    %c0_14 = arith.constant 0 : index
    %c0_15 = arith.constant 0 : index
    %18 = vector.load %arg5[%c0_14, %c0_15] : memref<1x32xf32, #tpu.memory_space<vmem>>, vector<1x32xf32>
    tpu.vector_store %arg5[%c0_14, %c0_15], %17 {strides = array<i32>} : memref<1x32xf32, #tpu.memory_space<vmem>>, vector<1x32xf32>,
    return
  }
  func.func @transform_0(%arg0: i32) -> (i32, i32) {
    %c0_i32 = arith.constant 0 : i32
    %c0_i32_0 = arith.constant 0 : i32
    return %arg0, %c0_i32 : i32, i32
  }
  func.func @transform_1(%arg0: i32) -> (i32, i32) {
    %c0_i32 = arith.constant 0 : i32
    %c0_i32_0 = arith.constant 0 : i32
    %c0_i32_1 = arith.constant 0 : i32
    return %c0_i32, %c0_i32_0 : i32, i32
  }
  func.func @transform_2(%arg0: i32) -> (i32, i32) {
    %c0_i32 = arith.constant 0 : i32
    %c0_i32_0 = arith.constant 0 : i32
    return %arg0, %c0_i32 : i32, i32
  }
  func.func @transform_3(%arg0: i32) -> (i32, i32) {
    %c0_i32 = arith.constant 0 : i32
    %c0_i32_0 = arith.constant 0 : i32
    %c0_i32_1 = arith.constant 0 : i32
    return %c0_i32, %c0_i32_0 : i32, i32
  }
  func.func @transform_4(%arg0: i32) -> (i32, i32) {
    %c0_i32 = arith.constant 0 : i32
    %c0_i32_0 = arith.constant 0 : i32
    %c0_i32_1 = arith.constant 0 : i32
    return %c0_i32, %c0_i32_0 : i32, i32
  }
}

module attributes {stable_mosaic.version = 11 : i64} {
  func.func @_bn_relu_residual_stats_kernel(%arg0: i32, %arg1: memref<16x128xbf16, #tpu.memory_space<vmem>>, %arg2: memref<1x128xf32, #tpu.memory_space<vmem>>, %arg3: memref<1x128xf32, #tpu.memory_space<vmem>>, %arg4: memref<16x128xbf16, #tpu.memory_space<vmem>>, %arg5: memref<16x128xbf16, #tpu.memory_space<vmem>>, %arg6: memref<1x128xf32, #tpu.memory_space<vmem>>, %arg7: memref<1x128xf32, #tpu.memory_space<vmem>>) attributes {dimension_semantics = [#tpu.dimension_semantics<arbitrary>], iteration_bounds = array<i64: 1>, scalar_prefetch = 0 : i64, scratch_operands = 0 : i64, tpu.core_type = #tpu.core_type<tc>, window_params = [{transform_indices = @transform_0, window_bounds = array<i64: 16, 128>}, {pipeline_mode = #tpu.pipeline_mode<synchronous>, transform_indices = @transform_1, window_bounds = array<i64: 1, 128>}, {pipeline_mode = #tpu.pipeline_mode<synchronous>, transform_indices = @transform_2, window_bounds = array<i64: 1, 128>}, {transform_indices = @transform_3, window_bounds = array<i64: 16, 128>}, {transform_indices = @transform_4, window_bounds = array<i64: 16, 128>}, {pipeline_mode = #tpu.pipeline_mode<synchronous>, transform_indices = @transform_5, window_bounds = array<i64: 1, 128>}, {pipeline_mode = #tpu.pipeline_mode<synchronous>, transform_indices = @transform_6, window_bounds = array<i64: 1, 128>}]} {
    %c0_i32 = arith.constant 0 : i32
    %0 = arith.cmpi eq, %arg0, %c0_i32 : i32
    %1 = arith.extui %0 : i1 to i32
    %c0_i32_0 = arith.constant 0 : i32
    %2 = arith.cmpi ne, %1, %c0_i32_0 : i32
    scf.if %2 {
      %cst_20 = arith.constant 0.000000e+00 : f32
      %29 = vector.broadcast %cst_20 : f32 to vector<1x128xf32>
      %c0_21 = arith.constant 0 : index
      %c0_22 = arith.constant 0 : index
      %30 = vector.load %arg6[%c0_21, %c0_22] : memref<1x128xf32, #tpu.memory_space<vmem>>, vector<1x128xf32>
      tpu.vector_store %arg6[%c0_21, %c0_22], %29 {strides = array<i32>} : memref<1x128xf32, #tpu.memory_space<vmem>>, vector<1x128xf32>,
      %cst_23 = arith.constant 0.000000e+00 : f32
      %31 = vector.broadcast %cst_23 : f32 to vector<1x128xf32>
      %c0_24 = arith.constant 0 : index
      %c0_25 = arith.constant 0 : index
      %32 = vector.load %arg7[%c0_24, %c0_25] : memref<1x128xf32, #tpu.memory_space<vmem>>, vector<1x128xf32>
      tpu.vector_store %arg7[%c0_24, %c0_25], %31 {strides = array<i32>} : memref<1x128xf32, #tpu.memory_space<vmem>>, vector<1x128xf32>,
    } else {
    }
    %c0 = arith.constant 0 : index
    %c0_1 = arith.constant 0 : index
    %3 = vector.load %arg4[%c0, %c0_1] : memref<16x128xbf16, #tpu.memory_space<vmem>>, vector<16x128xbf16>
    %4 = arith.extf %3 : vector<16x128xbf16> to vector<16x128xf32>
    %c0_2 = arith.constant 0 : index
    %c0_3 = arith.constant 0 : index
    %5 = vector.load %arg1[%c0_2, %c0_3] : memref<16x128xbf16, #tpu.memory_space<vmem>>, vector<16x128xbf16>
    %c0_4 = arith.constant 0 : index
    %c0_5 = arith.constant 0 : index
    %6 = vector.load %arg2[%c0_4, %c0_5] : memref<1x128xf32, #tpu.memory_space<vmem>>, vector<1x128xf32>
    %7 = arith.extf %5 : vector<16x128xbf16> to vector<16x128xf32>
    %8 = vector.broadcast %6 : vector<1x128xf32> to vector<16x128xf32>
    %9 = arith.mulf %7, %8 : vector<16x128xf32>
    %c0_6 = arith.constant 0 : index
    %c0_7 = arith.constant 0 : index
    %10 = vector.load %arg3[%c0_6, %c0_7] : memref<1x128xf32, #tpu.memory_space<vmem>>, vector<1x128xf32>
    %11 = vector.broadcast %10 : vector<1x128xf32> to vector<16x128xf32>
    %12 = arith.addf %9, %11 : vector<16x128xf32>
    %cst = arith.constant 0.000000e+00 : f32
    %13 = vector.broadcast %cst : f32 to vector<16x128xf32>
    %14 = arith.maximumf %12, %13 : vector<16x128xf32>
    %15 = arith.addf %4, %14 : vector<16x128xf32>
    %16 = arith.truncf %15 : vector<16x128xf32> to vector<16x128xbf16>
    %c0_8 = arith.constant 0 : index
    %c0_9 = arith.constant 0 : index
    %17 = vector.load %arg5[%c0_8, %c0_9] : memref<16x128xbf16, #tpu.memory_space<vmem>>, vector<16x128xbf16>
    tpu.vector_store %arg5[%c0_8, %c0_9], %16 {strides = array<i32>} : memref<16x128xbf16, #tpu.memory_space<vmem>>, vector<16x128xbf16>,
    %c0_10 = arith.constant 0 : index
    %c0_11 = arith.constant 0 : index
    %18 = vector.load %arg6[%c0_10, %c0_11] : memref<1x128xf32, #tpu.memory_space<vmem>>, vector<1x128xf32>
    %cst_12 = arith.constant dense<0.000000e+00> : vector<128xf32>
    %19 = vector.multi_reduction <add>, %15, %cst_12 [0] : vector<16x128xf32> to vector<128xf32>
    %20 = vector.shape_cast %19 : vector<128xf32> to vector<1x128xf32>
    %21 = arith.addf %18, %20 : vector<1x128xf32>
    %c0_13 = arith.constant 0 : index
    %c0_14 = arith.constant 0 : index
    %22 = vector.load %arg6[%c0_13, %c0_14] : memref<1x128xf32, #tpu.memory_space<vmem>>, vector<1x128xf32>
    tpu.vector_store %arg6[%c0_13, %c0_14], %21 {strides = array<i32>} : memref<1x128xf32, #tpu.memory_space<vmem>>, vector<1x128xf32>,
    %c0_15 = arith.constant 0 : index
    %c0_16 = arith.constant 0 : index
    %23 = vector.load %arg7[%c0_15, %c0_16] : memref<1x128xf32, #tpu.memory_space<vmem>>, vector<1x128xf32>
    %24 = arith.mulf %15, %15 : vector<16x128xf32>
    %cst_17 = arith.constant dense<0.000000e+00> : vector<128xf32>
    %25 = vector.multi_reduction <add>, %24, %cst_17 [0] : vector<16x128xf32> to vector<128xf32>
    %26 = vector.shape_cast %25 : vector<128xf32> to vector<1x128xf32>
    %27 = arith.addf %23, %26 : vector<1x128xf32>
    %c0_18 = arith.constant 0 : index
    %c0_19 = arith.constant 0 : index
    %28 = vector.load %arg7[%c0_18, %c0_19] : memref<1x128xf32, #tpu.memory_space<vmem>>, vector<1x128xf32>
    tpu.vector_store %arg7[%c0_18, %c0_19], %27 {strides = array<i32>} : memref<1x128xf32, #tpu.memory_space<vmem>>, vector<1x128xf32>,
    return
  }
  func.func @transform_0(%arg0: i32) -> (i32, i32) {
    %c0_i32 = arith.constant 0 : i32
    %c0_i32_0 = arith.constant 0 : i32
    return %arg0, %c0_i32 : i32, i32
  }
  func.func @transform_1(%arg0: i32) -> (i32, i32) {
    %c0_i32 = arith.constant 0 : i32
    %c0_i32_0 = arith.constant 0 : i32
    %c0_i32_1 = arith.constant 0 : i32
    return %c0_i32, %c0_i32_0 : i32, i32
  }
  func.func @transform_2(%arg0: i32) -> (i32, i32) {
    %c0_i32 = arith.constant 0 : i32
    %c0_i32_0 = arith.constant 0 : i32
    %c0_i32_1 = arith.constant 0 : i32
    return %c0_i32, %c0_i32_0 : i32, i32
  }
  func.func @transform_3(%arg0: i32) -> (i32, i32) {
    %c0_i32 = arith.constant 0 : i32
    %c0_i32_0 = arith.constant 0 : i32
    return %arg0, %c0_i32 : i32, i32
  }
  func.func @transform_4(%arg0: i32) -> (i32, i32) {
    %c0_i32 = arith.constant 0 : i32
    %c0_i32_0 = arith.constant 0 : i32
    return %arg0, %c0_i32 : i32, i32
  }
  func.func @transform_5(%arg0: i32) -> (i32, i32) {
    %c0_i32 = arith.constant 0 : i32
    %c0_i32_0 = arith.constant 0 : i32
    %c0_i32_1 = arith.constant 0 : i32
    return %c0_i32, %c0_i32_0 : i32, i32
  }
  func.func @transform_6(%arg0: i32) -> (i32, i32) {
    %c0_i32 = arith.constant 0 : i32
    %c0_i32_0 = arith.constant 0 : i32
    %c0_i32_1 = arith.constant 0 : i32
    return %c0_i32, %c0_i32_0 : i32, i32
  }
}

module attributes {stable_mosaic.version = 11 : i64} {
  func.func @_matmul_bias_act_kernel(%arg0: i32, %arg1: memref<64x864xbf16, #tpu.memory_space<vmem>>, %arg2: memref<864x256xbf16, #tpu.memory_space<vmem>>, %arg3: memref<1x256xf32, #tpu.memory_space<vmem>>, %arg4: memref<64x256xbf16, #tpu.memory_space<vmem>>) attributes {dimension_semantics = [#tpu.dimension_semantics<parallel>], iteration_bounds = array<i64: 1>, scalar_prefetch = 0 : i64, scratch_operands = 0 : i64, tpu.core_type = #tpu.core_type<tc>, window_params = [{transform_indices = @transform_0, window_bounds = array<i64: 64, 864>}, {pipeline_mode = #tpu.pipeline_mode<synchronous>, transform_indices = @transform_1, window_bounds = array<i64: 864, 256>}, {pipeline_mode = #tpu.pipeline_mode<synchronous>, transform_indices = @transform_2, window_bounds = array<i64: 1, 256>}, {transform_indices = @transform_3, window_bounds = array<i64: 64, 256>}]} {
    %c0 = arith.constant 0 : index
    %c0_0 = arith.constant 0 : index
    %0 = vector.load %arg1[%c0, %c0_0] : memref<64x864xbf16, #tpu.memory_space<vmem>>, vector<64x864xbf16>
    %c0_1 = arith.constant 0 : index
    %c0_2 = arith.constant 0 : index
    %1 = vector.load %arg2[%c0_1, %c0_2] : memref<864x256xbf16, #tpu.memory_space<vmem>>, vector<864x256xbf16>
    %cst = arith.constant dense<0.000000e+00> : vector<64x256xf32>
    %2 = tpu.matmul %0, %1, %cst {dimension_numbers = #tpu.dot_dimension_numbers<[1], [0], [0], [1], [0, 0, 1, 1], [], []>} : vector<64x864xbf16>, vector<864x256xbf16>, vector<64x256xf32> -> vector<64x256xf32>
    %c0_3 = arith.constant 0 : index
    %c0_4 = arith.constant 0 : index
    %3 = vector.load %arg3[%c0_3, %c0_4] : memref<1x256xf32, #tpu.memory_space<vmem>>, vector<1x256xf32>
    %4 = vector.broadcast %3 : vector<1x256xf32> to vector<64x256xf32>
    %5 = arith.addf %2, %4 : vector<64x256xf32>
    %cst_5 = arith.constant 0.000000e+00 : f32
    %6 = vector.broadcast %cst_5 : f32 to vector<64x256xf32>
    %7 = arith.maximumf %5, %6 : vector<64x256xf32>
    %8 = arith.truncf %7 : vector<64x256xf32> to vector<64x256xbf16>
    %c0_6 = arith.constant 0 : index
    %c0_7 = arith.constant 0 : index
    %9 = vector.load %arg4[%c0_6, %c0_7] : memref<64x256xbf16, #tpu.memory_space<vmem>>, vector<64x256xbf16>
    tpu.vector_store %arg4[%c0_6, %c0_7], %8 {strides = array<i32>} : memref<64x256xbf16, #tpu.memory_space<vmem>>, vector<64x256xbf16>,
    return
  }
  func.func @transform_0(%arg0: i32) -> (i32, i32) {
    %c0_i32 = arith.constant 0 : i32
    %c0_i32_0 = arith.constant 0 : i32
    return %arg0, %c0_i32 : i32, i32
  }
  func.func @transform_1(%arg0: i32) -> (i32, i32) {
    %c0_i32 = arith.constant 0 : i32
    %c0_i32_0 = arith.constant 0 : i32
    %c0_i32_1 = arith.constant 0 : i32
    return %c0_i32, %c0_i32_0 : i32, i32
  }
  func.func @transform_2(%arg0: i32) -> (i32, i32) {
    %c0_i32 = arith.constant 0 : i32
    %c0_i32_0 = arith.constant 0 : i32
    %c0_i32_1 = arith.constant 0 : i32
    return %c0_i32, %c0_i32_0 : i32, i32
  }
  func.func @transform_3(%arg0: i32) -> (i32, i32) {
    %c0_i32 = arith.constant 0 : i32
    %c0_i32_0 = arith.constant 0 : i32
    return %arg0, %c0_i32 : i32, i32
  }
}

module attributes {stable_mosaic.version = 11 : i64} {
  func.func @_matmul_bias_act_kernel(%arg0: i32, %arg1: memref<512x864xbf16, #tpu.memory_space<vmem>>, %arg2: memref<864x12xbf16, #tpu.memory_space<vmem>>, %arg3: memref<1x12xf32, #tpu.memory_space<vmem>>, %arg4: memref<512x12xf32, #tpu.memory_space<vmem>>) attributes {dimension_semantics = [#tpu.dimension_semantics<parallel>], iteration_bounds = array<i64: 1>, scalar_prefetch = 0 : i64, scratch_operands = 0 : i64, tpu.core_type = #tpu.core_type<tc>, window_params = [{transform_indices = @transform_0, window_bounds = array<i64: 512, 864>}, {pipeline_mode = #tpu.pipeline_mode<synchronous>, transform_indices = @transform_1, window_bounds = array<i64: 864, 12>}, {pipeline_mode = #tpu.pipeline_mode<synchronous>, transform_indices = @transform_2, window_bounds = array<i64: 1, 12>}, {transform_indices = @transform_3, window_bounds = array<i64: 512, 12>}]} {
    %c0 = arith.constant 0 : index
    %c0_0 = arith.constant 0 : index
    %0 = vector.load %arg1[%c0, %c0_0] : memref<512x864xbf16, #tpu.memory_space<vmem>>, vector<512x864xbf16>
    %c0_1 = arith.constant 0 : index
    %c0_2 = arith.constant 0 : index
    %1 = vector.load %arg2[%c0_1, %c0_2] : memref<864x12xbf16, #tpu.memory_space<vmem>>, vector<864x12xbf16>
    %cst = arith.constant dense<0.000000e+00> : vector<512x12xf32>
    %2 = tpu.matmul %0, %1, %cst {dimension_numbers = #tpu.dot_dimension_numbers<[1], [0], [0], [1], [0, 0, 1, 1], [], []>} : vector<512x864xbf16>, vector<864x12xbf16>, vector<512x12xf32> -> vector<512x12xf32>
    %c0_3 = arith.constant 0 : index
    %c0_4 = arith.constant 0 : index
    %3 = vector.load %arg3[%c0_3, %c0_4] : memref<1x12xf32, #tpu.memory_space<vmem>>, vector<1x12xf32>
    %4 = vector.broadcast %3 : vector<1x12xf32> to vector<512x12xf32>
    %5 = arith.addf %2, %4 : vector<512x12xf32>
    %c0_5 = arith.constant 0 : index
    %c0_6 = arith.constant 0 : index
    %6 = vector.load %arg4[%c0_5, %c0_6] : memref<512x12xf32, #tpu.memory_space<vmem>>, vector<512x12xf32>
    tpu.vector_store %arg4[%c0_5, %c0_6], %5 {strides = array<i32>} : memref<512x12xf32, #tpu.memory_space<vmem>>, vector<512x12xf32>,
    return
  }
  func.func @transform_0(%arg0: i32) -> (i32, i32) {
    %c0_i32 = arith.constant 0 : i32
    %c0_i32_0 = arith.constant 0 : i32
    return %arg0, %c0_i32 : i32, i32
  }
  func.func @transform_1(%arg0: i32) -> (i32, i32) {
    %c0_i32 = arith.constant 0 : i32
    %c0_i32_0 = arith.constant 0 : i32
    %c0_i32_1 = arith.constant 0 : i32
    return %c0_i32, %c0_i32_0 : i32, i32
  }
  func.func @transform_2(%arg0: i32) -> (i32, i32) {
    %c0_i32 = arith.constant 0 : i32
    %c0_i32_0 = arith.constant 0 : i32
    %c0_i32_1 = arith.constant 0 : i32
    return %c0_i32, %c0_i32_0 : i32, i32
  }
  func.func @transform_3(%arg0: i32) -> (i32, i32) {
    %c0_i32 = arith.constant 0 : i32
    %c0_i32_0 = arith.constant 0 : i32
    return %arg0, %c0_i32 : i32, i32
  }
}

</mosaic_0001>

<llo_original>
// kernel: tile.83
$region0: #{tile.83}
  #allocation0 [shape = 's32[1]{0}', space=sflag, size = 0x4, scoped, tag = 'scoped memory for tile.83']
  %s0 = inlined_call_operand.vmem [shape: f32[32], index: 0, kind: input, shape index: {}]
  %s1 = inlined_call_operand.vmem [shape: f32[4,32], index: 1, kind: output, shape index: {}]
  // Predicated region
  $region2: #{tile.83} parent=0 // pred_check
    _
  $region3: #{tile.83} parent=0 // pred_check_branch
    %3 = sbr.rel (0) target = $region5
  $region4: #{tile.83} parent=0 // pred_region
    _
  $region5: #{tile.83} parent=0 // pred_fallthru
    _
  %v4 = vld [vmem:[%s0] ss:$0 sm:$0xff]
  %5 = vst [vmem:[%s1] sm:$0xf] %v4

// kernel: tile.84
$region0: #{tile.84}
  %s0 = inlined_call_operand.vmem [shape: f32[4,32], index: 0, kind: input, shape index: {}]
  %s1 = inlined_call_operand.vmem [shape: f32[1,128], index: 1, kind: output, shape index: {}]
  $region1: #{tile.84} parent=0
    #allocation0 [shape = 'u8[4096]{0}', space=vmem, size = 0x1000, scoped, tag = 'scoped mem for output reshape']
    #allocation1 [shape = 'u8[4096]{0}', space=vmem, size = 0x1000, scoped, tag = 'scoped mem for input reshape']
    %s3 = sshllo.u32 0, 4
    %v4 = vld [vmem:[%s0] sm:%s3]
    %5 = vst [vmem:[#allocation1] sm:%s3] %v4
    %v6 = vld [vmem:[#allocation1] sm:$0x1]
    %vm7 = vcmask 261120
    %8 = vst.msk [vmem:[#allocation0] sm:$0x1] %vm7, %v6
    %s9 = scalar_lea.vmem [#allocation1], 3
    %v10 = vld [vmem:[%s9] sm:$0x1]
    %11 = vrot.lane.b32.xlu0 %v10, 96
    %v12 = vpop.permute.xlu0 %11
    %vm13 = vcmask 1048320
    %14 = vst.msk [vmem:[#allocation0] sm:$0x1] %vm13, %v12
    %s15 = scalar_lea.vmem [#allocation1], 2
    %v16 = vld [vmem:[%s15] sm:$0x1]
    %17 = vrot.lane.b32.xlu0 %v16, 64
    %v18 = vpop.permute.xlu0 %17
    %vm19 = vcmask 785920
    %20 = vst.msk [vmem:[#allocation0] sm:$0x1] %vm19, %v18
    %s21 = scalar_lea.vmem [#allocation1], 1
    %v22 = vld [vmem:[%s21] sm:$0x1]
    %23 = vrot.lane.b32.xlu0 %v22, 32
    %v24 = vpop.permute.xlu0 %23
    %vm25 = vcmask 523520
    %26 = vst.msk [vmem:[#allocation0] sm:$0x1] %vm25, %v24
    %s28 = sshllo.u32 0, 1
    %v30 = vld [vmem:[#allocation0] sm:%s28]
    %s31 = sshllo.u32 0, 1
    %32 = vst [vmem:[%s1] sm:%s31] %v30

// kernel: decoder_forward.15
$region0: #{decoder_forward.15}
  #allocation0 [shape = 'u32[]', space=smem, size = 0x4, offset = 0x4, fixed_abs, tag = 'smem constant byte address 0x4 - core index']
  #allocation1 [shape = 'u32[144,128]{1,0:T(1,128)}', space=vmem, size = 0x12000, scoped, tag = 'internal scratch']
  %s0 = inlined_call_operand.vmem [shape: bf16[16,128], index: 0, kind: input, shape index: {}]
  %s1 = inlined_call_operand.vmem [shape: f32[1,128], index: 1, kind: input, shape index: {}]
  %s2 = inlined_call_operand.vmem [shape: f32[1,128], index: 2, kind: input, shape index: {}]
  %s3 = inlined_call_operand.vmem [shape: bf16[16,128], index: 3, kind: output, shape index: {}]
  %s4 = sld [smem:[#allocation0]]
  $region22: #{decoder_forward.15} parent=0
    _
  %s6 = ssub.s32 1, %s4
  %s7 = scalar_select 0, %s6, %s4
  // Predicated region
  $region2: #{decoder_forward.15} parent=0 // pred_check
    _
  $region3: #{decoder_forward.15} parent=0 // pred_check_branch
    %9 = sbr.rel (0) target = $region5
  $region4: #{decoder_forward.15} parent=0 // pred_region
    _
  $region5: #{decoder_forward.15} parent=0 // pred_fallthru
    _
  // Predicated region
  $region6: #{decoder_forward.15} parent=0 // pred_check
    _
  $region7: #{decoder_forward.15} parent=0 // pred_check_branch
    %11 = sbr.rel (0) target = $region9
  $region8: #{decoder_forward.15} parent=0 // pred_region
    _
  $region9: #{decoder_forward.15} parent=0 // pred_fallthru
    _
  // Predicated region
  $region10: #{decoder_forward.15} parent=0 // pred_check
    _
  $region11: #{decoder_forward.15} parent=0 // pred_check_branch
    %13 = sbr.rel (0) target = $region13
  $region12: #{decoder_forward.15} parent=0 // pred_region
    _
  $region13: #{decoder_forward.15} parent=0 // pred_fallthru
    _
  %v14 = vld [vmem:[%s0] sm:$0xf]
  %v15 = vld [vmem:[%s0 + $0x4] sm:$0xf]
  %v16 = vld [vmem:[%s1] sm:$0x1]
  %v17 = vunpack.c.l.bf16 %v14
  %v18 = vunpack.c.l.bf16 %v15
  %v20 = vlaneseq
  %v21 = vshrl.u32 %v20, 7
  %v22 = vsub.s32 0, %v21
  %v23 = vrot.slane %v16, %v22
  %v25 = vmul.f32 %v17, %v23
  %v26 = vmul.f32 %v18, %v23
  %v27 = vld [vmem:[%s2] sm:$0x1]
  %v29 = vlaneseq
  %v30 = vshrl.u32 %v29, 7
  %v31 = vsub.s32 0, %v30
  %v32 = vrot.slane %v27, %v31
  %v34 = vadd.f32 %v25, %v32
  %v35 = vadd.f32 %v26, %v32
  %v36 = vmax.f32 %v34, 0.0
  %v37 = vmax.f32 %v35, 0.0
  %v38 = vpack.c.bf16 %v37, %v36
  %v40 = vunpack.c.l.b16 %v38
  %v41 = vunpack.c.h.b16 %v38
  %v42 = vpack.c.b16 %v40, %v40
  %v43 = vpack.c.b16 %v41, %v41
  %46 = vst [vmem:[%s3] sm:$0xf] %v42
  %47 = vst [vmem:[%s3 + $0x4] sm:$0xf] %v43
  // Predicated region
  $region14: #{decoder_forward.15} parent=0 // pred_check
    _
  $region15: #{decoder_forward.15} parent=0 // pred_check_branch
    %49 = sbr.rel (0) target = $region17
  $region16: #{decoder_forward.15} parent=0 // pred_region
    _
  $region17: #{decoder_forward.15} parent=0 // pred_fallthru
    _
  // Predicated region
  $region18: #{decoder_forward.15} parent=0 // pred_check
    _
  $region19: #{decoder_forward.15} parent=0 // pred_check_branch
    %51 = sbr.rel (0) target = $region21
  $region20: #{decoder_forward.15} parent=0 // pred_region
    _
  $region21: #{decoder_forward.15} parent=0 // pred_fallthru
    _

// kernel: decoder_forward.14
$region0: #{decoder_forward.14}
  #allocation0 [shape = 'u32[]', space=smem, size = 0x4, offset = 0x4, fixed_abs, tag = 'smem constant byte address 0x4 - core index']
  #allocation1 [shape = 'u32[144,128]{1,0:T(1,128)}', space=vmem, size = 0x12000, scoped, tag = 'internal scratch']
  %s0 = inlined_call_operand.vmem [shape: bf16[16,128], index: 0, kind: input, shape index: {}]
  %s1 = inlined_call_operand.vmem [shape: f32[1,128], index: 1, kind: output, shape index: {0}]
  %s2 = inlined_call_operand.vmem [shape: f32[1,128], index: 2, kind: output, shape index: {1}]
  %3 = xla_tuple %s1, %s2
  %s4 = sld [smem:[#allocation0]]
  $region26: #{decoder_forward.14} parent=0
    _
  %s6 = ssub.s32 1, %s4
  %s7 = scalar_select 0, %s6, %s4
  // Predicated region
  $region2: #{decoder_forward.14} parent=0 // pred_check
    _
  $region3: #{decoder_forward.14} parent=0 // pred_check_branch
    %9 = sbr.rel (0) target = $region5
  $region4: #{decoder_forward.14} parent=0 // pred_region
    _
  $region5: #{decoder_forward.14} parent=0 // pred_fallthru
    _
  %p10 = scmp.eq.s32.totalorder 0, 0
  // Predicated region
  $region6: #{decoder_forward.14} parent=0 // pred_check
    %p11 = pneg %p10
  $region7: #{decoder_forward.14} parent=0 // pred_check_branch
    %13 = sbr.rel (%p11) target = $region9
  $region8: #{decoder_forward.14} parent=0 // pred_region
    %14 = vst [vmem:[%s1] sm:$0x1] 0.0
    %15 = vst [vmem:[%s2] sm:$0x1] 0.0
  $region9: #{decoder_forward.14} parent=0 // pred_fallthru
    _
  %v16 = vld [vmem:[%s0] sm:$0xf]
  %v17 = vld [vmem:[%s0 + $0x4] sm:$0xf]
  %v18 = vunpack.c.l.bf16 %v16
  %v19 = vunpack.c.l.bf16 %v17
  %v20 = vld [vmem:[%s1] sm:$0x1]
  %v21 = vadd.f32 %v18, %v19
  %v22 = vrot.slane %v21, 4
  %v23 = vadd.f32 %v21, %v22
  %v24 = vrot.slane %v23, 2
  %v25 = vadd.f32 %v23, %v24
  %v26 = vrot.slane %v25, 1
  %v27 = vadd.f32 %v25, %v26
  %v28 = vadd.f32 %v20, %v27
  %29 = vst [vmem:[%s1] sm:$0x1] %v28
  %v30 = vld [vmem:[%s2] sm:$0x1]
  %v31 = vmul.f32 %v18, %v18
  %v32 = vmul.f32 %v19, %v19
  %v33 = vadd.f32 %v31, %v32
  %v34 = vrot.slane %v33, 4
  %v35 = vadd.f32 %v33, %v34
  %v36 = vrot.slane %v35, 2
  %v37 = vadd.f32 %v35, %v36
  %v38 = vrot.slane %v37, 1
  %v39 = vadd.f32 %v37, %v38
  %v40 = vadd.f32 %v30, %v39
  %41 = vst [vmem:[%s2] sm:$0x1] %v40
  // Predicated region
  $region10: #{decoder_forward.14} parent=0 // pred_check
    _
  $region11: #{decoder_forward.14} parent=0 // pred_check_branch
    %43 = sbr.rel (0) target = $region13
  $region12: #{decoder_forward.14} parent=0 // pred_region
    _
  $region13: #{decoder_forward.14} parent=0 // pred_fallthru
    _
  // Predicated region
  $region14: #{decoder_forward.14} parent=0 // pred_check
    _
  $region15: #{decoder_forward.14} parent=0 // pred_check_branch
    %45 = sbr.rel (0) target = $region17
  $region16: #{decoder_forward.14} parent=0 // pred_region
    _
  $region17: #{decoder_forward.14} parent=0 // pred_fallthru
    _
  // Predicated region
  $region18: #{decoder_forward.14} parent=0 // pred_check
    _
  $region19: #{decoder_forward.14} parent=0 // pred_check_branch
    %47 = sbr.rel (0) target = $region21
  $region20: #{decoder_forward.14} parent=0 // pred_region
    _
  $region21: #{decoder_forward.14} parent=0 // pred_fallthru
    _
  // Predicated region
  $region22: #{decoder_forward.14} parent=0 // pred_check
    _
  $region23: #{decoder_forward.14} parent=0 // pred_check_branch
    %49 = sbr.rel (0) target = $region25
  $region24: #{decoder_forward.14} parent=0 // pred_region
    _
  $region25: #{decoder_forward.14} parent=0 // pred_fallthru
    _

// kernel: tile.93
$region0: #{tile.93}
  #allocation0 [shape = 's32[1]{0}', space=sflag, size = 0x4, scoped, tag = 'scoped memory for tile.93']
  %s0 = inlined_call_operand.vmem [shape: f32[16], index: 0, kind: input, shape index: {}]
  %s1 = inlined_call_operand.vmem [shape: f32[4,16], index: 1, kind: output, shape index: {}]
  // Predicated region
  $region2: #{tile.93} parent=0 // pred_check
    _
  $region3: #{tile.93} parent=0 // pred_check_branch
    %3 = sbr.rel (0) target = $region5
  $region4: #{tile.93} parent=0 // pred_region
    _
  $region5: #{tile.93} parent=0 // pred_fallthru
    _
  %v4 = vld [vmem:[%s0] ss:$0 sm:$0xff]
  %5 = vst [vmem:[%s1] sm:$0xf] %v4

// kernel: tile.94
$region0: #{tile.94}
  %s0 = inlined_call_operand.vmem [shape: f32[4,16], index: 0, kind: input, shape index: {}]
  %s1 = inlined_call_operand.vmem [shape: f32[1,64], index: 1, kind: output, shape index: {}]
  $region1: #{tile.94} parent=0
    #allocation0 [shape = 'u8[4096]{0}', space=vmem, size = 0x1000, scoped, tag = 'scoped mem for output reshape']
    #allocation1 [shape = 'u8[4096]{0}', space=vmem, size = 0x1000, scoped, tag = 'scoped mem for input reshape']
    %s3 = sshllo.u32 0, 4
    %v4 = vld [vmem:[%s0] sm:%s3]
    %5 = vst [vmem:[#allocation1] sm:%s3] %v4
    %v6 = vld [vmem:[#allocation1] sm:$0x1]
    %vm7 = vcmask 130048
    %8 = vst.msk [vmem:[#allocation0] sm:$0x1] %vm7, %v6
    %s9 = scalar_lea.vmem [#allocation1], 3
    %v10 = vld [vmem:[%s9] sm:$0x1]
    %11 = vrot.lane.b32.xlu0 %v10, 48
    %v12 = vpop.permute.xlu0 %11
    %vm13 = vcmask 523648
    %14 = vst.msk [vmem:[#allocation0] sm:$0x1] %vm13, %v12
    %s15 = scalar_lea.vmem [#allocation1], 2
    %v16 = vld [vmem:[%s15] sm:$0x1]
    %17 = vrot.lane.b32.xlu0 %v16, 32
    %v18 = vpop.permute.xlu0 %17
    %vm19 = vcmask 392448
    %20 = vst.msk [vmem:[#allocation0] sm:$0x1] %vm19, %v18
    %s21 = scalar_lea.vmem [#allocation1], 1
    %v22 = vld [vmem:[%s21] sm:$0x1]
    %23 = vrot.lane.b32.xlu0 %v22, 16
    %v24 = vpop.permute.xlu0 %23
    %vm25 = vcmask 261248
    %26 = vst.msk [vmem:[#allocation0] sm:$0x1] %vm25, %v24
    %s28 = sshllo.u32 0, 1
    %v30 = vld [vmem:[#allocation0] sm:%s28]
    %s31 = sshllo.u32 0, 1
    %32 = vst [vmem:[%s1] sm:%s31] %v30

// kernel: decoder_forward.16
$region0: #{decoder_forward.16}
  #allocation0 [shape = 'u32[]', space=smem, size = 0x4, offset = 0x4, fixed_abs, tag = 'smem constant byte address 0x4 - core index']
  #allocation1 [shape = 'u32[144,128]{1,0:T(1,128)}', space=vmem, size = 0x12000, scoped, tag = 'internal scratch']
  %s0 = inlined_call_operand.vmem [shape: bf16[64,864], index: 0, kind: input, shape index: {}]
  %s1 = inlined_call_operand.vmem [shape: bf16[864,16], index: 1, kind: input, shape index: {}]
  %s2 = inlined_call_operand.vmem [shape: bf16[64,16], index: 2, kind: output, shape index: {0}]
  %s3 = inlined_call_operand.vmem [shape: f32[1,16], index: 3, kind: output, shape index: {1}]
  %s4 = inlined_call_operand.vmem [shape: f32[1,16], index: 4, kind: output, shape index: {2}]
  %5 = xla_tuple %s2, %s3, %s4
  %s6 = sld [smem:[#allocation0]]
  $region38: #{decoder_forward.16} parent=0
    _
  %s8 = ssub.s32 1, %s6
  %s9 = scalar_select 0, %s8, %s6
  // Predicated region
  $region2: #{decoder_forward.16} parent=0 // pred_check
    _
  $region3: #{decoder_forward.16} parent=0 // pred_check_branch
    %11 = sbr.rel (0) target = $region5
  $region4: #{decoder_forward.16} parent=0 // pred_region
    _
  $region5: #{decoder_forward.16} parent=0 // pred_fallthru
    _
  // Predicated region
  $region6: #{decoder_forward.16} parent=0 // pred_check
    _
  $region7: #{decoder_forward.16} parent=0 // pred_check_branch
    %13 = sbr.rel (0) target = $region9
  $region8: #{decoder_forward.16} parent=0 // pred_region
    _
  $region9: #{decoder_forward.16} parent=0 // pred_fallthru
    _
  %p15 = scmp.eq.s32.totalorder 0, 0
  // Predicated region
  $region10: #{decoder_forward.16} parent=0 // pred_check
    %p16 = pneg %p15
  $region11: #{decoder_forward.16} parent=0 // pred_check_branch
    %18 = sbr.rel (%p16) target = $region13
  $region12: #{decoder_forward.16} parent=0 // pred_region
    %vm19 = vcmask 122880
    %20 = vst.msk [vmem:[%s3] sm:$0x1] %vm19, 0.0
    %21 = vst.msk [vmem:[%s4] sm:$0x1] %vm19, 0.0
  $region13: #{decoder_forward.16} parent=0 // pred_fallthru
    _
  %v22 = vld [vmem:[%s0] sm:$0xff]
  %v23 = vld [vmem:[%s0 + $0x8] sm:$0xff]
  %v24 = vld [vmem:[%s0 + $0x10] sm:$0xff]
  %v25 = vld [vmem:[%s0 + $0x18] sm:$0xf]
  %v26 = vld [vmem:[%s0 + $0x1c] sm:$0xff]
  %v27 = vld [vmem:[%s0 + $0x24] sm:$0xff]
  %v28 = vld [vmem:[%s0 + $0x2c] sm:$0xff]
  %v29 = vld [vmem:[%s0 + $0x34] sm:$0xf]
  %v30 = vld [vmem:[%s0 + $0x38] sm:$0xff]
  %v31 = vld [vmem:[%s0 + $0x40] sm:$0xff]
  %v32 = vld [vmem:[%s0 + $0x48] sm:$0xff]
  %v33 = vld [vmem:[%s0 + $0x50] sm:$0xf]
  %v34 = vld [vmem:[%s0 + $0x54] sm:$0xff]
  %v35 = vld [vmem:[%s0 + $0x5c] sm:$0xff]
  %v36 = vld [vmem:[%s0 + $0x64] sm:$0xff]
  %v37 = vld [vmem:[%s0 + $0x6c] sm:$0xf]
  %v38 = vld [vmem:[%s0 + $0x70] sm:$0xff]
  %v39 = vld [vmem:[%s0 + $0x78] sm:$0xff]
  %v40 = vld [vmem:[%s0 + $0x80] sm:$0xff]
  %v41 = vld [vmem:[%s0 + $0x88] sm:$0xf]
  %v42 = vld [vmem:[%s0 + $0x8c] sm:$0xff]
  %v43 = vld [vmem:[%s0 + $0x94] sm:$0xff]
  %v44 = vld [vmem:[%s0 + $0x9c] sm:$0xff]
  %v45 = vld [vmem:[%s0 + $0xa4] sm:$0xf]
  %v46 = vld [vmem:[%s0 + $0xa8] sm:$0xff]
  %v47 = vld [vmem:[%s0 + $0xb0] sm:$0xff]
  %v48 = vld [vmem:[%s0 + $0xb8] sm:$0xff]
  %v49 = vld [vmem:[%s0 + $0xc0] sm:$0xf]
  %v50 = vld [vmem:[%s0 + $0xc4] sm:$0xff]
  %v51 = vld [vmem:[%s0 + $0xcc] sm:$0xff]
  %v52 = vld [vmem:[%s0 + $0xd4] sm:$0xff]
  %v53 = vld [vmem:[%s0 + $0xdc] sm:$0xf]
  %v54 = vld [vmem:[%s1] sm:$0xf]
  %v55 = vld [vmem:[%s1 + $0x4] sm:$0xf]
  %v56 = vld [vmem:[%s1 + $0x8] sm:$0xf]
  %v57 = vld [vmem:[%s1 + $0xc] sm:$0xf]
  %v58 = vld [vmem:[%s1 + $0x10] sm:$0xf]
  %v59 = vld [vmem:[%s1 + $0x14] sm:$0xf]
  %v60 = vld [vmem:[%s1 + $0x18] sm:$0xf]
  %v61 = vld [vmem:[%s1 + $0x1c] sm:$0xf]
  %v62 = vld [vmem:[%s1 + $0x20] sm:$0xf]
  %v63 = vld [vmem:[%s1 + $0x24] sm:$0xf]
  %v64 = vld [vmem:[%s1 + $0x28] sm:$0xf]
  %v65 = vld [vmem:[%s1 + $0x2c] sm:$0xf]
  %v66 = vld [vmem:[%s1 + $0x30] sm:$0xf]
  %v67 = vld [vmem:[%s1 + $0x34] sm:$0xf]
  %v68 = vld [vmem:[%s1 + $0x38] sm:$0xf]
  %v69 = vld [vmem:[%s1 + $0x3c] sm:$0xf]
  %v70 = vld [vmem:[%s1 + $0x40] sm:$0xf]
  %v71 = vld [vmem:[%s1 + $0x44] sm:$0xf]
  %v72 = vld [vmem:[%s1 + $0x48] sm:$0xf]
  %v73 = vld [vmem:[%s1 + $0x4c] sm:$0xf]
  %v74 = vld [vmem:[%s1 + $0x50] sm:$0xf]
  %v75 = vld [vmem:[%s1 + $0x54] sm:$0xf]
  %v76 = vld [vmem:[%s1 + $0x58] sm:$0xf]
  %v77 = vld [vmem:[%s1 + $0x5c] sm:$0xf]
  %v78 = vld [vmem:[%s1 + $0x60] sm:$0xf]
  %v79 = vld [vmem:[%s1 + $0x64] sm:$0xf]
  %v80 = vld [vmem:[%s1 + $0x68] sm:$0xf]
  %v81 = vld [vmem:[%s1 + $0x6c] sm:$0xf]
  %v82 = vld [vmem:[%s1 + $0x70] sm:$0xf]
  %v83 = vld [vmem:[%s1 + $0x74] sm:$0xf]
  %v84 = vld [vmem:[%s1 + $0x78] sm:$0xf]
  %v85 = vld [vmem:[%s1 + $0x7c] sm:$0xf]
  %v86 = vld [vmem:[%s1 + $0x80] sm:$0xf]
  %v87 = vld [vmem:[%s1 + $0x84] sm:$0xf]
  %v88 = vld [vmem:[%s1 + $0x88] sm:$0xf]
  %v89 = vld [vmem:[%s1 + $0x8c] sm:$0xf]
  %v90 = vld [vmem:[%s1 + $0x90] sm:$0xf]
  %v91 = vld [vmem:[%s1 + $0x94] sm:$0xf]
  %v92 = vld [vmem:[%s1 + $0x98] sm:$0xf]
  %v93 = vld [vmem:[%s1 + $0x9c] sm:$0xf]
  %v94 = vld [vmem:[%s1 + $0xa0] sm:$0xf]
  %v95 = vld [vmem:[%s1 + $0xa4] sm:$0xf]
  %v96 = vld [vmem:[%s1 + $0xa8] sm:$0xf]
  %v97 = vld [vmem:[%s1 + $0xac] sm:$0xf]
  %v98 = vld [vmem:[%s1 + $0xb0] sm:$0xf]
  %v99 = vld [vmem:[%s1 + $0xb4] sm:$0xf]
  %v100 = vld [vmem:[%s1 + $0xb8] sm:$0xf]
  %v101 = vld [vmem:[%s1 + $0xbc] sm:$0xf]
  %v102 = vld [vmem:[%s1 + $0xc0] sm:$0xf]
  %v103 = vld [vmem:[%s1 + $0xc4] sm:$0xf]
  %v104 = vld [vmem:[%s1 + $0xc8] sm:$0xf]
  %v105 = vld [vmem:[%s1 + $0xcc] sm:$0xf]
  %v106 = vld [vmem:[%s1 + $0xd0] sm:$0xf]
  %v107 = vld [vmem:[%s1 + $0xd4] sm:$0xf]
  %v108 = vld [vmem:[%s1 + $0xd8] sm:$0xf]
  %v109 = vld [vmem:[%s1 + $0xdc] sm:$0xf]
  %v110 = vld [vmem:[%s1 + $0xe0] sm:$0xf]
  %v111 = vld [vmem:[%s1 + $0xe4] sm:$0xf]
  %v112 = vld [vmem:[%s1 + $0xe8] sm:$0xf]
  %v113 = vld [vmem:[%s1 + $0xec] sm:$0xf]
  %v114 = vld [vmem:[%s1 + $0xf0] sm:$0xf]
  %v115 = vld [vmem:[%s1 + $0xf4] sm:$0xf]
  %v116 = vld [vmem:[%s1 + $0xf8] sm:$0xf]
  %v117 = vld [vmem:[%s1 + $0xfc] sm:$0xf]
  %v118 = vld [vmem:[%s1 + $0x100] sm:$0xf]
  %v119 = vld [vmem:[%s1 + $0x104] sm:$0xf]
  %v120 = vld [vmem:[%s1 + $0x108] sm:$0xf]
  %v121 = vld [vmem:[%s1 + $0x10c] sm:$0xf]
  %v122 = vld [vmem:[%s1 + $0x110] sm:$0xf]
  %v123 = vld [vmem:[%s1 + $0x114] sm:$0xf]
  %v124 = vld [vmem:[%s1 + $0x118] sm:$0xf]
  %v125 = vld [vmem:[%s1 + $0x11c] sm:$0xf]
  %v126 = vld [vmem:[%s1 + $0x120] sm:$0xf]
  %v127 = vld [vmem:[%s1 + $0x124] sm:$0xf]
  %v128 = vld [vmem:[%s1 + $0x128] sm:$0xf]
  %v129 = vld [vmem:[%s1 + $0x12c] sm:$0xf]
  %v130 = vld [vmem:[%s1 + $0x130] sm:$0xf]
  %v131 = vld [vmem:[%s1 + $0x134] sm:$0xf]
  %v132 = vld [vmem:[%s1 + $0x138] sm:$0xf]
  %v133 = vld [vmem:[%s1 + $0x13c] sm:$0xf]
  %v134 = vld [vmem:[%s1 + $0x140] sm:$0xf]
  %v135 = vld [vmem:[%s1 + $0x144] sm:$0xf]
  %v136 = vld [vmem:[%s1 + $0x148] sm:$0xf]
  %v137 = vld [vmem:[%s1 + $0x14c] sm:$0xf]
  %v138 = vld [vmem:[%s1 + $0x150] sm:$0xf]
  %v139 = vld [vmem:[%s1 + $0x154] sm:$0xf]
  %v140 = vld [vmem:[%s1 + $0x158] sm:$0xf]
  %v141 = vld [vmem:[%s1 + $0x15c] sm:$0xf]
  %v142 = vld [vmem:[%s1 + $0x160] sm:$0xf]
  %v143 = vld [vmem:[%s1 + $0x164] sm:$0xf]
  %v144 = vld [vmem:[%s1 + $0x168] sm:$0xf]
  %v145 = vld [vmem:[%s1 + $0x16c] sm:$0xf]
  %v146 = vld [vmem:[%s1 + $0x170] sm:$0xf]
  %v147 = vld [vmem:[%s1 + $0x174] sm:$0xf]
  %v148 = vld [vmem:[%s1 + $0x178] sm:$0xf]
  %v149 = vld [vmem:[%s1 + $0x17c] sm:$0xf]
  %v150 = vld [vmem:[%s1 + $0x180] sm:$0xf]
  %v151 = vld [vmem:[%s1 + $0x184] sm:$0xf]
  %v152 = vld [vmem:[%s1 + $0x188] sm:$0xf]
  %v153 = vld [vmem:[%s1 + $0x18c] sm:$0xf]
  %v154 = vld [vmem:[%s1 + $0x190] sm:$0xf]
  %v155 = vld [vmem:[%s1 + $0x194] sm:$0xf]
  %v156 = vld [vmem:[%s1 + $0x198] sm:$0xf]
  %v157 = vld [vmem:[%s1 + $0x19c] sm:$0xf]
  %v158 = vld [vmem:[%s1 + $0x1a0] sm:$0xf]
  %v159 = vld [vmem:[%s1 + $0x1a4] sm:$0xf]
  %v160 = vld [vmem:[%s1 + $0x1a8] sm:$0xf]
  %v161 = vld [vmem:[%s1 + $0x1ac] sm:$0xf]
  %v194 = vunpack.c.l.b16 %v22
  %v195 = vunpack.c.h.b16 %v22
  %v196 = vunpack.c.l.b16 %v23
  %v197 = vunpack.c.h.b16 %v23
  %v198 = vunpack.c.l.b16 %v24
  %v199 = vunpack.c.h.b16 %v24
  %v200 = vunpack.c.l.b16 %v25
  %v201 = vunpack.c.l.b16 %v26
  %v202 = vunpack.c.h.b16 %v26
  %v203 = vunpack.c.l.b16 %v27
  %v204 = vunpack.c.h.b16 %v27
  %v205 = vunpack.c.l.b16 %v28
  %v206 = vunpack.c.h.b16 %v28
  %v207 = vunpack.c.l.b16 %v29
  %v208 = vunpack.c.l.b16 %v30
  %v209 = vunpack.c.h.b16 %v30
  %v210 = vunpack.c.l.b16 %v31
  %v211 = vunpack.c.h.b16 %v31
  %v212 = vunpack.c.l.b16 %v32
  %v213 = vunpack.c.h.b16 %v32
  %v214 = vunpack.c.l.b16 %v33
  %v215 = vunpack.c.l.b16 %v34
  %v216 = vunpack.c.h.b16 %v34
  %v217 = vunpack.c.l.b16 %v35
  %v218 = vunpack.c.h.b16 %v35
  %v219 = vunpack.c.l.b16 %v36
  %v220 = vunpack.c.h.b16 %v36
  %v221 = vunpack.c.l.b16 %v37
  %v222 = vunpack.c.l.b16 %v38
  %v223 = vunpack.c.h.b16 %v38
  %v224 = vunpack.c.l.b16 %v39
  %v225 = vunpack.c.h.b16 %v39
  %v226 = vunpack.c.l.b16 %v40
  %v227 = vunpack.c.h.b16 %v40
  %v228 = vunpack.c.l.b16 %v41
  %v229 = vunpack.c.l.b16 %v42
  %v230 = vunpack.c.h.b16 %v42
  %v231 = vunpack.c.l.b16 %v43
  %v232 = vunpack.c.h.b16 %v43
  %v233 = vunpack.c.l.b16 %v44
  %v234 = vunpack.c.h.b16 %v44
  %v235 = vunpack.c.l.b16 %v45
  %v236 = vunpack.c.l.b16 %v46
  %v237 = vunpack.c.h.b16 %v46
  %v238 = vunpack.c.l.b16 %v47
  %v239 = vunpack.c.h.b16 %v47
  %v240 = vunpack.c.l.b16 %v48
  %v241 = vunpack.c.h.b16 %v48
  %v242 = vunpack.c.l.b16 %v49
  %v243 = vunpack.c.l.b16 %v50
  %v244 = vunpack.c.h.b16 %v50
  %v245 = vunpack.c.l.b16 %v51
  %v246 = vunpack.c.h.b16 %v51
  %v247 = vunpack.c.l.b16 %v52
  %v248 = vunpack.c.h.b16 %v52
  %v249 = vunpack.c.l.b16 %v53
  %v250 = vpack.c.b16 %v201, %v194
  %v251 = vpack.c.b16 %v202, %v195
  %v252 = vpack.c.b16 %v203, %v196
  %v253 = vpack.c.b16 %v204, %v197
  %v254 = vpack.c.b16 %v205, %v198
  %v255 = vpack.c.b16 %v206, %v199
  %v256 = vpack.c.b16 %v207, %v200
  %v257 = vpack.c.b16 %v215, %v208
  %v258 = vpack.c.b16 %v216, %v209
  %v259 = vpack.c.b16 %v217, %v210
  %v260 = vpack.c.b16 %v218, %v211
  %v261 = vpack.c.b16 %v219, %v212
  %v262 = vpack.c.b16 %v220, %v213
  %v263 = vpack.c.b16 %v221, %v214
  %v264 = vpack.c.b16 %v229, %v222
  %v265 = vpack.c.b16 %v230, %v223
  %v266 = vpack.c.b16 %v231, %v224
  %v267 = vpack.c.b16 %v232, %v225
  %v268 = vpack.c.b16 %v233, %v226
  %v269 = vpack.c.b16 %v234, %v227
  %v270 = vpack.c.b16 %v235, %v228
  %v271 = vpack.c.b16 %v243, %v236
  %v272 = vpack.c.b16 %v244, %v237
  %v273 = vpack.c.b16 %v245, %v238
  %v274 = vpack.c.b16 %v246, %v239
  %v275 = vpack.c.b16 %v247, %v240
  %v276 = vpack.c.b16 %v248, %v241
  %v277 = vpack.c.b16 %v249, %v242
  %v410 = vunpack.c.l.b16 %v54
  %v411 = vunpack.c.l.b16 %v55
  %v412 = vunpack.c.l.b16 %v56
  %v413 = vunpack.c.l.b16 %v57
  %v414 = vunpack.c.l.b16 %v58
  %v415 = vunpack.c.l.b16 %v59
  %v416 = vunpack.c.l.b16 %v60
  %v417 = vunpack.c.l.b16 %v61
  %v418 = vunpack.c.l.b16 %v62
  %v419 = vunpack.c.l.b16 %v63
  %v420 = vunpack.c.l.b16 %v64
  %v421 = vunpack.c.l.b16 %v65
  %v422 = vunpack.c.l.b16 %v66
  %v423 = vunpack.c.l.b16 %v67
  %v424 = vunpack.c.l.b16 %v68
  %v425 = vunpack.c.l.b16 %v69
  %v426 = vunpack.c.l.b16 %v70
  %v427 = vunpack.c.l.b16 %v71
  %v428 = vunpack.c.l.b16 %v72
  %v429 = vunpack.c.l.b16 %v73
  %v430 = vunpack.c.l.b16 %v74
  %v431 = vunpack.c.l.b16 %v75
  %v432 = vunpack.c.l.b16 %v76
  %v433 = vunpack.c.l.b16 %v77
  %v434 = vunpack.c.l.b16 %v78
  %v435 = vunpack.c.l.b16 %v79
  %v436 = vunpack.c.l.b16 %v80
  %v437 = vunpack.c.l.b16 %v81
  %v438 = vunpack.c.l.b16 %v82
  %v439 = vunpack.c.l.b16 %v83
  %v440 = vunpack.c.l.b16 %v84
  %v441 = vunpack.c.l.b16 %v85
  %v442 = vunpack.c.l.b16 %v86
  %v443 = vunpack.c.l.b16 %v87
  %v444 = vunpack.c.l.b16 %v88
  %v445 = vunpack.c.l.b16 %v89
  %v446 = vunpack.c.l.b16 %v90
  %v447 = vunpack.c.l.b16 %v91
  %v448 = vunpack.c.l.b16 %v92
  %v449 = vunpack.c.l.b16 %v93
  %v450 = vunpack.c.l.b16 %v94
  %v451 = vunpack.c.l.b16 %v95
  %v452 = vunpack.c.l.b16 %v96
  %v453 = vunpack.c.l.b16 %v97
  %v454 = vunpack.c.l.b16 %v98
  %v455 = vunpack.c.l.b16 %v99
  %v456 = vunpack.c.l.b16 %v100
  %v457 = vunpack.c.l.b16 %v101
  %v458 = vunpack.c.l.b16 %v102
  %v459 = vunpack.c.l.b16 %v103
  %v460 = vunpack.c.l.b16 %v104
  %v461 = vunpack.c.l.b16 %v105
  %v462 = vunpack.c.l.b16 %v106
  %v463 = vunpack.c.l.b16 %v107
  %v464 = vunpack.c.l.b16 %v108
  %v465 = vunpack.c.l.b16 %v109
  %v466 = vunpack.c.l.b16 %v110
  %v467 = vunpack.c.l.b16 %v111
  %v468 = vunpack.c.l.b16 %v112
  %v469 = vunpack.c.l.b16 %v113
  %v470 = vunpack.c.l.b16 %v114
  %v471 = vunpack.c.l.b16 %v115
  %v472 = vunpack.c.l.b16 %v116
  %v473 = vunpack.c.l.b16 %v117
  %v474 = vunpack.c.l.b16 %v118
  %v475 = vunpack.c.l.b16 %v119
  %v476 = vunpack.c.l.b16 %v120
  %v477 = vunpack.c.l.b16 %v121
  %v478 = vunpack.c.l.b16 %v122
  %v479 = vunpack.c.l.b16 %v123
  %v480 = vunpack.c.l.b16 %v124
  %v481 = vunpack.c.l.b16 %v125
  %v482 = vunpack.c.l.b16 %v126
  %v483 = vunpack.c.l.b16 %v127
  %v484 = vunpack.c.l.b16 %v128
  %v485 = vunpack.c.l.b16 %v129
  %v486 = vunpack.c.l.b16 %v130
  %v487 = vunpack.c.l.b16 %v131
  %v488 = vunpack.c.l.b16 %v132
  %v489 = vunpack.c.l.b16 %v133
  %v490 = vunpack.c.l.b16 %v134
  %v491 = vunpack.c.l.b16 %v135
  %v492 = vunpack.c.l.b16 %v136
  %v493 = vunpack.c.l.b16 %v137
  %v494 = vunpack.c.l.b16 %v138
  %v495 = vunpack.c.l.b16 %v139
  %v496 = vunpack.c.l.b16 %v140
  %v497 = vunpack.c.l.b16 %v141
  %v498 = vunpack.c.l.b16 %v142
  %v499 = vunpack.c.l.b16 %v143
  %v500 = vunpack.c.l.b16 %v144
  %v501 = vunpack.c.l.b16 %v145
  %v502 = vunpack.c.l.b16 %v146
  %v503 = vunpack.c.l.b16 %v147
  %v504 = vunpack.c.l.b16 %v148
  %v505 = vunpack.c.l.b16 %v149
  %v506 = vunpack.c.l.b16 %v150
  %v507 = vunpack.c.l.b16 %v151
  %v508 = vunpack.c.l.b16 %v152
  %v509 = vunpack.c.l.b16 %v153
  %v510 = vunpack.c.l.b16 %v154
  %v511 = vunpack.c.l.b16 %v155
  %v512 = vunpack.c.l.b16 %v156
  %v513 = vunpack.c.l.b16 %v157
  %v514 = vunpack.c.l.b16 %v158
  %v515 = vunpack.c.l.b16 %v159
  %v516 = vunpack.c.l.b16 %v160
  %v517 = vunpack.c.l.b16 %v161
  %v518 = vpack.c.b16 %v411, %v410
  %v519 = vpack.c.b16 %v413, %v412
  %v520 = vpack.c.b16 %v415, %v414
  %v521 = vpack.c.b16 %v417, %v416
  %v522 = vpack.c.b16 %v419, %v418
  %v523 = vpack.c.b16 %v421, %v420
  %v524 = vpack.c.b16 %v423, %v422
  %v525 = vpack.c.b16 %v425, %v424
  %v526 = vpack.c.b16 %v427, %v426
  %v527 = vpack.c.b16 %v429, %v428
  %v528 = vpack.c.b16 %v431, %v430
  %v529 = vpack.c.b16 %v433, %v432
  %v530 = vpack.c.b16 %v435, %v434
  %v531 = vpack.c.b16 %v437, %v436
  %v532 = vpack.c.b16 %v439, %v438
  %v533 = vpack.c.b16 %v441, %v440
  %v534 = vpack.c.b16 %v443, %v442
  %v535 = vpack.c.b16 %v445, %v444
  %v536 = vpack.c.b16 %v447, %v446
  %v537 = vpack.c.b16 %v449, %v448
  %v538 = vpack.c.b16 %v451, %v450
  %v539 = vpack.c.b16 %v453, %v452
  %v540 = vpack.c.b16 %v455, %v454
  %v541 = vpack.c.b16 %v457, %v456
  %v542 = vpack.c.b16 %v459, %v458
  %v543 = vpack.c.b16 %v461, %v460
  %v544 = vpack.c.b16 %v463, %v462
  %v545 = vpack.c.b16 %v465, %v464
  %v546 = vpack.c.b16 %v467, %v466
  %v547 = vpack.c.b16 %v469, %v468
  %v548 = vpack.c.b16 %v471, %v470
  %v549 = vpack.c.b16 %v473, %v472
  %v550 = vpack.c.b16 %v475, %v474
  %v551 = vpack.c.b16 %v477, %v476
  %v552 = vpack.c.b16 %v479, %v478
  %v553 = vpack.c.b16 %v481, %v480
  %v554 = vpack.c.b16 %v483, %v482
  %v555 = vpack.c.b16 %v485, %v484
  %v556 = vpack.c.b16 %v487, %v486
  %v557 = vpack.c.b16 %v489, %v488
  %v558 = vpack.c.b16 %v491, %v490
  %v559 = vpack.c.b16 %v493, %v492
  %v560 = vpack.c.b16 %v495, %v494
  %v561 = vpack.c.b16 %v497, %v496
  %v562 = vpack.c.b16 %v499, %v498
  %v563 = vpack.c.b16 %v501, %v500
  %v564 = vpack.c.b16 %v503, %v502
  %v565 = vpack.c.b16 %v505, %v504
  %v566 = vpack.c.b16 %v507, %v506
  %v567 = vpack.c.b16 %v509, %v508
  %v568 = vpack.c.b16 %v511, %v510
  %v569 = vpack.c.b16 %v513, %v512
  %v570 = vpack.c.b16 %v515, %v514
  %v571 = vpack.c.b16 %v517, %v516
  %vm626 = vcmask 785408
  %v628 = vsel %vm626, %v256, 0
  %v631 = vsel %vm626, %v263, 0
  %v634 = vsel %vm626, %v270, 0
  %v637 = vsel %vm626, %v277, 0
  %639 = vmatprep.subr.bf16.mxu0 0
  %640 = vmatpush1.bf16.msra.mxu0 %v518
  %641 = vmatprep.subr.bf16.mxu0 0
  %642 = vmatpush1.bf16.msra.mxu0 %v519
  %643 = vmatprep.subr.bf16.mxu0 0
  %644 = vmatpush1.bf16.msra.mxu0 %v520
  %645 = vmatprep.subr.bf16.mxu0 0
  %646 = vmatpush1.bf16.msra.mxu0 %v521
  %647 = vmatprep.subr.bf16.mxu0 0
  %648 = vmatpush1.bf16.msra.mxu0 %v522
  %649 = vmatprep.subr.bf16.mxu0 0
  %650 = vmatpush1.bf16.msra.mxu0 %v523
  %651 = vmatprep.subr.bf16.mxu0 0
  %652 = vmatpush1.bf16.msra.mxu0 %v524
  %653 = vmatprep.subr.bf16.mxu0 0
  %654 = vmatpush1.bf16.msra.mxu0 %v525
  %655 = vmatprep.subr.bf16.mxu0 0
  %656 = vmatpush1.bf16.msra.mxu0 %v526
  %657 = vmatprep.subr.bf16.mxu0 0
  %658 = vmatpush1.bf16.msra.mxu0 %v527
  %659 = vmatprep.subr.bf16.mxu0 0
  %660 = vmatpush1.bf16.msra.mxu0 %v528
  %661 = vmatprep.subr.bf16.mxu0 0
  %662 = vmatpush1.bf16.msra.mxu0 %v529
  %663 = vmatprep.subr.bf16.mxu0 0
  %664 = vmatpush1.bf16.msra.mxu0 %v530
  %665 = vmatprep.subr.bf16.mxu0 0
  %666 = vmatpush1.bf16.msra.mxu0 %v531
  %667 = vmatprep.subr.bf16.mxu0 0
  %668 = vmatpush1.bf16.msra.mxu0 %v532
  %669 = vmatprep.subr.bf16.mxu0 0
  %670 = vmatpush1.bf16.msra.mxu0 %v533
  %671 = vmatprep.mubr.bf16.mxu0 %v251
  %672 = vmatmul.mubr.bf16.gmra.mrb[0].mxu0 %v250
  %v673 = vpop.f32.mrb[0].mxu0
  %v674 = vadd.f32 0.0, %v673
  %v675 = vpop.f32.mrb[0].mxu0
  %v676 = vpop.f32.mrb[0].mxu0
  %v677 = vadd.f32 0.0, %v676
  %v678 = vpop.f32.mrb[0].mxu0
  %679 = vmatprep.mubr.bf16.mxu0 %v258
  %680 = vmatmul.mubr.bf16.gmra.mrb[0].mxu0 %v257
  %v681 = vpop.f32.mrb[0].mxu0
  %v682 = vadd.f32 0.0, %v681
  %v683 = vpop.f32.mrb[0].mxu0
  %v684 = vpop.f32.mrb[0].mxu0
  %v685 = vadd.f32 0.0, %v684
  %v686 = vpop.f32.mrb[0].mxu0
  %687 = vmatprep.mubr.bf16.mxu0 %v265
  %688 = vmatmul.mubr.bf16.gmra.mrb[0].mxu0 %v264
  %v689 = vpop.f32.mrb[0].mxu0
  %v690 = vadd.f32 0.0, %v689
  %v691 = vpop.f32.mrb[0].mxu0
  %v692 = vpop.f32.mrb[0].mxu0
  %v693 = vadd.f32 0.0, %v692
  %v694 = vpop.f32.mrb[0].mxu0
  %695 = vmatprep.mubr.bf16.mxu0 %v272
  %696 = vmatmul.mubr.bf16.gmra.mrb[0].mxu0 %v271
  %v697 = vpop.f32.mrb[0].mxu0
  %v698 = vadd.f32 0.0, %v697
  %v699 = vpop.f32.mrb[0].mxu0
  %v700 = vpop.f32.mrb[0].mxu0
  %v701 = vadd.f32 0.0, %v700
  %v702 = vpop.f32.mrb[0].mxu0
  %703 = vdwg.mxu0
  %704 = vmatprep.subr.bf16.mxu0 0
  %705 = vmatpush1.bf16.msra.mxu0 %v534
  %706 = vmatprep.subr.bf16.mxu0 0
  %707 = vmatpush1.bf16.msra.mxu0 %v535
  %708 = vmatprep.subr.bf16.mxu0 0
  %709 = vmatpush1.bf16.msra.mxu0 %v536
  %710 = vmatprep.subr.bf16.mxu0 0
  %711 = vmatpush1.bf16.msra.mxu0 %v537
  %712 = vmatprep.subr.bf16.mxu0 0
  %713 = vmatpush1.bf16.msra.mxu0 %v538
  %714 = vmatprep.subr.bf16.mxu0 0
  %715 = vmatpush1.bf16.msra.mxu0 %v539
  %716 = vmatprep.subr.bf16.mxu0 0
  %717 = vmatpush1.bf16.msra.mxu0 %v540
  %718 = vmatprep.subr.bf16.mxu0 0
  %719 = vmatpush1.bf16.msra.mxu0 %v541
  %720 = vmatprep.subr.bf16.mxu0 0
  %721 = vmatpush1.bf16.msra.mxu0 %v542
  %722 = vmatprep.subr.bf16.mxu0 0
  %723 = vmatpush1.bf16.msra.mxu0 %v543
  %724 = vmatprep.subr.bf16.mxu0 0
  %725 = vmatpush1.bf16.msra.mxu0 %v544
  %726 = vmatprep.subr.bf16.mxu0 0
  %727 = vmatpush1.bf16.msra.mxu0 %v545
  %728 = vmatprep.subr.bf16.mxu0 0
  %729 = vmatpush1.bf16.msra.mxu0 %v546
  %730 = vmatprep.subr.bf16.mxu0 0
  %731 = vmatpush1.bf16.msra.mxu0 %v547
  %732 = vmatprep.subr.bf16.mxu0 0
  %733 = vmatpush1.bf16.msra.mxu0 %v548
  %734 = vmatprep.subr.bf16.mxu0 0
  %735 = vmatpush1.bf16.msra.mxu0 %v549
  %736 = vmatprep.mubr.bf16.mxu0 %v253
  %737 = vmatmul.mubr.bf16.gmra.mrb[0].mxu0 %v252
  %v738 = vpop.f32.mrb[0].mxu0
  %v739 = vadd.f32 %v674, %v738
  %v740 = vpop.f32.mrb[0].mxu0
  %v741 = vpop.f32.mrb[0].mxu0
  %v742 = vadd.f32 %v677, %v741
  %v743 = vpop.f32.mrb[0].mxu0
  %744 = vmatprep.mubr.bf16.mxu0 %v260
  %745 = vmatmul.mubr.bf16.gmra.mrb[0].mxu0 %v259
  %v746 = vpop.f32.mrb[0].mxu0
  %v747 = vadd.f32 %v682, %v746
  %v748 = vpop.f32.mrb[0].mxu0
  %v749 = vpop.f32.mrb[0].mxu0
  %v750 = vadd.f32 %v685, %v749
  %v751 = vpop.f32.mrb[0].mxu0
  %752 = vmatprep.mubr.bf16.mxu0 %v267
  %753 = vmatmul.mubr.bf16.gmra.mrb[0].mxu0 %v266
  %v754 = vpop.f32.mrb[0].mxu0
  %v755 = vadd.f32 %v690, %v754
  %v756 = vpop.f32.mrb[0].mxu0
  %v757 = vpop.f32.mrb[0].mxu0
  %v758 = vadd.f32 %v693, %v757
  %v759 = vpop.f32.mrb[0].mxu0
  %760 = vmatprep.mubr.bf16.mxu0 %v274
  %761 = vmatmul.mubr.bf16.gmra.mrb[0].mxu0 %v273
  %v762 = vpop.f32.mrb[0].mxu0
  %v763 = vadd.f32 %v698, %v762
  %v764 = vpop.f32.mrb[0].mxu0
  %v765 = vpop.f32.mrb[0].mxu0
  %v766 = vadd.f32 %v701, %v765
  %v767 = vpop.f32.mrb[0].mxu0
  %768 = vdwg.mxu0
  %769 = vmatprep.subr.bf16.mxu0 0
  %770 = vmatpush1.bf16.msra.mxu0 %v550
  %771 = vmatprep.subr.bf16.mxu0 0
  %772 = vmatpush1.bf16.msra.mxu0 %v551
  %773 = vmatprep.subr.bf16.mxu0 0
  %774 = vmatpush1.bf16.msra.mxu0 %v552
  %775 = vmatprep.subr.bf16.mxu0 0
  %776 = vmatpush1.bf16.msra.mxu0 %v553
  %777 = vmatprep.subr.bf16.mxu0 0
  %778 = vmatpush1.bf16.msra.mxu0 %v554
  %779 = vmatprep.subr.bf16.mxu0 0
  %780 = vmatpush1.bf16.msra.mxu0 %v555
  %781 = vmatprep.subr.bf16.mxu0 0
  %782 = vmatpush1.bf16.msra.mxu0 %v556
  %783 = vmatprep.subr.bf16.mxu0 0
  %784 = vmatpush1.bf16.msra.mxu0 %v557
  %785 = vmatprep.subr.bf16.mxu0 0
  %786 = vmatpush1.bf16.msra.mxu0 %v558
  %787 = vmatprep.subr.bf16.mxu0 0
  %788 = vmatpush1.bf16.msra.mxu0 %v559
  %789 = vmatprep.subr.bf16.mxu0 0
  %790 = vmatpush1.bf16.msra.mxu0 %v560
  %791 = vmatprep.subr.bf16.mxu0 0
  %792 = vmatpush1.bf16.msra.mxu0 %v561
  %793 = vmatprep.subr.bf16.mxu0 0
  %794 = vmatpush1.bf16.msra.mxu0 %v562
  %795 = vmatprep.subr.bf16.mxu0 0
  %796 = vmatpush1.bf16.msra.mxu0 %v563
  %797 = vmatprep.subr.bf16.mxu0 0
  %798 = vmatpush1.bf16.msra.mxu0 %v564
  %799 = vmatprep.subr.bf16.mxu0 0
  %800 = vmatpush1.bf16.msra.mxu0 %v565
  %801 = vmatprep.mubr.bf16.mxu0 %v255
  %802 = vmatmul.mubr.bf16.gmra.mrb[0].mxu0 %v254
  %v803 = vpop.f32.mrb[0].mxu0
  %v804 = vadd.f32 %v739, %v803
  %v805 = vpop.f32.mrb[0].mxu0
  %v806 = vpop.f32.mrb[0].mxu0
  %v807 = vadd.f32 %v742, %v806
  %v808 = vpop.f32.mrb[0].mxu0
  %809 = vmatprep.mubr.bf16.mxu0 %v262
  %810 = vmatmul.mubr.bf16.gmra.mrb[0].mxu0 %v261
  %v811 = vpop.f32.mrb[0].mxu0
  %v812 = vadd.f32 %v747, %v811
  %v813 = vpop.f32.mrb[0].mxu0
  %v814 = vpop.f32.mrb[0].mxu0
  %v815 = vadd.f32 %v750, %v814
  %v816 = vpop.f32.mrb[0].mxu0
  %817 = vmatprep.mubr.bf16.mxu0 %v269
  %818 = vmatmul.mubr.bf16.gmra.mrb[0].mxu0 %v268
  %v819 = vpop.f32.mrb[0].mxu0
  %v820 = vadd.f32 %v755, %v819
  %v821 = vpop.f32.mrb[0].mxu0
  %v822 = vpop.f32.mrb[0].mxu0
  %v823 = vadd.f32 %v758, %v822
  %v824 = vpop.f32.mrb[0].mxu0
  %825 = vmatprep.mubr.bf16.mxu0 %v276
  %826 = vmatmul.mubr.bf16.gmra.mrb[0].mxu0 %v275
  %v827 = vpop.f32.mrb[0].mxu0
  %v828 = vadd.f32 %v763, %v827
  %v829 = vpop.f32.mrb[0].mxu0
  %v830 = vpop.f32.mrb[0].mxu0
  %v831 = vadd.f32 %v766, %v830
  %v832 = vpop.f32.mrb[0].mxu0
  %833 = vdwg.mxu0
  %834 = vmatprep.subr.bf16.mxu0 0
  %835 = vmatpush1.bf16.msra.mxu0 %v566
  %836 = vmatprep.subr.bf16.mxu0 0
  %837 = vmatpush1.bf16.msra.mxu0 %v567
  %838 = vmatprep.subr.bf16.mxu0 0
  %839 = vmatpush1.bf16.msra.mxu0 %v568
  %840 = vmatprep.subr.bf16.mxu0 0
  %841 = vmatpush1.bf16.msra.mxu0 %v569
  %842 = vmatprep.subr.bf16.mxu0 0
  %843 = vmatpush1.bf16.msra.mxu0 %v570
  %844 = vmatprep.subr.bf16.mxu0 0
  %845 = vmatpush1.bf16.msra.mxu0 %v571
  %846 = vmatprep.subr.bf16.mxu0 0
  %847 = vmatpush1.bf16.msra.mxu0 0
  %848 = vmatprep.subr.bf16.mxu0 0
  %849 = vmatpush1.bf16.msra.mxu0 0
  %850 = vmatprep.subr.bf16.mxu0 0
  %851 = vmatpush1.bf16.msra.mxu0 0
  %852 = vmatprep.subr.bf16.mxu0 0
  %853 = vmatpush1.bf16.msra.mxu0 0
  %854 = vmatprep.subr.bf16.mxu0 0
  %855 = vmatpush1.bf16.msra.mxu0 0
  %856 = vmatprep.subr.bf16.mxu0 0
  %857 = vmatpush1.bf16.msra.mxu0 0
  %858 = vmatprep.subr.bf16.mxu0 0
  %859 = vmatpush1.bf16.msra.mxu0 0
  %860 = vmatprep.subr.bf16.mxu0 0
  %861 = vmatpush1.bf16.msra.mxu0 0
  %862 = vmatprep.subr.bf16.mxu0 0
  %863 = vmatpush1.bf16.msra.mxu0 0
  %864 = vmatprep.subr.bf16.mxu0 0
  %865 = vmatpush1.bf16.msra.mxu0 0
  %866 = vmatprep.mubr.bf16.mxu0 0
  %867 = vmatmul.mubr.bf16.gmra.mrb[0].mxu0 %v628
  %v868 = vpop.f32.mrb[0].mxu0
  %v869 = vadd.f32 %v804, %v868
  %v870 = vpop.f32.mrb[0].mxu0
  %v871 = vpop.f32.mrb[0].mxu0
  %v872 = vadd.f32 %v807, %v871
  %v873 = vpop.f32.mrb[0].mxu0
  %874 = vmatprep.mubr.bf16.mxu0 0
  %875 = vmatmul.mubr.bf16.gmra.mrb[0].mxu0 %v631
  %v876 = vpop.f32.mrb[0].mxu0
  %v877 = vadd.f32 %v812, %v876
  %v878 = vpop.f32.mrb[0].mxu0
  %v879 = vpop.f32.mrb[0].mxu0
  %v880 = vadd.f32 %v815, %v879
  %v881 = vpop.f32.mrb[0].mxu0
  %882 = vmatprep.mubr.bf16.mxu0 0
  %883 = vmatmul.mubr.bf16.gmra.mrb[0].mxu0 %v634
  %v884 = vpop.f32.mrb[0].mxu0
  %v885 = vadd.f32 %v820, %v884
  %v886 = vpop.f32.mrb[0].mxu0
  %v887 = vpop.f32.mrb[0].mxu0
  %v888 = vadd.f32 %v823, %v887
  %v889 = vpop.f32.mrb[0].mxu0
  %890 = vmatprep.mubr.bf16.mxu0 0
  %891 = vmatmul.mubr.bf16.gmra.mrb[0].mxu0 %v637
  %v892 = vpop.f32.mrb[0].mxu0
  %v893 = vadd.f32 %v828, %v892
  %v894 = vpop.f32.mrb[0].mxu0
  %v895 = vpop.f32.mrb[0].mxu0
  %v896 = vadd.f32 %v831, %v895
  %v897 = vpop.f32.mrb[0].mxu0
  %898 = vdwg.mxu0
  %v899 = vpack.c.bf16 %v872, %v869
  %v900 = vpack.c.bf16 %v880, %v877
  %v901 = vpack.c.bf16 %v888, %v885
  %v902 = vpack.c.bf16 %v896, %v893
  %v907 = vunpack.c.l.b16 %v899
  %v908 = vunpack.c.h.b16 %v899
  %v909 = vunpack.c.l.b16 %v900
  %v910 = vunpack.c.h.b16 %v900
  %v911 = vunpack.c.l.b16 %v901
  %v912 = vunpack.c.h.b16 %v901
  %v913 = vunpack.c.l.b16 %v902
  %v914 = vunpack.c.h.b16 %v902
  %v915 = vpack.c.b16 %v907, %v907
  %v916 = vpack.c.b16 %v908, %v908
  %v917 = vpack.c.b16 %v909, %v909
  %v918 = vpack.c.b16 %v910, %v910
  %v919 = vpack.c.b16 %v911, %v911
  %v920 = vpack.c.b16 %v912, %v912
  %v921 = vpack.c.b16 %v913, %v913
  %v922 = vpack.c.b16 %v914, %v914
  %vm931 = vcmask 125952
  %932 = vst.msk [vmem:[%s2] sm:$0xf] %vm931, %v915
  %933 = vst.msk [vmem:[%s2 + $0x4] sm:$0xf] %vm931, %v916
  %934 = vst.msk [vmem:[%s2 + $0x8] sm:$0xf] %vm931, %v917
  %935 = vst.msk [vmem:[%s2 + $0xc] sm:$0xf] %vm931, %v918
  %936 = vst.msk [vmem:[%s2 + $0x10] sm:$0xf] %vm931, %v919
  %937 = vst.msk [vmem:[%s2 + $0x14] sm:$0xf] %vm931, %v920
  %938 = vst.msk [vmem:[%s2 + $0x18] sm:$0xf] %vm931, %v921
  %939 = vst.msk [vmem:[%s2 + $0x1c] sm:$0xf] %vm931, %v922
  %v940 = vld [vmem:[%s3] sm:$0x1]
  %vm941 = vcmask 130048
  %v942 = vsel %vm941, %v869, 0.0
  %v943 = vsel %vm941, %v872, 0.0
  %v944 = vadd.f32 %v942, %v943
  %v945 = vsel %vm941, %v877, 0.0
  %v946 = vadd.f32 %v944, %v945
  %v947 = vsel %vm941, %v880, 0.0
  %v948 = vadd.f32 %v946, %v947
  %v949 = vsel %vm941, %v885, 0.0
  %v950 = vadd.f32 %v948, %v949
  %v951 = vsel %vm941, %v888, 0.0
  %v952 = vadd.f32 %v950, %v951
  %v953 = vsel %vm941, %v893, 0.0
  %v954 = vadd.f32 %v952, %v953
  %v955 = vsel %vm941, %v896, 0.0
  %v956 = vadd.f32 %v954, %v955
  %v957 = vrot.slane %v956, 4
  %v958 = vadd.f32 %v956, %v957
  %v959 = vrot.slane %v958, 2
  %v960 = vadd.f32 %v958, %v959
  %v961 = vrot.slane %v960, 1
  %v962 = vadd.f32 %v960, %v961
  %v963 = vadd.f32 %v940, %v962
  %vm964 = vcmask 122880
  %965 = vst.msk [vmem:[%s3] sm:$0x1] %vm964, %v963
  %v966 = vld [vmem:[%s4] sm:$0x1]
  %v967 = vmul.f32 %v869, %v869
  %v968 = vmul.f32 %v872, %v872
  %v969 = vmul.f32 %v877, %v877
  %v970 = vmul.f32 %v880, %v880
  %v971 = vmul.f32 %v885, %v885
  %v972 = vmul.f32 %v888, %v888
  %v973 = vmul.f32 %v893, %v893
  %v974 = vmul.f32 %v896, %v896
  %v975 = vsel %vm941, %v967, 0.0
  %v976 = vsel %vm941, %v968, 0.0
  %v977 = vadd.f32 %v975, %v976
  %v978 = vsel %vm941, %v969, 0.0
  %v979 = vadd.f32 %v977, %v978
  %v980 = vsel %vm941, %v970, 0.0
  %v981 = vadd.f32 %v979, %v980
  %v982 = vsel %vm941, %v971, 0.0
  %v983 = vadd.f32 %v981, %v982
  %v984 = vsel %vm941, %v972, 0.0
  %v985 = vadd.f32 %v983, %v984
  %v986 = vsel %vm941, %v973, 0.0
  %v987 = vadd.f32 %v985, %v986
  %v988 = vsel %vm941, %v974, 0.0
  %v989 = vadd.f32 %v987, %v988
  %v990 = vrot.slane %v989, 4
  %v991 = vadd.f32 %v989, %v990
  %v992 = vrot.slane %v991, 2
  %v993 = vadd.f32 %v991, %v992
  %v994 = vrot.slane %v993, 1
  %v995 = vadd.f32 %v993, %v994
  %v996 = vadd.f32 %v966, %v995
  %997 = vst.msk [vmem:[%s4] sm:$0x1] %vm964, %v996
  // Predicated region
  $region14: #{decoder_forward.16} parent=0 // pred_check
    _
  $region15: #{decoder_forward.16} parent=0 // pred_check_branch
    %999 = sbr.rel (0) target = $region17
  $region16: #{decoder_forward.16} parent=0 // pred_region
    _
  $region17: #{decoder_forward.16} parent=0 // pred_fallthru
    _
  // Predicated region
  $region18: #{decoder_forward.16} parent=0 // pred_check
    _
  $region19: #{decoder_forward.16} parent=0 // pred_check_branch
    %1001 = sbr.rel (0) target = $region21
  $region20: #{decoder_forward.16} parent=0 // pred_region
    _
  $region21: #{decoder_forward.16} parent=0 // pred_fallthru
    _
  // Predicated region
  $region22: #{decoder_forward.16} parent=0 // pred_check
    _
  $region23: #{decoder_forward.16} parent=0 // pred_check_branch
    %1003 = sbr.rel (0) target = $region25
  $region24: #{decoder_forward.16} parent=0 // pred_region
    _
  $region25: #{decoder_forward.16} parent=0 // pred_fallthru
    _
  // Predicated region
  $region26: #{decoder_forward.16} parent=0 // pred_check
    _
  $region27: #{decoder_forward.16} parent=0 // pred_check_branch
    %1005 = sbr.rel (0) target = $region29
  $region28: #{decoder_forward.16} parent=0 // pred_region
    _
  $region29: #{decoder_forward.16} parent=0 // pred_fallthru
    _
  // Predicated region
  $region30: #{decoder_forward.16} parent=0 // pred_check
    _
  $region31: #{decoder_forward.16} parent=0 // pred_check_branch
    %1007 = sbr.rel (0) target = $region33
  $region32: #{decoder_forward.16} parent=0 // pred_region
    _
  $region33: #{decoder_forward.16} parent=0 // pred_fallthru
    _
  // Predicated region
  $region34: #{decoder_forward.16} parent=0 // pred_check
    _
  $region35: #{decoder_forward.16} parent=0 // pred_check_branch
    %1009 = sbr.rel (0) target = $region37
  $region36: #{decoder_forward.16} parent=0 // pred_region
    _
  $region37: #{decoder_forward.16} parent=0 // pred_fallthru
    _

// kernel: decoder_forward.17
$region0: #{decoder_forward.17}
  #allocation0 [shape = 'u32[]', space=smem, size = 0x4, offset = 0x4, fixed_abs, tag = 'smem constant byte address 0x4 - core index']
  #allocation1 [shape = 'u32[144,128]{1,0:T(1,128)}', space=vmem, size = 0x12000, scoped, tag = 'internal scratch']
  %s0 = inlined_call_operand.vmem [shape: bf16[16,64], index: 0, kind: input, shape index: {}]
  %s1 = inlined_call_operand.vmem [shape: f32[1,64], index: 1, kind: input, shape index: {}]
  %s2 = inlined_call_operand.vmem [shape: f32[1,64], index: 2, kind: input, shape index: {}]
  %s3 = inlined_call_operand.vmem [shape: bf16[16,64], index: 3, kind: output, shape index: {}]
  %s4 = sld [smem:[#allocation0]]
  $region22: #{decoder_forward.17} parent=0
    _
  %s6 = ssub.s32 1, %s4
  %s7 = scalar_select 0, %s6, %s4
  // Predicated region
  $region2: #{decoder_forward.17} parent=0 // pred_check
    _
  $region3: #{decoder_forward.17} parent=0 // pred_check_branch
    %9 = sbr.rel (0) target = $region5
  $region4: #{decoder_forward.17} parent=0 // pred_region
    _
  $region5: #{decoder_forward.17} parent=0 // pred_fallthru
    _
  // Predicated region
  $region6: #{decoder_forward.17} parent=0 // pred_check
    _
  $region7: #{decoder_forward.17} parent=0 // pred_check_branch
    %11 = sbr.rel (0) target = $region9
  $region8: #{decoder_forward.17} parent=0 // pred_region
    _
  $region9: #{decoder_forward.17} parent=0 // pred_fallthru
    _
  // Predicated region
  $region10: #{decoder_forward.17} parent=0 // pred_check
    _
  $region11: #{decoder_forward.17} parent=0 // pred_check_branch
    %13 = sbr.rel (0) target = $region13
  $region12: #{decoder_forward.17} parent=0 // pred_region
    _
  $region13: #{decoder_forward.17} parent=0 // pred_fallthru
    _
  %v14 = vld [vmem:[%s0] sm:$0xf]
  %v15 = vld [vmem:[%s0 + $0x4] sm:$0xf]
  %v16 = vld [vmem:[%s1] sm:$0x1]
  %v17 = vunpack.c.l.bf16 %v14
  %v18 = vunpack.c.l.bf16 %v15
  %v20 = vlaneseq
  %v21 = vshrl.u32 %v20, 7
  %v22 = vsub.s32 0, %v21
  %v23 = vrot.slane %v16, %v22
  %v25 = vmul.f32 %v17, %v23
  %v26 = vmul.f32 %v18, %v23
  %v27 = vld [vmem:[%s2] sm:$0x1]
  %v29 = vlaneseq
  %v30 = vshrl.u32 %v29, 7
  %v31 = vsub.s32 0, %v30
  %v32 = vrot.slane %v27, %v31
  %v34 = vadd.f32 %v25, %v32
  %v35 = vadd.f32 %v26, %v32
  %v36 = vmax.f32 %v34, 0.0
  %v37 = vmax.f32 %v35, 0.0
  %v38 = vpack.c.bf16 %v37, %v36
  %v40 = vunpack.c.l.b16 %v38
  %v41 = vunpack.c.h.b16 %v38
  %v42 = vpack.c.b16 %v40, %v40
  %v43 = vpack.c.b16 %v41, %v41
  %vm46 = vcmask 519168
  %47 = vst.msk [vmem:[%s3] sm:$0xf] %vm46, %v42
  %48 = vst.msk [vmem:[%s3 + $0x4] sm:$0xf] %vm46, %v43
  // Predicated region
  $region14: #{decoder_forward.17} parent=0 // pred_check
    _
  $region15: #{decoder_forward.17} parent=0 // pred_check_branch
    %50 = sbr.rel (0) target = $region17
  $region16: #{decoder_forward.17} parent=0 // pred_region
    _
  $region17: #{decoder_forward.17} parent=0 // pred_fallthru
    _
  // Predicated region
  $region18: #{decoder_forward.17} parent=0 // pred_check
    _
  $region19: #{decoder_forward.17} parent=0 // pred_check_branch
    %52 = sbr.rel (0) target = $region21
  $region20: #{decoder_forward.17} parent=0 // pred_region
    _
  $region21: #{decoder_forward.17} parent=0 // pred_fallthru
    _

// kernel: decoder_forward.19
$region0: #{decoder_forward.19}
  #allocation0 [shape = 'u32[]', space=smem, size = 0x4, offset = 0x4, fixed_abs, tag = 'smem constant byte address 0x4 - core index']
  #allocation1 [shape = 'u32[144,128]{1,0:T(1,128)}', space=vmem, size = 0x12000, scoped, tag = 'internal scratch']
  %s0 = inlined_call_operand.vmem [shape: bf16[16,128], index: 0, kind: input, shape index: {}]
  %s1 = inlined_call_operand.vmem [shape: f32[1,128], index: 1, kind: input, shape index: {}]
  %s2 = inlined_call_operand.vmem [shape: f32[1,128], index: 2, kind: input, shape index: {}]
  %s3 = inlined_call_operand.vmem [shape: bf16[16,128], index: 3, kind: input, shape index: {}]
  %s4 = inlined_call_operand.vmem [shape: bf16[16,128], index: 4, kind: output, shape index: {0}]
  %s5 = inlined_call_operand.vmem [shape: f32[1,128], index: 5, kind: output, shape index: {1}]
  %s6 = inlined_call_operand.vmem [shape: f32[1,128], index: 6, kind: output, shape index: {2}]
  %7 = xla_tuple %s4, %s5, %s6
  %s8 = sld [smem:[#allocation0]]
  $region46: #{decoder_forward.19} parent=0
    _
  %s10 = ssub.s32 1, %s8
  %s11 = scalar_select 0, %s10, %s8
  // Predicated region
  $region2: #{decoder_forward.19} parent=0 // pred_check
    _
  $region3: #{decoder_forward.19} parent=0 // pred_check_branch
    %13 = sbr.rel (0) target = $region5
  $region4: #{decoder_forward.19} parent=0 // pred_region
    _
  $region5: #{decoder_forward.19} parent=0 // pred_fallthru
    _
  // Predicated region
  $region6: #{decoder_forward.19} parent=0 // pred_check
    _
  $region7: #{decoder_forward.19} parent=0 // pred_check_branch
    %15 = sbr.rel (0) target = $region9
  $region8: #{decoder_forward.19} parent=0 // pred_region
    _
  $region9: #{decoder_forward.19} parent=0 // pred_fallthru
    _
  // Predicated region
  $region10: #{decoder_forward.19} parent=0 // pred_check
    _
  $region11: #{decoder_forward.19} parent=0 // pred_check_branch
    %17 = sbr.rel (0) target = $region13
  $region12: #{decoder_forward.19} parent=0 // pred_region
    _
  $region13: #{decoder_forward.19} parent=0 // pred_fallthru
    _
  // Predicated region
  $region14: #{decoder_forward.19} parent=0 // pred_check
    _
  $region15: #{decoder_forward.19} parent=0 // pred_check_branch
    %19 = sbr.rel (0) target = $region17
  $region16: #{decoder_forward.19} parent=0 // pred_region
    _
  $region17: #{decoder_forward.19} parent=0 // pred_fallthru
    _
  %p20 = scmp.eq.s32.totalorder 0, 0
  // Predicated region
  $region18: #{decoder_forward.19} parent=0 // pred_check
    %p21 = pneg %p20
  $region19: #{decoder_forward.19} parent=0 // pred_check_branch
    %23 = sbr.rel (%p21) target = $region21
  $region20: #{decoder_forward.19} parent=0 // pred_region
    %24 = vst [vmem:[%s5] sm:$0x1] 0.0
    %25 = vst [vmem:[%s6] sm:$0x1] 0.0
  $region21: #{decoder_forward.19} parent=0 // pred_fallthru
    _
  %v26 = vld [vmem:[%s3] sm:$0xf]
  %v27 = vld [vmem:[%s3 + $0x4] sm:$0xf]
  %v28 = vunpack.c.l.bf16 %v26
  %v29 = vunpack.c.l.bf16 %v27
  %v30 = vld [vmem:[%s0] sm:$0xf]
  %v31 = vld [vmem:[%s0 + $0x4] sm:$0xf]
  %v32 = vld [vmem:[%s1] sm:$0x1]
  %v33 = vunpack.c.l.bf16 %v30
  %v34 = vunpack.c.l.bf16 %v31
  %v36 = vlaneseq
  %v37 = vshrl.u32 %v36, 7
  %v38 = vsub.s32 0, %v37
  %v39 = vrot.slane %v32, %v38
  %v41 = vmul.f32 %v33, %v39
  %v42 = vmul.f32 %v34, %v39
  %v43 = vld [vmem:[%s2] sm:$0x1]
  %v45 = vlaneseq
  %v46 = vshrl.u32 %v45, 7
  %v47 = vsub.s32 0, %v46
  %v48 = vrot.slane %v43, %v47
  %v50 = vadd.f32 %v41, %v48
  %v51 = vadd.f32 %v42, %v48
  %v52 = vmax.f32 %v50, 0.0
  %v53 = vmax.f32 %v51, 0.0
  %v54 = vadd.f32 %v28, %v52
  %v55 = vadd.f32 %v29, %v53
  %v56 = vpack.c.bf16 %v55, %v54
  %v58 = vunpack.c.l.b16 %v56
  %v59 = vunpack.c.h.b16 %v56
  %v60 = vpack.c.b16 %v58, %v58
  %v61 = vpack.c.b16 %v59, %v59
  %64 = vst [vmem:[%s4] sm:$0xf] %v60
  %65 = vst [vmem:[%s4 + $0x4] sm:$0xf] %v61
  %v66 = vld [vmem:[%s5] sm:$0x1]
  %v67 = vadd.f32 %v54, %v55
  %v68 = vrot.slane %v67, 4
  %v69 = vadd.f32 %v67, %v68
  %v70 = vrot.slane %v69, 2
  %v71 = vadd.f32 %v69, %v70
  %v72 = vrot.slane %v71, 1
  %v73 = vadd.f32 %v71, %v72
  %v74 = vadd.f32 %v66, %v73
  %75 = vst [vmem:[%s5] sm:$0x1] %v74
  %v76 = vld [vmem:[%s6] sm:$0x1]
  %v77 = vmul.f32 %v54, %v54
  %v78 = vmul.f32 %v55, %v55
  %v79 = vadd.f32 %v77, %v78
  %v80 = vrot.slane %v79, 4
  %v81 = vadd.f32 %v79, %v80
  %v82 = vrot.slane %v81, 2
  %v83 = vadd.f32 %v81, %v82
  %v84 = vrot.slane %v83, 1
  %v85 = vadd.f32 %v83, %v84
  %v86 = vadd.f32 %v76, %v85
  %87 = vst [vmem:[%s6] sm:$0x1] %v86
  // Predicated region
  $region22: #{decoder_forward.19} parent=0 // pred_check
    _
  $region23: #{decoder_forward.19} parent=0 // pred_check_branch
    %89 = sbr.rel (0) target = $region25
  $region24: #{decoder_forward.19} parent=0 // pred_region
    _
  $region25: #{decoder_forward.19} parent=0 // pred_fallthru
    _
  // Predicated region
  $region26: #{decoder_forward.19} parent=0 // pred_check
    _
  $region27: #{decoder_forward.19} parent=0 // pred_check_branch
    %91 = sbr.rel (0) target = $region29
  $region28: #{decoder_forward.19} parent=0 // pred_region
    _
  $region29: #{decoder_forward.19} parent=0 // pred_fallthru
    _
  // Predicated region
  $region30: #{decoder_forward.19} parent=0 // pred_check
    _
  $region31: #{decoder_forward.19} parent=0 // pred_check_branch
    %93 = sbr.rel (0) target = $region33
  $region32: #{decoder_forward.19} parent=0 // pred_region
    _
  $region33: #{decoder_forward.19} parent=0 // pred_fallthru
    _
  // Predicated region
  $region34: #{decoder_forward.19} parent=0 // pred_check
    _
  $region35: #{decoder_forward.19} parent=0 // pred_check_branch
    %95 = sbr.rel (0) target = $region37
  $region36: #{decoder_forward.19} parent=0 // pred_region
    _
  $region37: #{decoder_forward.19} parent=0 // pred_fallthru
    _
  // Predicated region
  $region38: #{decoder_forward.19} parent=0 // pred_check
    _
  $region39: #{decoder_forward.19} parent=0 // pred_check_branch
    %97 = sbr.rel (0) target = $region41
  $region40: #{decoder_forward.19} parent=0 // pred_region
    _
  $region41: #{decoder_forward.19} parent=0 // pred_fallthru
    _
  // Predicated region
  $region42: #{decoder_forward.19} parent=0 // pred_check
    _
  $region43: #{decoder_forward.19} parent=0 // pred_check_branch
    %99 = sbr.rel (0) target = $region45
  $region44: #{decoder_forward.19} parent=0 // pred_region
    _
  $region45: #{decoder_forward.19} parent=0 // pred_fallthru
    _

// kernel: decoder_forward.18
$region0: #{decoder_forward.18}
  #allocation0 [shape = 'u32[]', space=smem, size = 0x4, offset = 0x4, fixed_abs, tag = 'smem constant byte address 0x4 - core index']
  #allocation1 [shape = 'u32[144,128]{1,0:T(1,128)}', space=vmem, size = 0x12000, scoped, tag = 'internal scratch']
  %s0 = inlined_call_operand.vmem [shape: bf16[64,16], index: 0, kind: input, shape index: {}]
  %s1 = inlined_call_operand.vmem [shape: bf16[16,32], index: 1, kind: input, shape index: {}]
  %s2 = inlined_call_operand.vmem [shape: bf16[64,32], index: 2, kind: output, shape index: {0}]
  %s3 = inlined_call_operand.vmem [shape: f32[1,32], index: 3, kind: output, shape index: {1}]
  %s4 = inlined_call_operand.vmem [shape: f32[1,32], index: 4, kind: output, shape index: {2}]
  %5 = xla_tuple %s2, %s3, %s4
  %s6 = sld [smem:[#allocation0]]
  $region38: #{decoder_forward.18} parent=0
    _
  %s8 = ssub.s32 1, %s6
  %s9 = scalar_select 0, %s8, %s6
  // Predicated region
  $region2: #{decoder_forward.18} parent=0 // pred_check
    _
  $region3: #{decoder_forward.18} parent=0 // pred_check_branch
    %11 = sbr.rel (0) target = $region5
  $region4: #{decoder_forward.18} parent=0 // pred_region
    _
  $region5: #{decoder_forward.18} parent=0 // pred_fallthru
    _
  // Predicated region
  $region6: #{decoder_forward.18} parent=0 // pred_check
    _
  $region7: #{decoder_forward.18} parent=0 // pred_check_branch
    %13 = sbr.rel (0) target = $region9
  $region8: #{decoder_forward.18} parent=0 // pred_region
    _
  $region9: #{decoder_forward.18} parent=0 // pred_fallthru
    _
  %p15 = scmp.eq.s32.totalorder 0, 0
  // Predicated region
  $region10: #{decoder_forward.18} parent=0 // pred_check
    %p16 = pneg %p15
  $region11: #{decoder_forward.18} parent=0 // pred_check_branch
    %18 = sbr.rel (%p16) target = $region13
  $region12: #{decoder_forward.18} parent=0 // pred_region
    %vm19 = vcmask 253952
    %20 = vst.msk [vmem:[%s3] sm:$0x1] %vm19, 0.0
    %21 = vst.msk [vmem:[%s4] sm:$0x1] %vm19, 0.0
  $region13: #{decoder_forward.18} parent=0 // pred_fallthru
    _
  %v22 = vld [vmem:[%s0] sm:$0xf]
  %v23 = vld [vmem:[%s0 + $0x4] sm:$0xf]
  %v24 = vld [vmem:[%s0 + $0x8] sm:$0xf]
  %v25 = vld [vmem:[%s0 + $0xc] sm:$0xf]
  %v26 = vld [vmem:[%s0 + $0x10] sm:$0xf]
  %v27 = vld [vmem:[%s0 + $0x14] sm:$0xf]
  %v28 = vld [vmem:[%s0 + $0x18] sm:$0xf]
  %v29 = vld [vmem:[%s0 + $0x1c] sm:$0xf]
  %v30 = vld [vmem:[%s1] sm:$0xf]
  %v31 = vld [vmem:[%s1 + $0x4] sm:$0xf]
  %v40 = vunpack.c.l.b16 %v22
  %v41 = vunpack.c.l.b16 %v23
  %v42 = vunpack.c.l.b16 %v24
  %v43 = vunpack.c.l.b16 %v25
  %v44 = vunpack.c.l.b16 %v26
  %v45 = vunpack.c.l.b16 %v27
  %v46 = vunpack.c.l.b16 %v28
  %v47 = vunpack.c.l.b16 %v29
  %v48 = vpack.c.b16 %v41, %v40
  %v49 = vpack.c.b16 %v43, %v42
  %v50 = vpack.c.b16 %v45, %v44
  %v51 = vpack.c.b16 %v47, %v46
  %v54 = vunpack.c.l.b16 %v30
  %v55 = vunpack.c.l.b16 %v31
  %v56 = vpack.c.b16 %v55, %v54
  %vm58 = vcmask 130048
  %v60 = vsel %vm58, %v48, 0
  %v63 = vsel %vm58, %v49, 0
  %v66 = vsel %vm58, %v50, 0
  %v69 = vsel %vm58, %v51, 0
  %71 = vmatprep.subr.bf16.mxu0 0
  %72 = vmatpush1.bf16.msra.mxu0 %v56
  %73 = vmatprep.subr.bf16.mxu0 0
  %74 = vmatpush1.bf16.msra.mxu0 0
  %75 = vmatprep.subr.bf16.mxu0 0
  %76 = vmatpush1.bf16.msra.mxu0 0
  %77 = vmatprep.subr.bf16.mxu0 0
  %78 = vmatpush1.bf16.msra.mxu0 0
  %79 = vmatprep.subr.bf16.mxu0 0
  %80 = vmatpush1.bf16.msra.mxu0 0
  %81 = vmatprep.subr.bf16.mxu0 0
  %82 = vmatpush1.bf16.msra.mxu0 0
  %83 = vmatprep.subr.bf16.mxu0 0
  %84 = vmatpush1.bf16.msra.mxu0 0
  %85 = vmatprep.subr.bf16.mxu0 0
  %86 = vmatpush1.bf16.msra.mxu0 0
  %87 = vmatprep.subr.bf16.mxu0 0
  %88 = vmatpush1.bf16.msra.mxu0 0
  %89 = vmatprep.subr.bf16.mxu0 0
  %90 = vmatpush1.bf16.msra.mxu0 0
  %91 = vmatprep.subr.bf16.mxu0 0
  %92 = vmatpush1.bf16.msra.mxu0 0
  %93 = vmatprep.subr.bf16.mxu0 0
  %94 = vmatpush1.bf16.msra.mxu0 0
  %95 = vmatprep.subr.bf16.mxu0 0
  %96 = vmatpush1.bf16.msra.mxu0 0
  %97 = vmatprep.subr.bf16.mxu0 0
  %98 = vmatpush1.bf16.msra.mxu0 0
  %99 = vmatprep.subr.bf16.mxu0 0
  %100 = vmatpush1.bf16.msra.mxu0 0
  %101 = vmatprep.subr.bf16.mxu0 0
  %102 = vmatpush1.bf16.msra.mxu0 0
  %103 = vmatprep.mubr.bf16.mxu0 0
  %104 = vmatmul.mubr.bf16.gmra.mrb[0].mxu0 %v60
  %v105 = vpop.f32.mrb[0].mxu0
  %v106 = vadd.f32 0.0, %v105
  %v107 = vpop.f32.mrb[0].mxu0
  %v108 = vpop.f32.mrb[0].mxu0
  %v109 = vadd.f32 0.0, %v108
  %v110 = vpop.f32.mrb[0].mxu0
  %111 = vmatprep.mubr.bf16.mxu0 0
  %112 = vmatmul.mubr.bf16.gmra.mrb[0].mxu0 %v63
  %v113 = vpop.f32.mrb[0].mxu0
  %v114 = vadd.f32 0.0, %v113
  %v115 = vpop.f32.mrb[0].mxu0
  %v116 = vpop.f32.mrb[0].mxu0
  %v117 = vadd.f32 0.0, %v116
  %v118 = vpop.f32.mrb[0].mxu0
  %119 = vmatprep.mubr.bf16.mxu0 0
  %120 = vmatmul.mubr.bf16.gmra.mrb[0].mxu0 %v66
  %v121 = vpop.f32.mrb[0].mxu0
  %v122 = vadd.f32 0.0, %v121
  %v123 = vpop.f32.mrb[0].mxu0
  %v124 = vpop.f32.mrb[0].mxu0
  %v125 = vadd.f32 0.0, %v124
  %v126 = vpop.f32.mrb[0].mxu0
  %127 = vmatprep.mubr.bf16.mxu0 0
  %128 = vmatmul.mubr.bf16.gmra.mrb[0].mxu0 %v69
  %v129 = vpop.f32.mrb[0].mxu0
  %v130 = vadd.f32 0.0, %v129
  %v131 = vpop.f32.mrb[0].mxu0
  %v132 = vpop.f32.mrb[0].mxu0
  %v133 = vadd.f32 0.0, %v132
  %v134 = vpop.f32.mrb[0].mxu0
  %135 = vdwg.mxu0
  %v136 = vpack.c.bf16 %v109, %v106
  %v137 = vpack.c.bf16 %v117, %v114
  %v138 = vpack.c.bf16 %v125, %v122
  %v139 = vpack.c.bf16 %v133, %v130
  %v144 = vunpack.c.l.b16 %v136
  %v145 = vunpack.c.h.b16 %v136
  %v146 = vunpack.c.l.b16 %v137
  %v147 = vunpack.c.h.b16 %v137
  %v148 = vunpack.c.l.b16 %v138
  %v149 = vunpack.c.h.b16 %v138
  %v150 = vunpack.c.l.b16 %v139
  %v151 = vunpack.c.h.b16 %v139
  %v152 = vpack.c.b16 %v144, %v144
  %v153 = vpack.c.b16 %v145, %v145
  %v154 = vpack.c.b16 %v146, %v146
  %v155 = vpack.c.b16 %v147, %v147
  %v156 = vpack.c.b16 %v148, %v148
  %v157 = vpack.c.b16 %v149, %v149
  %v158 = vpack.c.b16 %v150, %v150
  %v159 = vpack.c.b16 %v151, %v151
  %vm168 = vcmask 257024
  %169 = vst.msk [vmem:[%s2] sm:$0xf] %vm168, %v152
  %170 = vst.msk [vmem:[%s2 + $0x4] sm:$0xf] %vm168, %v153
  %171 = vst.msk [vmem:[%s2 + $0x8] sm:$0xf] %vm168, %v154
  %172 = vst.msk [vmem:[%s2 + $0xc] sm:$0xf] %vm168, %v155
  %173 = vst.msk [vmem:[%s2 + $0x10] sm:$0xf] %vm168, %v156
  %174 = vst.msk [vmem:[%s2 + $0x14] sm:$0xf] %vm168, %v157
  %175 = vst.msk [vmem:[%s2 + $0x18] sm:$0xf] %vm168, %v158
  %176 = vst.msk [vmem:[%s2 + $0x1c] sm:$0xf] %vm168, %v159
  %v177 = vld [vmem:[%s3] sm:$0x1]
  %vm178 = vcmask 261120
  %v179 = vsel %vm178, %v106, 0.0
  %v180 = vsel %vm178, %v109, 0.0
  %v181 = vadd.f32 %v179, %v180
  %v182 = vsel %vm178, %v114, 0.0
  %v183 = vadd.f32 %v181, %v182
  %v184 = vsel %vm178, %v117, 0.0
  %v185 = vadd.f32 %v183, %v184
  %v186 = vsel %vm178, %v122, 0.0
  %v187 = vadd.f32 %v185, %v186
  %v188 = vsel %vm178, %v125, 0.0
  %v189 = vadd.f32 %v187, %v188
  %v190 = vsel %vm178, %v130, 0.0
  %v191 = vadd.f32 %v189, %v190
  %v192 = vsel %vm178, %v133, 0.0
  %v193 = vadd.f32 %v191, %v192
  %v194 = vrot.slane %v193, 4
  %v195 = vadd.f32 %v193, %v194
  %v196 = vrot.slane %v195, 2
  %v197 = vadd.f32 %v195, %v196
  %v198 = vrot.slane %v197, 1
  %v199 = vadd.f32 %v197, %v198
  %v200 = vadd.f32 %v177, %v199
  %vm201 = vcmask 253952
  %202 = vst.msk [vmem:[%s3] sm:$0x1] %vm201, %v200
  %v203 = vld [vmem:[%s4] sm:$0x1]
  %v204 = vmul.f32 %v106, %v106
  %v205 = vmul.f32 %v109, %v109
  %v206 = vmul.f32 %v114, %v114
  %v207 = vmul.f32 %v117, %v117
  %v208 = vmul.f32 %v122, %v122
  %v209 = vmul.f32 %v125, %v125
  %v210 = vmul.f32 %v130, %v130
  %v211 = vmul.f32 %v133, %v133
  %v212 = vsel %vm178, %v204, 0.0
  %v213 = vsel %vm178, %v205, 0.0
  %v214 = vadd.f32 %v212, %v213
  %v215 = vsel %vm178, %v206, 0.0
  %v216 = vadd.f32 %v214, %v215
  %v217 = vsel %vm178, %v207, 0.0
  %v218 = vadd.f32 %v216, %v217
  %v219 = vsel %vm178, %v208, 0.0
  %v220 = vadd.f32 %v218, %v219
  %v221 = vsel %vm178, %v209, 0.0
  %v222 = vadd.f32 %v220, %v221
  %v223 = vsel %vm178, %v210, 0.0
  %v224 = vadd.f32 %v222, %v223
  %v225 = vsel %vm178, %v211, 0.0
  %v226 = vadd.f32 %v224, %v225
  %v227 = vrot.slane %v226, 4
  %v228 = vadd.f32 %v226, %v227
  %v229 = vrot.slane %v228, 2
  %v230 = vadd.f32 %v228, %v229
  %v231 = vrot.slane %v230, 1
  %v232 = vadd.f32 %v230, %v231
  %v233 = vadd.f32 %v203, %v232
  %234 = vst.msk [vmem:[%s4] sm:$0x1] %vm201, %v233
  // Predicated region
  $region14: #{decoder_forward.18} parent=0 // pred_check
    _
  $region15: #{decoder_forward.18} parent=0 // pred_check_branch
    %236 = sbr.rel (0) target = $region17
  $region16: #{decoder_forward.18} parent=0 // pred_region
    _
  $region17: #{decoder_forward.18} parent=0 // pred_fallthru
    _
  // Predicated region
  $region18: #{decoder_forward.18} parent=0 // pred_check
    _
  $region19: #{decoder_forward.18} parent=0 // pred_check_branch
    %238 = sbr.rel (0) target = $region21
  $region20: #{decoder_forward.18} parent=0 // pred_region
    _
  $region21: #{decoder_forward.18} parent=0 // pred_fallthru
    _
  // Predicated region
  $region22: #{decoder_forward.18} parent=0 // pred_check
    _
  $region23: #{decoder_forward.18} parent=0 // pred_check_branch
    %240 = sbr.rel (0) target = $region25
  $region24: #{decoder_forward.18} parent=0 // pred_region
    _
  $region25: #{decoder_forward.18} parent=0 // pred_fallthru
    _
  // Predicated region
  $region26: #{decoder_forward.18} parent=0 // pred_check
    _
  $region27: #{decoder_forward.18} parent=0 // pred_check_branch
    %242 = sbr.rel (0) target = $region29
  $region28: #{decoder_forward.18} parent=0 // pred_region
    _
  $region29: #{decoder_forward.18} parent=0 // pred_fallthru
    _
  // Predicated region
  $region30: #{decoder_forward.18} parent=0 // pred_check
    _
  $region31: #{decoder_forward.18} parent=0 // pred_check_branch
    %244 = sbr.rel (0) target = $region33
  $region32: #{decoder_forward.18} parent=0 // pred_region
    _
  $region33: #{decoder_forward.18} parent=0 // pred_fallthru
    _
  // Predicated region
  $region34: #{decoder_forward.18} parent=0 // pred_check
    _
  $region35: #{decoder_forward.18} parent=0 // pred_check_branch
    %246 = sbr.rel (0) target = $region37
  $region36: #{decoder_forward.18} parent=0 // pred_region
    _
  $region37: #{decoder_forward.18} parent=0 // pred_fallthru
    _

// kernel: tile.153
$region0: #{tile.153}
  #allocation0 [shape = 's32[1]{0}', space=sflag, size = 0x4, scoped, tag = 'scoped memory for tile.153']
  %s0 = inlined_call_operand.vmem [shape: f32[32], index: 0, kind: input, shape index: {}]
  %s1 = inlined_call_operand.vmem [shape: f32[8,32], index: 1, kind: output, shape index: {}]
  // Predicated region
  $region2: #{tile.153} parent=0 // pred_check
    _
  $region3: #{tile.153} parent=0 // pred_check_branch
    %3 = sbr.rel (0) target = $region5
  $region4: #{tile.153} parent=0 // pred_region
    _
  $region5: #{tile.153} parent=0 // pred_fallthru
    _
  %v4 = vld [vmem:[%s0] ss:$0 sm:$0xff]
  %5 = vst [vmem:[%s1] sm:$0xff] %v4

// kernel: tile.154
$region0: #{tile.154}
  %s0 = inlined_call_operand.vmem [shape: f32[8,32], index: 0, kind: input, shape index: {}]
  %s1 = inlined_call_operand.vmem [shape: f32[1,256], index: 1, kind: output, shape index: {}]
  $region1: #{tile.154} parent=0
    #allocation0 [shape = 'u8[8192]{0}', space=vmem, size = 0x2000, scoped, tag = 'scoped mem for output reshape']
    %s2 = smov 3
    %v3 = vld [vmem:[%s0] ss:$4 sm:%s2]
    %vm4 = vcmask 261120
    %5 = vst.msk [vmem:[#allocation0] ss:$8 sm:$0x3] %vm4, %v3
    %s6 = scalar_lea.vmem %s0, 3
    %s7 = smov 3
    %v8 = vld [vmem:[%s6] ss:$4 sm:%s7]
    %9 = vrot.lane.b32.xlu0 %v8, 96
    %v10 = vpop.permute.xlu0 %9
    %vm11 = vcmask 1048320
    %12 = vst.msk [vmem:[#allocation0] ss:$8 sm:$0x3] %vm11, %v10
    %s13 = scalar_lea.vmem %s0, 2
    %s14 = smov 3
    %v15 = vld [vmem:[%s13] ss:$4 sm:%s14]
    %16 = vrot.lane.b32.xlu0 %v15, 64
    %v17 = vpop.permute.xlu0 %16
    %vm18 = vcmask 785920
    %19 = vst.msk [vmem:[#allocation0] ss:$8 sm:$0x3] %vm18, %v17
    %s20 = scalar_lea.vmem %s0, 1
    %s21 = smov 3
    %v22 = vld [vmem:[%s20] ss:$4 sm:%s21]
    %23 = vrot.lane.b32.xlu0 %v22, 32
    %v24 = vpop.permute.xlu0 %23
    %vm25 = vcmask 523520
    %26 = vst.msk [vmem:[#allocation0] ss:$8 sm:$0x3] %vm25, %v24
    %s28 = sshllo.u32 0, 1
    %v30 = vld [vmem:[#allocation0] sm:%s28]
    %s31 = sshllo.u32 0, 1
    %32 = vst [vmem:[%s1] sm:%s31] %v30
    %s33 = scalar_lea.vmem [#allocation0], 8
    %v34 = vld [vmem:[%s33] sm:%s28]
    %s35 = sshllo.u32 0, 1
    %s36 = scalar_lea.vmem %s1, 1
    %37 = vst [vmem:[%s36] sm:%s35] %v34

// kernel: decoder_forward.26
$region0: #{decoder_forward.26}
  #allocation0 [shape = 'u32[]', space=smem, size = 0x4, offset = 0x4, fixed_abs, tag = 'smem constant byte address 0x4 - core index']
  #allocation1 [shape = 'u32[144,128]{1,0:T(1,128)}', space=vmem, size = 0x12000, scoped, tag = 'internal scratch']
  %s0 = inlined_call_operand.vmem [shape: bf16[64,864], index: 0, kind: input, shape index: {}]
  %s1 = inlined_call_operand.vmem [shape: bf16[864,256], index: 1, kind: input, shape index: {}]
  %s2 = inlined_call_operand.vmem [shape: f32[1,256], index: 2, kind: input, shape index: {}]
  %s3 = inlined_call_operand.vmem [shape: bf16[64,256], index: 3, kind: output, shape index: {}]
  %s4 = sld [smem:[#allocation0]]
  $region22: #{decoder_forward.26} parent=0
    _
  %s6 = ssub.s32 1, %s4
  %s7 = scalar_select 0, %s6, %s4
  // Predicated region
  $region2: #{decoder_forward.26} parent=0 // pred_check
    _
  $region3: #{decoder_forward.26} parent=0 // pred_check_branch
    %9 = sbr.rel (0) target = $region5
  $region4: #{decoder_forward.26} parent=0 // pred_region
    _
  $region5: #{decoder_forward.26} parent=0 // pred_fallthru
    _
  // Predicated region
  $region6: #{decoder_forward.26} parent=0 // pred_check
    _
  $region7: #{decoder_forward.26} parent=0 // pred_check_branch
    %11 = sbr.rel (0) target = $region9
  $region8: #{decoder_forward.26} parent=0 // pred_region
    _
  $region9: #{decoder_forward.26} parent=0 // pred_fallthru
    _
  // Predicated region
  $region10: #{decoder_forward.26} parent=0 // pred_check
    _
  $region11: #{decoder_forward.26} parent=0 // pred_check_branch
    %13 = sbr.rel (0) target = $region13
  $region12: #{decoder_forward.26} parent=0 // pred_region
    _
  $region13: #{decoder_forward.26} parent=0 // pred_fallthru
    _
  %v15 = vld [vmem:[%s0] sm:$0xff]
  %v16 = vld [vmem:[%s0 + $0x8] sm:$0xff]
  %v17 = vld [vmem:[%s0 + $0x10] sm:$0xff]
  %v18 = vld [vmem:[%s0 + $0x18] sm:$0xf]
  %v19 = vld [vmem:[%s0 + $0x1c] sm:$0xff]
  %v20 = vld [vmem:[%s0 + $0x24] sm:$0xff]
  %v21 = vld [vmem:[%s0 + $0x2c] sm:$0xff]
  %v22 = vld [vmem:[%s0 + $0x34] sm:$0xf]
  %v23 = vld [vmem:[%s0 + $0x38] sm:$0xff]
  %v24 = vld [vmem:[%s0 + $0x40] sm:$0xff]
  %v25 = vld [vmem:[%s0 + $0x48] sm:$0xff]
  %v26 = vld [vmem:[%s0 + $0x50] sm:$0xf]
  %v27 = vld [vmem:[%s0 + $0x54] sm:$0xff]
  %v28 = vld [vmem:[%s0 + $0x5c] sm:$0xff]
  %v29 = vld [vmem:[%s0 + $0x64] sm:$0xff]
  %v30 = vld [vmem:[%s0 + $0x6c] sm:$0xf]
  %v31 = vld [vmem:[%s0 + $0x70] sm:$0xff]
  %v32 = vld [vmem:[%s0 + $0x78] sm:$0xff]
  %v33 = vld [vmem:[%s0 + $0x80] sm:$0xff]
  %v34 = vld [vmem:[%s0 + $0x88] sm:$0xf]
  %v35 = vld [vmem:[%s0 + $0x8c] sm:$0xff]
  %v36 = vld [vmem:[%s0 + $0x94] sm:$0xff]
  %v37 = vld [vmem:[%s0 + $0x9c] sm:$0xff]
  %v38 = vld [vmem:[%s0 + $0xa4] sm:$0xf]
  %v39 = vld [vmem:[%s0 + $0xa8] sm:$0xff]
  %v40 = vld [vmem:[%s0 + $0xb0] sm:$0xff]
  %v41 = vld [vmem:[%s0 + $0xb8] sm:$0xff]
  %v42 = vld [vmem:[%s0 + $0xc0] sm:$0xf]
  %v43 = vld [vmem:[%s0 + $0xc4] sm:$0xff]
  %v44 = vld [vmem:[%s0 + $0xcc] sm:$0xff]
  %v45 = vld [vmem:[%s0 + $0xd4] sm:$0xff]
  %v46 = vld [vmem:[%s0 + $0xdc] sm:$0xf]
  %v47 = vld [vmem:[%s1] sm:$0xff]
  %v48 = vld [vmem:[%s1 + $0x8] sm:$0xff]
  %v49 = vld [vmem:[%s1 + $0x10] sm:$0xff]
  %v50 = vld [vmem:[%s1 + $0x18] sm:$0xff]
  %v51 = vld [vmem:[%s1 + $0x20] sm:$0xff]
  %v52 = vld [vmem:[%s1 + $0x28] sm:$0xff]
  %v53 = vld [vmem:[%s1 + $0x30] sm:$0xff]
  %v54 = vld [vmem:[%s1 + $0x38] sm:$0xff]
  %v55 = vld [vmem:[%s1 + $0x40] sm:$0xff]
  %v56 = vld [vmem:[%s1 + $0x48] sm:$0xff]
  %v57 = vld [vmem:[%s1 + $0x50] sm:$0xff]
  %v58 = vld [vmem:[%s1 + $0x58] sm:$0xff]
  %v59 = vld [vmem:[%s1 + $0x60] sm:$0xff]
  %v60 = vld [vmem:[%s1 + $0x68] sm:$0xff]
  %v61 = vld [vmem:[%s1 + $0x70] sm:$0xff]
  %v62 = vld [vmem:[%s1 + $0x78] sm:$0xff]
  %v63 = vld [vmem:[%s1 + $0x80] sm:$0xff]
  %v64 = vld [vmem:[%s1 + $0x88] sm:$0xff]
  %v65 = vld [vmem:[%s1 + $0x90] sm:$0xff]
  %v66 = vld [vmem:[%s1 + $0x98] sm:$0xff]
  %v67 = vld [vmem:[%s1 + $0xa0] sm:$0xff]
  %v68 = vld [vmem:[%s1 + $0xa8] sm:$0xff]
  %v69 = vld [vmem:[%s1 + $0xb0] sm:$0xff]
  %v70 = vld [vmem:[%s1 + $0xb8] sm:$0xff]
  %v71 = vld [vmem:[%s1 + $0xc0] sm:$0xff]
  %v72 = vld [vmem:[%s1 + $0xc8] sm:$0xff]
  %v73 = vld [vmem:[%s1 + $0xd0] sm:$0xff]
  %v74 = vld [vmem:[%s1 + $0xd8] sm:$0xff]
  %v75 = vld [vmem:[%s1 + $0xe0] sm:$0xff]
  %v76 = vld [vmem:[%s1 + $0xe8] sm:$0xff]
  %v77 = vld [vmem:[%s1 + $0xf0] sm:$0xff]
  %v78 = vld [vmem:[%s1 + $0xf8] sm:$0xff]
  %v79 = vld [vmem:[%s1 + $0x100] sm:$0xff]
  %v80 = vld [vmem:[%s1 + $0x108] sm:$0xff]
  %v81 = vld [vmem:[%s1 + $0x110] sm:$0xff]
  %v82 = vld [vmem:[%s1 + $0x118] sm:$0xff]
  %v83 = vld [vmem:[%s1 + $0x120] sm:$0xff]
  %v84 = vld [vmem:[%s1 + $0x128] sm:$0xff]
  %v85 = vld [vmem:[%s1 + $0x130] sm:$0xff]
  %v86 = vld [vmem:[%s1 + $0x138] sm:$0xff]
  %v87 = vld [vmem:[%s1 + $0x140] sm:$0xff]
  %v88 = vld [vmem:[%s1 + $0x148] sm:$0xff]
  %v89 = vld [vmem:[%s1 + $0x150] sm:$0xff]
  %v90 = vld [vmem:[%s1 + $0x158] sm:$0xff]
  %v91 = vld [vmem:[%s1 + $0x160] sm:$0xff]
  %v92 = vld [vmem:[%s1 + $0x168] sm:$0xff]
  %v93 = vld [vmem:[%s1 + $0x170] sm:$0xff]
  %v94 = vld [vmem:[%s1 + $0x178] sm:$0xff]
  %v95 = vld [vmem:[%s1 + $0x180] sm:$0xff]
  %v96 = vld [vmem:[%s1 + $0x188] sm:$0xff]
  %v97 = vld [vmem:[%s1 + $0x190] sm:$0xff]
  %v98 = vld [vmem:[%s1 + $0x198] sm:$0xff]
  %v99 = vld [vmem:[%s1 + $0x1a0] sm:$0xff]
  %v100 = vld [vmem:[%s1 + $0x1a8] sm:$0xff]
  %v101 = vld [vmem:[%s1 + $0x1b0] sm:$0xff]
  %v102 = vld [vmem:[%s1 + $0x1b8] sm:$0xff]
  %v103 = vld [vmem:[%s1 + $0x1c0] sm:$0xff]
  %v104 = vld [vmem:[%s1 + $0x1c8] sm:$0xff]
  %v105 = vld [vmem:[%s1 + $0x1d0] sm:$0xff]
  %v106 = vld [vmem:[%s1 + $0x1d8] sm:$0xff]
  %v107 = vld [vmem:[%s1 + $0x1e0] sm:$0xff]
  %v108 = vld [vmem:[%s1 + $0x1e8] sm:$0xff]
  %v109 = vld [vmem:[%s1 + $0x1f0] sm:$0xff]
  %v110 = vld [vmem:[%s1 + $0x1f8] sm:$0xff]
  %v111 = vld [vmem:[%s1 + $0x200] sm:$0xff]
  %v112 = vld [vmem:[%s1 + $0x208] sm:$0xff]
  %v113 = vld [vmem:[%s1 + $0x210] sm:$0xff]
  %v114 = vld [vmem:[%s1 + $0x218] sm:$0xff]
  %v115 = vld [vmem:[%s1 + $0x220] sm:$0xff]
  %v116 = vld [vmem:[%s1 + $0x228] sm:$0xff]
  %v117 = vld [vmem:[%s1 + $0x230] sm:$0xff]
  %v118 = vld [vmem:[%s1 + $0x238] sm:$0xff]
  %v119 = vld [vmem:[%s1 + $0x240] sm:$0xff]
  %v120 = vld [vmem:[%s1 + $0x248] sm:$0xff]
  %v121 = vld [vmem:[%s1 + $0x250] sm:$0xff]
  %v122 = vld [vmem:[%s1 + $0x258] sm:$0xff]
  %v123 = vld [vmem:[%s1 + $0x260] sm:$0xff]
  %v124 = vld [vmem:[%s1 + $0x268] sm:$0xff]
  %v125 = vld [vmem:[%s1 + $0x270] sm:$0xff]
  %v126 = vld [vmem:[%s1 + $0x278] sm:$0xff]
  %v127 = vld [vmem:[%s1 + $0x280] sm:$0xff]
  %v128 = vld [vmem:[%s1 + $0x288] sm:$0xff]
  %v129 = vld [vmem:[%s1 + $0x290] sm:$0xff]
  %v130 = vld [vmem:[%s1 + $0x298] sm:$0xff]
  %v131 = vld [vmem:[%s1 + $0x2a0] sm:$0xff]
  %v132 = vld [vmem:[%s1 + $0x2a8] sm:$0xff]
  %v133 = vld [vmem:[%s1 + $0x2b0] sm:$0xff]
  %v134 = vld [vmem:[%s1 + $0x2b8] sm:$0xff]
  %v135 = vld [vmem:[%s1 + $0x2c0] sm:$0xff]
  %v136 = vld [vmem:[%s1 + $0x2c8] sm:$0xff]
  %v137 = vld [vmem:[%s1 + $0x2d0] sm:$0xff]
  %v138 = vld [vmem:[%s1 + $0x2d8] sm:$0xff]
  %v139 = vld [vmem:[%s1 + $0x2e0] sm:$0xff]
  %v140 = vld [vmem:[%s1 + $0x2e8] sm:$0xff]
  %v141 = vld [vmem:[%s1 + $0x2f0] sm:$0xff]
  %v142 = vld [vmem:[%s1 + $0x2f8] sm:$0xff]
  %v143 = vld [vmem:[%s1 + $0x300] sm:$0xff]
  %v144 = vld [vmem:[%s1 + $0x308] sm:$0xff]
  %v145 = vld [vmem:[%s1 + $0x310] sm:$0xff]
  %v146 = vld [vmem:[%s1 + $0x318] sm:$0xff]
  %v147 = vld [vmem:[%s1 + $0x320] sm:$0xff]
  %v148 = vld [vmem:[%s1 + $0x328] sm:$0xff]
  %v149 = vld [vmem:[%s1 + $0x330] sm:$0xff]
  %v150 = vld [vmem:[%s1 + $0x338] sm:$0xff]
  %v151 = vld [vmem:[%s1 + $0x340] sm:$0xff]
  %v152 = vld [vmem:[%s1 + $0x348] sm:$0xff]
  %v153 = vld [vmem:[%s1 + $0x350] sm:$0xff]
  %v154 = vld [vmem:[%s1 + $0x358] sm:$0xff]
  %v155 = vld [vmem:[%s2] sm:$0x3]
  %v157 = vlaneseq
  %v158 = vshrl.u32 %v157, 7
  %v159 = vsub.s32 0, %v158
  %v160 = vrot.slane %v155, %v159
  %v161 = vlaneseq
  %v162 = vshrl.u32 %v161, 7
  %v163 = vsub.s32 1, %v162
  %v164 = vrot.slane %v155, %v163
  %v199 = vunpack.c.l.b16 %v15
  %v200 = vunpack.c.h.b16 %v15
  %v201 = vunpack.c.l.b16 %v16
  %v202 = vunpack.c.h.b16 %v16
  %v203 = vunpack.c.l.b16 %v17
  %v204 = vunpack.c.h.b16 %v17
  %v205 = vunpack.c.l.b16 %v18
  %v206 = vunpack.c.l.b16 %v19
  %v207 = vunpack.c.h.b16 %v19
  %v208 = vunpack.c.l.b16 %v20
  %v209 = vunpack.c.h.b16 %v20
  %v210 = vunpack.c.l.b16 %v21
  %v211 = vunpack.c.h.b16 %v21
  %v212 = vunpack.c.l.b16 %v22
  %v213 = vunpack.c.l.b16 %v23
  %v214 = vunpack.c.h.b16 %v23
  %v215 = vunpack.c.l.b16 %v24
  %v216 = vunpack.c.h.b16 %v24
  %v217 = vunpack.c.l.b16 %v25
  %v218 = vunpack.c.h.b16 %v25
  %v219 = vunpack.c.l.b16 %v26
  %v220 = vunpack.c.l.b16 %v27
  %v221 = vunpack.c.h.b16 %v27
  %v222 = vunpack.c.l.b16 %v28
  %v223 = vunpack.c.h.b16 %v28
  %v224 = vunpack.c.l.b16 %v29
  %v225 = vunpack.c.h.b16 %v29
  %v226 = vunpack.c.l.b16 %v30
  %v227 = vunpack.c.l.b16 %v31
  %v228 = vunpack.c.h.b16 %v31
  %v229 = vunpack.c.l.b16 %v32
  %v230 = vunpack.c.h.b16 %v32
  %v231 = vunpack.c.l.b16 %v33
  %v232 = vunpack.c.h.b16 %v33
  %v233 = vunpack.c.l.b16 %v34
  %v234 = vunpack.c.l.b16 %v35
  %v235 = vunpack.c.h.b16 %v35
  %v236 = vunpack.c.l.b16 %v36
  %v237 = vunpack.c.h.b16 %v36
  %v238 = vunpack.c.l.b16 %v37
  %v239 = vunpack.c.h.b16 %v37
  %v240 = vunpack.c.l.b16 %v38
  %v241 = vunpack.c.l.b16 %v39
  %v242 = vunpack.c.h.b16 %v39
  %v243 = vunpack.c.l.b16 %v40
  %v244 = vunpack.c.h.b16 %v40
  %v245 = vunpack.c.l.b16 %v41
  %v246 = vunpack.c.h.b16 %v41
  %v247 = vunpack.c.l.b16 %v42
  %v248 = vunpack.c.l.b16 %v43
  %v249 = vunpack.c.h.b16 %v43
  %v250 = vunpack.c.l.b16 %v44
  %v251 = vunpack.c.h.b16 %v44
  %v252 = vunpack.c.l.b16 %v45
  %v253 = vunpack.c.h.b16 %v45
  %v254 = vunpack.c.l.b16 %v46
  %v255 = vpack.c.b16 %v206, %v199
  %v256 = vpack.c.b16 %v207, %v200
  %v257 = vpack.c.b16 %v208, %v201
  %v258 = vpack.c.b16 %v209, %v202
  %v259 = vpack.c.b16 %v210, %v203
  %v260 = vpack.c.b16 %v211, %v204
  %v261 = vpack.c.b16 %v212, %v205
  %v262 = vpack.c.b16 %v220, %v213
  %v263 = vpack.c.b16 %v221, %v214
  %v264 = vpack.c.b16 %v222, %v215
  %v265 = vpack.c.b16 %v223, %v216
  %v266 = vpack.c.b16 %v224, %v217
  %v267 = vpack.c.b16 %v225, %v218
  %v268 = vpack.c.b16 %v226, %v219
  %v269 = vpack.c.b16 %v234, %v227
  %v270 = vpack.c.b16 %v235, %v228
  %v271 = vpack.c.b16 %v236, %v229
  %v272 = vpack.c.b16 %v237, %v230
  %v273 = vpack.c.b16 %v238, %v231
  %v274 = vpack.c.b16 %v239, %v232
  %v275 = vpack.c.b16 %v240, %v233
  %v276 = vpack.c.b16 %v248, %v241
  %v277 = vpack.c.b16 %v249, %v242
  %v278 = vpack.c.b16 %v250, %v243
  %v279 = vpack.c.b16 %v251, %v244
  %v280 = vpack.c.b16 %v252, %v245
  %v281 = vpack.c.b16 %v253, %v246
  %v282 = vpack.c.b16 %v254, %v247
  %v415 = vunpack.c.l.b16 %v47
  %v416 = vunpack.c.h.b16 %v47
  %v417 = vunpack.c.l.b16 %v48
  %v418 = vunpack.c.h.b16 %v48
  %v419 = vunpack.c.l.b16 %v49
  %v420 = vunpack.c.h.b16 %v49
  %v421 = vunpack.c.l.b16 %v50
  %v422 = vunpack.c.h.b16 %v50
  %v423 = vunpack.c.l.b16 %v51
  %v424 = vunpack.c.h.b16 %v51
  %v425 = vunpack.c.l.b16 %v52
  %v426 = vunpack.c.h.b16 %v52
  %v427 = vunpack.c.l.b16 %v53
  %v428 = vunpack.c.h.b16 %v53
  %v429 = vunpack.c.l.b16 %v54
  %v430 = vunpack.c.h.b16 %v54
  %v431 = vunpack.c.l.b16 %v55
  %v432 = vunpack.c.h.b16 %v55
  %v433 = vunpack.c.l.b16 %v56
  %v434 = vunpack.c.h.b16 %v56
  %v435 = vunpack.c.l.b16 %v57
  %v436 = vunpack.c.h.b16 %v57
  %v437 = vunpack.c.l.b16 %v58
  %v438 = vunpack.c.h.b16 %v58
  %v439 = vunpack.c.l.b16 %v59
  %v440 = vunpack.c.h.b16 %v59
  %v441 = vunpack.c.l.b16 %v60
  %v442 = vunpack.c.h.b16 %v60
  %v443 = vunpack.c.l.b16 %v61
  %v444 = vunpack.c.h.b16 %v61
  %v445 = vunpack.c.l.b16 %v62
  %v446 = vunpack.c.h.b16 %v62
  %v447 = vunpack.c.l.b16 %v63
  %v448 = vunpack.c.h.b16 %v63
  %v449 = vunpack.c.l.b16 %v64
  %v450 = vunpack.c.h.b16 %v64
  %v451 = vunpack.c.l.b16 %v65
  %v452 = vunpack.c.h.b16 %v65
  %v453 = vunpack.c.l.b16 %v66
  %v454 = vunpack.c.h.b16 %v66
  %v455 = vunpack.c.l.b16 %v67
  %v456 = vunpack.c.h.b16 %v67
  %v457 = vunpack.c.l.b16 %v68
  %v458 = vunpack.c.h.b16 %v68
  %v459 = vunpack.c.l.b16 %v69
  %v460 = vunpack.c.h.b16 %v69
  %v461 = vunpack.c.l.b16 %v70
  %v462 = vunpack.c.h.b16 %v70
  %v463 = vunpack.c.l.b16 %v71
  %v464 = vunpack.c.h.b16 %v71
  %v465 = vunpack.c.l.b16 %v72
  %v466 = vunpack.c.h.b16 %v72
  %v467 = vunpack.c.l.b16 %v73
  %v468 = vunpack.c.h.b16 %v73
  %v469 = vunpack.c.l.b16 %v74
  %v470 = vunpack.c.h.b16 %v74
  %v471 = vunpack.c.l.b16 %v75
  %v472 = vunpack.c.h.b16 %v75
  %v473 = vunpack.c.l.b16 %v76
  %v474 = vunpack.c.h.b16 %v76
  %v475 = vunpack.c.l.b16 %v77
  %v476 = vunpack.c.h.b16 %v77
  %v477 = vunpack.c.l.b16 %v78
  %v478 = vunpack.c.h.b16 %v78
  %v479 = vunpack.c.l.b16 %v79
  %v480 = vunpack.c.h.b16 %v79
  %v481 = vunpack.c.l.b16 %v80
  %v482 = vunpack.c.h.b16 %v80
  %v483 = vunpack.c.l.b16 %v81
  %v484 = vunpack.c.h.b16 %v81
  %v485 = vunpack.c.l.b16 %v82
  %v486 = vunpack.c.h.b16 %v82
  %v487 = vunpack.c.l.b16 %v83
  %v488 = vunpack.c.h.b16 %v83
  %v489 = vunpack.c.l.b16 %v84
  %v490 = vunpack.c.h.b16 %v84
  %v491 = vunpack.c.l.b16 %v85
  %v492 = vunpack.c.h.b16 %v85
  %v493 = vunpack.c.l.b16 %v86
  %v494 = vunpack.c.h.b16 %v86
  %v495 = vunpack.c.l.b16 %v87
  %v496 = vunpack.c.h.b16 %v87
  %v497 = vunpack.c.l.b16 %v88
  %v498 = vunpack.c.h.b16 %v88
  %v499 = vunpack.c.l.b16 %v89
  %v500 = vunpack.c.h.b16 %v89
  %v501 = vunpack.c.l.b16 %v90
  %v502 = vunpack.c.h.b16 %v90
  %v503 = vunpack.c.l.b16 %v91
  %v504 = vunpack.c.h.b16 %v91
  %v505 = vunpack.c.l.b16 %v92
  %v506 = vunpack.c.h.b16 %v92
  %v507 = vunpack.c.l.b16 %v93
  %v508 = vunpack.c.h.b16 %v93
  %v509 = vunpack.c.l.b16 %v94
  %v510 = vunpack.c.h.b16 %v94
  %v511 = vunpack.c.l.b16 %v95
  %v512 = vunpack.c.h.b16 %v95
  %v513 = vunpack.c.l.b16 %v96
  %v514 = vunpack.c.h.b16 %v96
  %v515 = vunpack.c.l.b16 %v97
  %v516 = vunpack.c.h.b16 %v97
  %v517 = vunpack.c.l.b16 %v98
  %v518 = vunpack.c.h.b16 %v98
  %v519 = vunpack.c.l.b16 %v99
  %v520 = vunpack.c.h.b16 %v99
  %v521 = vunpack.c.l.b16 %v100
  %v522 = vunpack.c.h.b16 %v100
  %v523 = vunpack.c.l.b16 %v101
  %v524 = vunpack.c.h.b16 %v101
  %v525 = vunpack.c.l.b16 %v102
  %v526 = vunpack.c.h.b16 %v102
  %v527 = vunpack.c.l.b16 %v103
  %v528 = vunpack.c.h.b16 %v103
  %v529 = vunpack.c.l.b16 %v104
  %v530 = vunpack.c.h.b16 %v104
  %v531 = vunpack.c.l.b16 %v105
  %v532 = vunpack.c.h.b16 %v105
  %v533 = vunpack.c.l.b16 %v106
  %v534 = vunpack.c.h.b16 %v106
  %v535 = vunpack.c.l.b16 %v107
  %v536 = vunpack.c.h.b16 %v107
  %v537 = vunpack.c.l.b16 %v108
  %v538 = vunpack.c.h.b16 %v108
  %v539 = vunpack.c.l.b16 %v109
  %v540 = vunpack.c.h.b16 %v109
  %v541 = vunpack.c.l.b16 %v110
  %v542 = vunpack.c.h.b16 %v110
  %v543 = vunpack.c.l.b16 %v111
  %v544 = vunpack.c.h.b16 %v111
  %v545 = vunpack.c.l.b16 %v112
  %v546 = vunpack.c.h.b16 %v112
  %v547 = vunpack.c.l.b16 %v113
  %v548 = vunpack.c.h.b16 %v113
  %v549 = vunpack.c.l.b16 %v114
  %v550 = vunpack.c.h.b16 %v114
  %v551 = vunpack.c.l.b16 %v115
  %v552 = vunpack.c.h.b16 %v115
  %v553 = vunpack.c.l.b16 %v116
  %v554 = vunpack.c.h.b16 %v116
  %v555 = vunpack.c.l.b16 %v117
  %v556 = vunpack.c.h.b16 %v117
  %v557 = vunpack.c.l.b16 %v118
  %v558 = vunpack.c.h.b16 %v118
  %v559 = vunpack.c.l.b16 %v119
  %v560 = vunpack.c.h.b16 %v119
  %v561 = vunpack.c.l.b16 %v120
  %v562 = vunpack.c.h.b16 %v120
  %v563 = vunpack.c.l.b16 %v121
  %v564 = vunpack.c.h.b16 %v121
  %v565 = vunpack.c.l.b16 %v122
  %v566 = vunpack.c.h.b16 %v122
  %v567 = vunpack.c.l.b16 %v123
  %v568 = vunpack.c.h.b16 %v123
  %v569 = vunpack.c.l.b16 %v124
  %v570 = vunpack.c.h.b16 %v124
  %v571 = vunpack.c.l.b16 %v125
  %v572 = vunpack.c.h.b16 %v125
  %v573 = vunpack.c.l.b16 %v126
  %v574 = vunpack.c.h.b16 %v126
  %v575 = vunpack.c.l.b16 %v127
  %v576 = vunpack.c.h.b16 %v127
  %v577 = vunpack.c.l.b16 %v128
  %v578 = vunpack.c.h.b16 %v128
  %v579 = vunpack.c.l.b16 %v129
  %v580 = vunpack.c.h.b16 %v129
  %v581 = vunpack.c.l.b16 %v130
  %v582 = vunpack.c.h.b16 %v130
  %v583 = vunpack.c.l.b16 %v131
  %v584 = vunpack.c.h.b16 %v131
  %v585 = vunpack.c.l.b16 %v132
  %v586 = vunpack.c.h.b16 %v132
  %v587 = vunpack.c.l.b16 %v133
  %v588 = vunpack.c.h.b16 %v133
  %v589 = vunpack.c.l.b16 %v134
  %v590 = vunpack.c.h.b16 %v134
  %v591 = vunpack.c.l.b16 %v135
  %v592 = vunpack.c.h.b16 %v135
  %v593 = vunpack.c.l.b16 %v136
  %v594 = vunpack.c.h.b16 %v136
  %v595 = vunpack.c.l.b16 %v137
  %v596 = vunpack.c.h.b16 %v137
  %v597 = vunpack.c.l.b16 %v138
  %v598 = vunpack.c.h.b16 %v138
  %v599 = vunpack.c.l.b16 %v139
  %v600 = vunpack.c.h.b16 %v139
  %v601 = vunpack.c.l.b16 %v140
  %v602 = vunpack.c.h.b16 %v140
  %v603 = vunpack.c.l.b16 %v141
  %v604 = vunpack.c.h.b16 %v141
  %v605 = vunpack.c.l.b16 %v142
  %v606 = vunpack.c.h.b16 %v142
  %v607 = vunpack.c.l.b16 %v143
  %v608 = vunpack.c.h.b16 %v143
  %v609 = vunpack.c.l.b16 %v144
  %v610 = vunpack.c.h.b16 %v144
  %v611 = vunpack.c.l.b16 %v145
  %v612 = vunpack.c.h.b16 %v145
  %v613 = vunpack.c.l.b16 %v146
  %v614 = vunpack.c.h.b16 %v146
  %v615 = vunpack.c.l.b16 %v147
  %v616 = vunpack.c.h.b16 %v147
  %v617 = vunpack.c.l.b16 %v148
  %v618 = vunpack.c.h.b16 %v148
  %v619 = vunpack.c.l.b16 %v149
  %v620 = vunpack.c.h.b16 %v149
  %v621 = vunpack.c.l.b16 %v150
  %v622 = vunpack.c.h.b16 %v150
  %v623 = vunpack.c.l.b16 %v151
  %v624 = vunpack.c.h.b16 %v151
  %v625 = vunpack.c.l.b16 %v152
  %v626 = vunpack.c.h.b16 %v152
  %v627 = vunpack.c.l.b16 %v153
  %v628 = vunpack.c.h.b16 %v153
  %v629 = vunpack.c.l.b16 %v154
  %v630 = vunpack.c.h.b16 %v154
  %v631 = vpack.c.b16 %v417, %v415
  %v632 = vpack.c.b16 %v418, %v416
  %v633 = vpack.c.b16 %v421, %v419
  %v634 = vpack.c.b16 %v422, %v420
  %v635 = vpack.c.b16 %v425, %v423
  %v636 = vpack.c.b16 %v426, %v424
  %v637 = vpack.c.b16 %v429, %v427
  %v638 = vpack.c.b16 %v430, %v428
  %v639 = vpack.c.b16 %v433, %v431
  %v640 = vpack.c.b16 %v434, %v432
  %v641 = vpack.c.b16 %v437, %v435
  %v642 = vpack.c.b16 %v438, %v436
  %v643 = vpack.c.b16 %v441, %v439
  %v644 = vpack.c.b16 %v442, %v440
  %v645 = vpack.c.b16 %v445, %v443
  %v646 = vpack.c.b16 %v446, %v444
  %v647 = vpack.c.b16 %v449, %v447
  %v648 = vpack.c.b16 %v450, %v448
  %v649 = vpack.c.b16 %v453, %v451
  %v650 = vpack.c.b16 %v454, %v452
  %v651 = vpack.c.b16 %v457, %v455
  %v652 = vpack.c.b16 %v458, %v456
  %v653 = vpack.c.b16 %v461, %v459
  %v654 = vpack.c.b16 %v462, %v460
  %v655 = vpack.c.b16 %v465, %v463
  %v656 = vpack.c.b16 %v466, %v464
  %v657 = vpack.c.b16 %v469, %v467
  %v658 = vpack.c.b16 %v470, %v468
  %v659 = vpack.c.b16 %v473, %v471
  %v660 = vpack.c.b16 %v474, %v472
  %v661 = vpack.c.b16 %v477, %v475
  %v662 = vpack.c.b16 %v478, %v476
  %v663 = vpack.c.b16 %v481, %v479
  %v664 = vpack.c.b16 %v482, %v480
  %v665 = vpack.c.b16 %v485, %v483
  %v666 = vpack.c.b16 %v486, %v484
  %v667 = vpack.c.b16 %v489, %v487
  %v668 = vpack.c.b16 %v490, %v488
  %v669 = vpack.c.b16 %v493, %v491
  %v670 = vpack.c.b16 %v494, %v492
  %v671 = vpack.c.b16 %v497, %v495
  %v672 = vpack.c.b16 %v498, %v496
  %v673 = vpack.c.b16 %v501, %v499
  %v674 = vpack.c.b16 %v502, %v500
  %v675 = vpack.c.b16 %v505, %v503
  %v676 = vpack.c.b16 %v506, %v504
  %v677 = vpack.c.b16 %v509, %v507
  %v678 = vpack.c.b16 %v510, %v508
  %v679 = vpack.c.b16 %v513, %v511
  %v680 = vpack.c.b16 %v514, %v512
  %v681 = vpack.c.b16 %v517, %v515
  %v682 = vpack.c.b16 %v518, %v516
  %v683 = vpack.c.b16 %v521, %v519
  %v684 = vpack.c.b16 %v522, %v520
  %v685 = vpack.c.b16 %v525, %v523
  %v686 = vpack.c.b16 %v526, %v524
  %v687 = vpack.c.b16 %v529, %v527
  %v688 = vpack.c.b16 %v530, %v528
  %v689 = vpack.c.b16 %v533, %v531
  %v690 = vpack.c.b16 %v534, %v532
  %v691 = vpack.c.b16 %v537, %v535
  %v692 = vpack.c.b16 %v538, %v536
  %v693 = vpack.c.b16 %v541, %v539
  %v694 = vpack.c.b16 %v542, %v540
  %v695 = vpack.c.b16 %v545, %v543
  %v696 = vpack.c.b16 %v546, %v544
  %v697 = vpack.c.b16 %v549, %v547
  %v698 = vpack.c.b16 %v550, %v548
  %v699 = vpack.c.b16 %v553, %v551
  %v700 = vpack.c.b16 %v554, %v552
  %v701 = vpack.c.b16 %v557, %v555
  %v702 = vpack.c.b16 %v558, %v556
  %v703 = vpack.c.b16 %v561, %v559
  %v704 = vpack.c.b16 %v562, %v560
  %v705 = vpack.c.b16 %v565, %v563
  %v706 = vpack.c.b16 %v566, %v564
  %v707 = vpack.c.b16 %v569, %v567
  %v708 = vpack.c.b16 %v570, %v568
  %v709 = vpack.c.b16 %v573, %v571
  %v710 = vpack.c.b16 %v574, %v572
  %v711 = vpack.c.b16 %v577, %v575
  %v712 = vpack.c.b16 %v578, %v576
  %v713 = vpack.c.b16 %v581, %v579
  %v714 = vpack.c.b16 %v582, %v580
  %v715 = vpack.c.b16 %v585, %v583
  %v716 = vpack.c.b16 %v586, %v584
  %v717 = vpack.c.b16 %v589, %v587
  %v718 = vpack.c.b16 %v590, %v588
  %v719 = vpack.c.b16 %v593, %v591
  %v720 = vpack.c.b16 %v594, %v592
  %v721 = vpack.c.b16 %v597, %v595
  %v722 = vpack.c.b16 %v598, %v596
  %v723 = vpack.c.b16 %v601, %v599
  %v724 = vpack.c.b16 %v602, %v600
  %v725 = vpack.c.b16 %v605, %v603
  %v726 = vpack.c.b16 %v606, %v604
  %v727 = vpack.c.b16 %v609, %v607
  %v728 = vpack.c.b16 %v610, %v608
  %v729 = vpack.c.b16 %v613, %v611
  %v730 = vpack.c.b16 %v614, %v612
  %v731 = vpack.c.b16 %v617, %v615
  %v732 = vpack.c.b16 %v618, %v616
  %v733 = vpack.c.b16 %v621, %v619
  %v734 = vpack.c.b16 %v622, %v620
  %v735 = vpack.c.b16 %v625, %v623
  %v736 = vpack.c.b16 %v626, %v624
  %v737 = vpack.c.b16 %v629, %v627
  %v738 = vpack.c.b16 %v630, %v628
  %vm847 = vcmask 785408
  %v849 = vsel %vm847, %v261, 0
  %v852 = vsel %vm847, %v268, 0
  %v855 = vsel %vm847, %v275, 0
  %v858 = vsel %vm847, %v282, 0
  %860 = vmatprep.subr.bf16.mxu0 %v632
  %861 = vmatpush1.bf16.msra.mxu0 %v631
  %862 = vmatprep.subr.bf16.mxu0 %v634
  %863 = vmatpush1.bf16.msra.mxu0 %v633
  %864 = vmatprep.subr.bf16.mxu0 %v636
  %865 = vmatpush1.bf16.msra.mxu0 %v635
  %866 = vmatprep.subr.bf16.mxu0 %v638
  %867 = vmatpush1.bf16.msra.mxu0 %v637
  %868 = vmatprep.subr.bf16.mxu0 %v640
  %869 = vmatpush1.bf16.msra.mxu0 %v639
  %870 = vmatprep.subr.bf16.mxu0 %v642
  %871 = vmatpush1.bf16.msra.mxu0 %v641
  %872 = vmatprep.subr.bf16.mxu0 %v644
  %873 = vmatpush1.bf16.msra.mxu0 %v643
  %874 = vmatprep.subr.bf16.mxu0 %v646
  %875 = vmatpush1.bf16.msra.mxu0 %v645
  %876 = vmatprep.subr.bf16.mxu0 %v648
  %877 = vmatpush1.bf16.msra.mxu0 %v647
  %878 = vmatprep.subr.bf16.mxu0 %v650
  %879 = vmatpush1.bf16.msra.mxu0 %v649
  %880 = vmatprep.subr.bf16.mxu0 %v652
  %881 = vmatpush1.bf16.msra.mxu0 %v651
  %882 = vmatprep.subr.bf16.mxu0 %v654
  %883 = vmatpush1.bf16.msra.mxu0 %v653
  %884 = vmatprep.subr.bf16.mxu0 %v656
  %885 = vmatpush1.bf16.msra.mxu0 %v655
  %886 = vmatprep.subr.bf16.mxu0 %v658
  %887 = vmatpush1.bf16.msra.mxu0 %v657
  %888 = vmatprep.subr.bf16.mxu0 %v660
  %889 = vmatpush1.bf16.msra.mxu0 %v659
  %890 = vmatprep.subr.bf16.mxu0 %v662
  %891 = vmatpush1.bf16.msra.mxu0 %v661
  %892 = vmatprep.mubr.bf16.mxu0 %v256
  %893 = vmatmul.mubr.bf16.gmra.mrb[0].mxu0 %v255
  %v894 = vpop.f32.mrb[0].mxu0
  %v895 = vadd.f32 %v160, %v894
  %v896 = vpop.f32.mrb[0].mxu0
  %v897 = vadd.f32 %v164, %v896
  %v898 = vpop.f32.mrb[0].mxu0
  %v899 = vadd.f32 %v160, %v898
  %v900 = vpop.f32.mrb[0].mxu0
  %v901 = vadd.f32 %v164, %v900
  %902 = vmatprep.mubr.bf16.mxu0 %v263
  %903 = vmatmul.mubr.bf16.gmra.mrb[0].mxu0 %v262
  %v904 = vpop.f32.mrb[0].mxu0
  %v905 = vadd.f32 %v160, %v904
  %v906 = vpop.f32.mrb[0].mxu0
  %v907 = vadd.f32 %v164, %v906
  %v908 = vpop.f32.mrb[0].mxu0
  %v909 = vadd.f32 %v160, %v908
  %v910 = vpop.f32.mrb[0].mxu0
  %v911 = vadd.f32 %v164, %v910
  %912 = vmatprep.mubr.bf16.mxu0 %v270
  %913 = vmatmul.mubr.bf16.gmra.mrb[0].mxu0 %v269
  %v914 = vpop.f32.mrb[0].mxu0
  %v915 = vadd.f32 %v160, %v914
  %v916 = vpop.f32.mrb[0].mxu0
  %v917 = vadd.f32 %v164, %v916
  %v918 = vpop.f32.mrb[0].mxu0
  %v919 = vadd.f32 %v160, %v918
  %v920 = vpop.f32.mrb[0].mxu0
  %v921 = vadd.f32 %v164, %v920
  %922 = vmatprep.mubr.bf16.mxu0 %v277
  %923 = vmatmul.mubr.bf16.gmra.mrb[0].mxu0 %v276
  %v924 = vpop.f32.mrb[0].mxu0
  %v925 = vadd.f32 %v160, %v924
  %v926 = vpop.f32.mrb[0].mxu0
  %v927 = vadd.f32 %v164, %v926
  %v928 = vpop.f32.mrb[0].mxu0
  %v929 = vadd.f32 %v160, %v928
  %v930 = vpop.f32.mrb[0].mxu0
  %v931 = vadd.f32 %v164, %v930
  %932 = vdwg.mxu0
  %933 = vmatprep.subr.bf16.mxu0 %v664
  %934 = vmatpush1.bf16.msra.mxu0 %v663
  %935 = vmatprep.subr.bf16.mxu0 %v666
  %936 = vmatpush1.bf16.msra.mxu0 %v665
  %937 = vmatprep.subr.bf16.mxu0 %v668
  %938 = vmatpush1.bf16.msra.mxu0 %v667
  %939 = vmatprep.subr.bf16.mxu0 %v670
  %940 = vmatpush1.bf16.msra.mxu0 %v669
  %941 = vmatprep.subr.bf16.mxu0 %v672
  %942 = vmatpush1.bf16.msra.mxu0 %v671
  %943 = vmatprep.subr.bf16.mxu0 %v674
  %944 = vmatpush1.bf16.msra.mxu0 %v673
  %945 = vmatprep.subr.bf16.mxu0 %v676
  %946 = vmatpush1.bf16.msra.mxu0 %v675
  %947 = vmatprep.subr.bf16.mxu0 %v678
  %948 = vmatpush1.bf16.msra.mxu0 %v677
  %949 = vmatprep.subr.bf16.mxu0 %v680
  %950 = vmatpush1.bf16.msra.mxu0 %v679
  %951 = vmatprep.subr.bf16.mxu0 %v682
  %952 = vmatpush1.bf16.msra.mxu0 %v681
  %953 = vmatprep.subr.bf16.mxu0 %v684
  %954 = vmatpush1.bf16.msra.mxu0 %v683
  %955 = vmatprep.subr.bf16.mxu0 %v686
  %956 = vmatpush1.bf16.msra.mxu0 %v685
  %957 = vmatprep.subr.bf16.mxu0 %v688
  %958 = vmatpush1.bf16.msra.mxu0 %v687
  %959 = vmatprep.subr.bf16.mxu0 %v690
  %960 = vmatpush1.bf16.msra.mxu0 %v689
  %961 = vmatprep.subr.bf16.mxu0 %v692
  %962 = vmatpush1.bf16.msra.mxu0 %v691
  %963 = vmatprep.subr.bf16.mxu0 %v694
  %964 = vmatpush1.bf16.msra.mxu0 %v693
  %965 = vmatprep.mubr.bf16.mxu0 %v258
  %966 = vmatmul.mubr.bf16.gmra.mrb[0].mxu0 %v257
  %v967 = vpop.f32.mrb[0].mxu0
  %v968 = vadd.f32 %v895, %v967
  %v969 = vpop.f32.mrb[0].mxu0
  %v970 = vadd.f32 %v897, %v969
  %v971 = vpop.f32.mrb[0].mxu0
  %v972 = vadd.f32 %v899, %v971
  %v973 = vpop.f32.mrb[0].mxu0
  %v974 = vadd.f32 %v901, %v973
  %975 = vmatprep.mubr.bf16.mxu0 %v265
  %976 = vmatmul.mubr.bf16.gmra.mrb[0].mxu0 %v264
  %v977 = vpop.f32.mrb[0].mxu0
  %v978 = vadd.f32 %v905, %v977
  %v979 = vpop.f32.mrb[0].mxu0
  %v980 = vadd.f32 %v907, %v979
  %v981 = vpop.f32.mrb[0].mxu0
  %v982 = vadd.f32 %v909, %v981
  %v983 = vpop.f32.mrb[0].mxu0
  %v984 = vadd.f32 %v911, %v983
  %985 = vmatprep.mubr.bf16.mxu0 %v272
  %986 = vmatmul.mubr.bf16.gmra.mrb[0].mxu0 %v271
  %v987 = vpop.f32.mrb[0].mxu0
  %v988 = vadd.f32 %v915, %v987
  %v989 = vpop.f32.mrb[0].mxu0
  %v990 = vadd.f32 %v917, %v989
  %v991 = vpop.f32.mrb[0].mxu0
  %v992 = vadd.f32 %v919, %v991
  %v993 = vpop.f32.mrb[0].mxu0
  %v994 = vadd.f32 %v921, %v993
  %995 = vmatprep.mubr.bf16.mxu0 %v279
  %996 = vmatmul.mubr.bf16.gmra.mrb[0].mxu0 %v278
  %v997 = vpop.f32.mrb[0].mxu0
  %v998 = vadd.f32 %v925, %v997
  %v999 = vpop.f32.mrb[0].mxu0
  %v1000 = vadd.f32 %v927, %v999
  %v1001 = vpop.f32.mrb[0].mxu0
  %v1002 = vadd.f32 %v929, %v1001
  %v1003 = vpop.f32.mrb[0].mxu0
  %v1004 = vadd.f32 %v931, %v1003
  %1005 = vdwg.mxu0
  %1006 = vmatprep.subr.bf16.mxu0 %v696
  %1007 = vmatpush1.bf16.msra.mxu0 %v695
  %1008 = vmatprep.subr.bf16.mxu0 %v698
  %1009 = vmatpush1.bf16.msra.mxu0 %v697
  %1010 = vmatprep.subr.bf16.mxu0 %v700
  %1011 = vmatpush1.bf16.msra.mxu0 %v699
  %1012 = vmatprep.subr.bf16.mxu0 %v702
  %1013 = vmatpush1.bf16.msra.mxu0 %v701
  %1014 = vmatprep.subr.bf16.mxu0 %v704
  %1015 = vmatpush1.bf16.msra.mxu0 %v703
  %1016 = vmatprep.subr.bf16.mxu0 %v706
  %1017 = vmatpush1.bf16.msra.mxu0 %v705
  %1018 = vmatprep.subr.bf16.mxu0 %v708
  %1019 = vmatpush1.bf16.msra.mxu0 %v707
  %1020 = vmatprep.subr.bf16.mxu0 %v710
  %1021 = vmatpush1.bf16.msra.mxu0 %v709
  %1022 = vmatprep.subr.bf16.mxu0 %v712
  %1023 = vmatpush1.bf16.msra.mxu0 %v711
  %1024 = vmatprep.subr.bf16.mxu0 %v714
  %1025 = vmatpush1.bf16.msra.mxu0 %v713
  %1026 = vmatprep.subr.bf16.mxu0 %v716
  %1027 = vmatpush1.bf16.msra.mxu0 %v715
  %1028 = vmatprep.subr.bf16.mxu0 %v718
  %1029 = vmatpush1.bf16.msra.mxu0 %v717
  %1030 = vmatprep.subr.bf16.mxu0 %v720
  %1031 = vmatpush1.bf16.msra.mxu0 %v719
  %1032 = vmatprep.subr.bf16.mxu0 %v722
  %1033 = vmatpush1.bf16.msra.mxu0 %v721
  %1034 = vmatprep.subr.bf16.mxu0 %v724
  %1035 = vmatpush1.bf16.msra.mxu0 %v723
  %1036 = vmatprep.subr.bf16.mxu0 %v726
  %1037 = vmatpush1.bf16.msra.mxu0 %v725
  %1038 = vmatprep.mubr.bf16.mxu0 %v260
  %1039 = vmatmul.mubr.bf16.gmra.mrb[0].mxu0 %v259
  %v1040 = vpop.f32.mrb[0].mxu0
  %v1041 = vadd.f32 %v968, %v1040
  %v1042 = vpop.f32.mrb[0].mxu0
  %v1043 = vadd.f32 %v970, %v1042
  %v1044 = vpop.f32.mrb[0].mxu0
  %v1045 = vadd.f32 %v972, %v1044
  %v1046 = vpop.f32.mrb[0].mxu0
  %v1047 = vadd.f32 %v974, %v1046
  %1048 = vmatprep.mubr.bf16.mxu0 %v267
  %1049 = vmatmul.mubr.bf16.gmra.mrb[0].mxu0 %v266
  %v1050 = vpop.f32.mrb[0].mxu0
  %v1051 = vadd.f32 %v978, %v1050
  %v1052 = vpop.f32.mrb[0].mxu0
  %v1053 = vadd.f32 %v980, %v1052
  %v1054 = vpop.f32.mrb[0].mxu0
  %v1055 = vadd.f32 %v982, %v1054
  %v1056 = vpop.f32.mrb[0].mxu0
  %v1057 = vadd.f32 %v984, %v1056
  %1058 = vmatprep.mubr.bf16.mxu0 %v274
  %1059 = vmatmul.mubr.bf16.gmra.mrb[0].mxu0 %v273
  %v1060 = vpop.f32.mrb[0].mxu0
  %v1061 = vadd.f32 %v988, %v1060
  %v1062 = vpop.f32.mrb[0].mxu0
  %v1063 = vadd.f32 %v990, %v1062
  %v1064 = vpop.f32.mrb[0].mxu0
  %v1065 = vadd.f32 %v992, %v1064
  %v1066 = vpop.f32.mrb[0].mxu0
  %v1067 = vadd.f32 %v994, %v1066
  %1068 = vmatprep.mubr.bf16.mxu0 %v281
  %1069 = vmatmul.mubr.bf16.gmra.mrb[0].mxu0 %v280
  %v1070 = vpop.f32.mrb[0].mxu0
  %v1071 = vadd.f32 %v998, %v1070
  %v1072 = vpop.f32.mrb[0].mxu0
  %v1073 = vadd.f32 %v1000, %v1072
  %v1074 = vpop.f32.mrb[0].mxu0
  %v1075 = vadd.f32 %v1002, %v1074
  %v1076 = vpop.f32.mrb[0].mxu0
  %v1077 = vadd.f32 %v1004, %v1076
  %1078 = vdwg.mxu0
  %1079 = vmatprep.subr.bf16.mxu0 %v728
  %1080 = vmatpush1.bf16.msra.mxu0 %v727
  %1081 = vmatprep.subr.bf16.mxu0 %v730
  %1082 = vmatpush1.bf16.msra.mxu0 %v729
  %1083 = vmatprep.subr.bf16.mxu0 %v732
  %1084 = vmatpush1.bf16.msra.mxu0 %v731
  %1085 = vmatprep.subr.bf16.mxu0 %v734
  %1086 = vmatpush1.bf16.msra.mxu0 %v733
  %1087 = vmatprep.subr.bf16.mxu0 %v736
  %1088 = vmatpush1.bf16.msra.mxu0 %v735
  %1089 = vmatprep.subr.bf16.mxu0 %v738
  %1090 = vmatpush1.bf16.msra.mxu0 %v737
  %1091 = vmatprep.subr.bf16.mxu0 0
  %1092 = vmatpush1.bf16.msra.mxu0 0
  %1093 = vmatprep.subr.bf16.mxu0 0
  %1094 = vmatpush1.bf16.msra.mxu0 0
  %1095 = vmatprep.subr.bf16.mxu0 0
  %1096 = vmatpush1.bf16.msra.mxu0 0
  %1097 = vmatprep.subr.bf16.mxu0 0
  %1098 = vmatpush1.bf16.msra.mxu0 0
  %1099 = vmatprep.subr.bf16.mxu0 0
  %1100 = vmatpush1.bf16.msra.mxu0 0
  %1101 = vmatprep.subr.bf16.mxu0 0
  %1102 = vmatpush1.bf16.msra.mxu0 0
  %1103 = vmatprep.subr.bf16.mxu0 0
  %1104 = vmatpush1.bf16.msra.mxu0 0
  %1105 = vmatprep.subr.bf16.mxu0 0
  %1106 = vmatpush1.bf16.msra.mxu0 0
  %1107 = vmatprep.subr.bf16.mxu0 0
  %1108 = vmatpush1.bf16.msra.mxu0 0
  %1109 = vmatprep.subr.bf16.mxu0 0
  %1110 = vmatpush1.bf16.msra.mxu0 0
  %1111 = vmatprep.mubr.bf16.mxu0 0
  %1112 = vmatmul.mubr.bf16.gmra.mrb[0].mxu0 %v849
  %v1113 = vpop.f32.mrb[0].mxu0
  %v1114 = vadd.f32 %v1041, %v1113
  %v1115 = vpop.f32.mrb[0].mxu0
  %v1116 = vadd.f32 %v1043, %v1115
  %v1117 = vpop.f32.mrb[0].mxu0
  %v1118 = vadd.f32 %v1045, %v1117
  %v1119 = vpop.f32.mrb[0].mxu0
  %v1120 = vadd.f32 %v1047, %v1119
  %1121 = vmatprep.mubr.bf16.mxu0 0
  %1122 = vmatmul.mubr.bf16.gmra.mrb[0].mxu0 %v852
  %v1123 = vpop.f32.mrb[0].mxu0
  %v1124 = vadd.f32 %v1051, %v1123
  %v1125 = vpop.f32.mrb[0].mxu0
  %v1126 = vadd.f32 %v1053, %v1125
  %v1127 = vpop.f32.mrb[0].mxu0
  %v1128 = vadd.f32 %v1055, %v1127
  %v1129 = vpop.f32.mrb[0].mxu0
  %v1130 = vadd.f32 %v1057, %v1129
  %1131 = vmatprep.mubr.bf16.mxu0 0
  %1132 = vmatmul.mubr.bf16.gmra.mrb[0].mxu0 %v855
  %v1133 = vpop.f32.mrb[0].mxu0
  %v1134 = vadd.f32 %v1061, %v1133
  %v1135 = vpop.f32.mrb[0].mxu0
  %v1136 = vadd.f32 %v1063, %v1135
  %v1137 = vpop.f32.mrb[0].mxu0
  %v1138 = vadd.f32 %v1065, %v1137
  %v1139 = vpop.f32.mrb[0].mxu0
  %v1140 = vadd.f32 %v1067, %v1139
  %1141 = vmatprep.mubr.bf16.mxu0 0
  %1142 = vmatmul.mubr.bf16.gmra.mrb[0].mxu0 %v858
  %v1143 = vpop.f32.mrb[0].mxu0
  %v1144 = vadd.f32 %v1071, %v1143
  %v1145 = vpop.f32.mrb[0].mxu0
  %v1146 = vadd.f32 %v1073, %v1145
  %v1147 = vpop.f32.mrb[0].mxu0
  %v1148 = vadd.f32 %v1075, %v1147
  %v1149 = vpop.f32.mrb[0].mxu0
  %v1150 = vadd.f32 %v1077, %v1149
  %1151 = vdwg.mxu0
  %v1152 = vmax.f32 %v1114, 0.0
  %v1153 = vmax.f32 %v1116, 0.0
  %v1154 = vmax.f32 %v1118, 0.0
  %v1155 = vmax.f32 %v1120, 0.0
  %v1156 = vmax.f32 %v1124, 0.0
  %v1157 = vmax.f32 %v1126, 0.0
  %v1158 = vmax.f32 %v1128, 0.0
  %v1159 = vmax.f32 %v1130, 0.0
  %v1160 = vmax.f32 %v1134, 0.0
  %v1161 = vmax.f32 %v1136, 0.0
  %v1162 = vmax.f32 %v1138, 0.0
  %v1163 = vmax.f32 %v1140, 0.0
  %v1164 = vmax.f32 %v1144, 0.0
  %v1165 = vmax.f32 %v1146, 0.0
  %v1166 = vmax.f32 %v1148, 0.0
  %v1167 = vmax.f32 %v1150, 0.0
  %v1168 = vpack.c.bf16 %v1154, %v1152
  %v1169 = vpack.c.bf16 %v1155, %v1153
  %v1170 = vpack.c.bf16 %v1158, %v1156
  %v1171 = vpack.c.bf16 %v1159, %v1157
  %v1172 = vpack.c.bf16 %v1162, %v1160
  %v1173 = vpack.c.bf16 %v1163, %v1161
  %v1174 = vpack.c.bf16 %v1166, %v1164
  %v1175 = vpack.c.bf16 %v1167, %v1165
  %v1184 = vunpack.c.l.b16 %v1168
  %v1185 = vunpack.c.l.b16 %v1169
  %v1186 = vunpack.c.h.b16 %v1168
  %v1187 = vunpack.c.h.b16 %v1169
  %v1188 = vunpack.c.l.b16 %v1170
  %v1189 = vunpack.c.l.b16 %v1171
  %v1190 = vunpack.c.h.b16 %v1170
  %v1191 = vunpack.c.h.b16 %v1171
  %v1192 = vunpack.c.l.b16 %v1172
  %v1193 = vunpack.c.l.b16 %v1173
  %v1194 = vunpack.c.h.b16 %v1172
  %v1195 = vunpack.c.h.b16 %v1173
  %v1196 = vunpack.c.l.b16 %v1174
  %v1197 = vunpack.c.l.b16 %v1175
  %v1198 = vunpack.c.h.b16 %v1174
  %v1199 = vunpack.c.h.b16 %v1175
  %v1200 = vpack.c.b16 %v1185, %v1184
  %v1201 = vpack.c.b16 %v1187, %v1186
  %v1202 = vpack.c.b16 %v1189, %v1188
  %v1203 = vpack.c.b16 %v1191, %v1190
  %v1204 = vpack.c.b16 %v1193, %v1192
  %v1205 = vpack.c.b16 %v1195, %v1194
  %v1206 = vpack.c.b16 %v1197, %v1196
  %v1207 = vpack.c.b16 %v1199, %v1198
  %1216 = vst [vmem:[%s3] sm:$0xff] %v1200
  %1217 = vst [vmem:[%s3 + $0x8] sm:$0xff] %v1201
  %1218 = vst [vmem:[%s3 + $0x10] sm:$0xff] %v1202
  %1219 = vst [vmem:[%s3 + $0x18] sm:$0xff] %v1203
  %1220 = vst [vmem:[%s3 + $0x20] sm:$0xff] %v1204
  %1221 = vst [vmem:[%s3 + $0x28] sm:$0xff] %v1205
  %1222 = vst [vmem:[%s3 + $0x30] sm:$0xff] %v1206
  %1223 = vst [vmem:[%s3 + $0x38] sm:$0xff] %v1207
  // Predicated region
  $region14: #{decoder_forward.26} parent=0 // pred_check
    _
  $region15: #{decoder_forward.26} parent=0 // pred_check_branch
    %1225 = sbr.rel (0) target = $region17
  $region16: #{decoder_forward.26} parent=0 // pred_region
    _
  $region17: #{decoder_forward.26} parent=0 // pred_fallthru
    _
  // Predicated region
  $region18: #{decoder_forward.26} parent=0 // pred_check
    _
  $region19: #{decoder_forward.26} parent=0 // pred_check_branch
    %1227 = sbr.rel (0) target = $region21
  $region20: #{decoder_forward.26} parent=0 // pred_region
    _
  $region21: #{decoder_forward.26} parent=0 // pred_fallthru
    _

// kernel: tile.158
$region0: #{tile.158}
  #allocation0 [shape = 's32[1]{0}', space=sflag, size = 0x4, scoped, tag = 'scoped memory for tile.158']
  %s0 = inlined_call_operand.vmem [shape: f32[3], index: 0, kind: input, shape index: {}]
  %s1 = inlined_call_operand.vmem [shape: f32[4,3], index: 1, kind: output, shape index: {}]
  // Predicated region
  $region2: #{tile.158} parent=0 // pred_check
    _
  $region3: #{tile.158} parent=0 // pred_check_branch
    %3 = sbr.rel (0) target = $region5
  $region4: #{tile.158} parent=0 // pred_region
    _
  $region5: #{tile.158} parent=0 // pred_fallthru
    _
  %v4 = vld [vmem:[%s0] ss:$0 sm:$0xff]
  %5 = vst [vmem:[%s1] sm:$0xf] %v4

// kernel: tile.159
$region0: #{tile.159}
  %s0 = inlined_call_operand.vmem [shape: f32[4,3], index: 0, kind: input, shape index: {}]
  %s1 = inlined_call_operand.vmem [shape: f32[1,12], index: 1, kind: output, shape index: {}]
  $region1: #{tile.159} parent=0
    #allocation0 [shape = 'u8[4096]{0}', space=vmem, size = 0x1000, scoped, tag = 'scoped mem for output reshape']
    #allocation1 [shape = 'u8[4096]{0}', space=vmem, size = 0x1000, scoped, tag = 'scoped mem for input reshape']
    %s3 = sshllo.u32 0, 4
    %v4 = vld [vmem:[%s0] sm:%s3]
    %5 = vst [vmem:[#allocation1] sm:%s3] %v4
    %v6 = vld [vmem:[#allocation1] sm:$0x1]
    %vm7 = vcmask 23552
    %8 = vst.msk [vmem:[#allocation0] sm:$0x1] %vm7, %v6
    %s9 = scalar_lea.vmem [#allocation1], 3
    %v10 = vld [vmem:[%s9] sm:$0x1]
    %11 = vrot.lane.b32.xlu0 %v10, 9
    %v12 = vpop.permute.xlu0 %11
    %vm13 = vcmask 97352
    %14 = vst.msk [vmem:[#allocation0] sm:$0x1] %vm13, %v12
    %s15 = scalar_lea.vmem [#allocation1], 2
    %v16 = vld [vmem:[%s15] sm:$0x1]
    %17 = vrot.lane.b32.xlu0 %v16, 6
    %v18 = vpop.permute.xlu0 %17
    %vm19 = vcmask 72752
    %20 = vst.msk [vmem:[#allocation0] sm:$0x1] %vm19, %v18
    %s21 = scalar_lea.vmem [#allocation1], 1
    %v22 = vld [vmem:[%s21] sm:$0x1]
    %23 = vrot.lane.b32.xlu0 %v22, 3
    %v24 = vpop.permute.xlu0 %23
    %vm25 = vcmask 48152
    %26 = vst.msk [vmem:[#allocation0] sm:$0x1] %vm25, %v24
    %s28 = sshllo.u32 0, 1
    %v30 = vld [vmem:[#allocation0] sm:%s28]
    %s31 = sshllo.u32 0, 1
    %32 = vst [vmem:[%s1] sm:%s31] %v30

// kernel: decoder_forward.27
$region0: #{decoder_forward.27}
  #allocation0 [shape = 'u32[]', space=smem, size = 0x4, offset = 0x4, fixed_abs, tag = 'smem constant byte address 0x4 - core index']
  #allocation1 [shape = 'u32[144,128]{1,0:T(1,128)}', space=vmem, size = 0x12000, scoped, tag = 'internal scratch']
  %s0 = inlined_call_operand.vmem [shape: bf16[512,864], index: 0, kind: input, shape index: {}]
  %s1 = inlined_call_operand.vmem [shape: bf16[864,12], index: 1, kind: input, shape index: {}]
  %s2 = inlined_call_operand.vmem [shape: f32[1,12], index: 2, kind: input, shape index: {}]
  %s3 = inlined_call_operand.vmem [shape: f32[512,12], index: 3, kind: output, shape index: {}]
  %s4 = sld [smem:[#allocation0]]
  $region22: #{decoder_forward.27} parent=0
    _
  %s6 = ssub.s32 1, %s4
  %s7 = scalar_select 0, %s6, %s4
  // Predicated region
  $region2: #{decoder_forward.27} parent=0 // pred_check
    _
  $region3: #{decoder_forward.27} parent=0 // pred_check_branch
    %9 = sbr.rel (0) target = $region5
  $region4: #{decoder_forward.27} parent=0 // pred_region
    _
  $region5: #{decoder_forward.27} parent=0 // pred_fallthru
    _
  // Predicated region
  $region6: #{decoder_forward.27} parent=0 // pred_check
    _
  $region7: #{decoder_forward.27} parent=0 // pred_check_branch
    %11 = sbr.rel (0) target = $region9
  $region8: #{decoder_forward.27} parent=0 // pred_region
    _
  $region9: #{decoder_forward.27} parent=0 // pred_fallthru
    _
  // Predicated region
  $region10: #{decoder_forward.27} parent=0 // pred_check
    _
  $region11: #{decoder_forward.27} parent=0 // pred_check_branch
    %13 = sbr.rel (0) target = $region13
  $region12: #{decoder_forward.27} parent=0 // pred_region
    _
  $region13: #{decoder_forward.27} parent=0 // pred_fallthru
    _
  %v15 = vld [vmem:[%s0] sm:$0xff]
  %v16 = vld [vmem:[%s0 + $0x8] sm:$0xff]
  %v17 = vld [vmem:[%s0 + $0x10] sm:$0xff]
  %v18 = vld [vmem:[%s0 + $0x18] sm:$0xf]
  %v19 = vld [vmem:[%s0 + $0x1c] sm:$0xff]
  %v20 = vld [vmem:[%s0 + $0x24] sm:$0xff]
  %v21 = vld [vmem:[%s0 + $0x2c] sm:$0xff]
  %v22 = vld [vmem:[%s0 + $0x34] sm:$0xf]
  %v23 = vld [vmem:[%s0 + $0x38] sm:$0xff]
  %v24 = vld [vmem:[%s0 + $0x40] sm:$0xff]
  %v25 = vld [vmem:[%s0 + $0x48] sm:$0xff]
  %v26 = vld [vmem:[%s0 + $0x50] sm:$0xf]
  %v27 = vld [vmem:[%s0 + $0x54] sm:$0xff]
  %v28 = vld [vmem:[%s0 + $0x5c] sm:$0xff]
  %v29 = vld [vmem:[%s0 + $0x64] sm:$0xff]
  %v30 = vld [vmem:[%s0 + $0x6c] sm:$0xf]
  %v31 = vld [vmem:[%s0 + $0x70] sm:$0xff]
  %v32 = vld [vmem:[%s0 + $0x78] sm:$0xff]
  %v33 = vld [vmem:[%s0 + $0x80] sm:$0xff]
  %v34 = vld [vmem:[%s0 + $0x88] sm:$0xf]
  %v35 = vld [vmem:[%s0 + $0x8c] sm:$0xff]
  %v36 = vld [vmem:[%s0 + $0x94] sm:$0xff]
  %v37 = vld [vmem:[%s0 + $0x9c] sm:$0xff]
  %v38 = vld [vmem:[%s0 + $0xa4] sm:$0xf]
  %v39 = vld [vmem:[%s0 + $0xa8] sm:$0xff]
  %v40 = vld [vmem:[%s0 + $0xb0] sm:$0xff]
  %v41 = vld [vmem:[%s0 + $0xb8] sm:$0xff]
  %v42 = vld [vmem:[%s0 + $0xc0] sm:$0xf]
  %v43 = vld [vmem:[%s0 + $0xc4] sm:$0xff]
  %v44 = vld [vmem:[%s0 + $0xcc] sm:$0xff]
  %v45 = vld [vmem:[%s0 + $0xd4] sm:$0xff]
  %v46 = vld [vmem:[%s0 + $0xdc] sm:$0xf]
  %v47 = vld [vmem:[%s0 + $0xe0] sm:$0xff]
  %v48 = vld [vmem:[%s0 + $0xe8] sm:$0xff]
  %v49 = vld [vmem:[%s0 + $0xf0] sm:$0xff]
  %v50 = vld [vmem:[%s0 + $0xf8] sm:$0xf]
  %v51 = vld [vmem:[%s0 + $0xfc] sm:$0xff]
  %v52 = vld [vmem:[%s0 + $0x104] sm:$0xff]
  %v53 = vld [vmem:[%s0 + $0x10c] sm:$0xff]
  %v54 = vld [vmem:[%s0 + $0x114] sm:$0xf]
  %v55 = vld [vmem:[%s0 + $0x118] sm:$0xff]
  %v56 = vld [vmem:[%s0 + $0x120] sm:$0xff]
  %v57 = vld [vmem:[%s0 + $0x128] sm:$0xff]
  %v58 = vld [vmem:[%s0 + $0x130] sm:$0xf]
  %v59 = vld [vmem:[%s0 + $0x134] sm:$0xff]
  %v60 = vld [vmem:[%s0 + $0x13c] sm:$0xff]
  %v61 = vld [vmem:[%s0 + $0x144] sm:$0xff]
  %v62 = vld [vmem:[%s0 + $0x14c] sm:$0xf]
  %v63 = vld [vmem:[%s0 + $0x150] sm:$0xff]
  %v64 = vld [vmem:[%s0 + $0x158] sm:$0xff]
  %v65 = vld [vmem:[%s0 + $0x160] sm:$0xff]
  %v66 = vld [vmem:[%s0 + $0x168] sm:$0xf]
  %v67 = vld [vmem:[%s0 + $0x16c] sm:$0xff]
  %v68 = vld [vmem:[%s0 + $0x174] sm:$0xff]
  %v69 = vld [vmem:[%s0 + $0x17c] sm:$0xff]
  %v70 = vld [vmem:[%s0 + $0x184] sm:$0xf]
  %v71 = vld [vmem:[%s0 + $0x188] sm:$0xff]
  %v72 = vld [vmem:[%s0 + $0x190] sm:$0xff]
  %v73 = vld [vmem:[%s0 + $0x198] sm:$0xff]
  %v74 = vld [vmem:[%s0 + $0x1a0] sm:$0xf]
  %v75 = vld [vmem:[%s0 + $0x1a4] sm:$0xff]
  %v76 = vld [vmem:[%s0 + $0x1ac] sm:$0xff]
  %v77 = vld [vmem:[%s0 + $0x1b4] sm:$0xff]
  %v78 = vld [vmem:[%s0 + $0x1bc] sm:$0xf]
  %v79 = vld [vmem:[%s0 + $0x1c0] sm:$0xff]
  %v80 = vld [vmem:[%s0 + $0x1c8] sm:$0xff]
  %v81 = vld [vmem:[%s0 + $0x1d0] sm:$0xff]
  %v82 = vld [vmem:[%s0 + $0x1d8] sm:$0xf]
  %v83 = vld [vmem:[%s0 + $0x1dc] sm:$0xff]
  %v84 = vld [vmem:[%s0 + $0x1e4] sm:$0xff]
  %v85 = vld [vmem:[%s0 + $0x1ec] sm:$0xff]
  %v86 = vld [vmem:[%s0 + $0x1f4] sm:$0xf]
  %v87 = vld [vmem:[%s0 + $0x1f8] sm:$0xff]
  %v88 = vld [vmem:[%s0 + $0x200] sm:$0xff]
  %v89 = vld [vmem:[%s0 + $0x208] sm:$0xff]
  %v90 = vld [vmem:[%s0 + $0x210] sm:$0xf]
  %v91 = vld [vmem:[%s0 + $0x214] sm:$0xff]
  %v92 = vld [vmem:[%s0 + $0x21c] sm:$0xff]
  %v93 = vld [vmem:[%s0 + $0x224] sm:$0xff]
  %v94 = vld [vmem:[%s0 + $0x22c] sm:$0xf]
  %v95 = vld [vmem:[%s0 + $0x230] sm:$0xff]
  %v96 = vld [vmem:[%s0 + $0x238] sm:$0xff]
  %v97 = vld [vmem:[%s0 + $0x240] sm:$0xff]
  %v98 = vld [vmem:[%s0 + $0x248] sm:$0xf]
  %v99 = vld [vmem:[%s0 + $0x24c] sm:$0xff]
  %v100 = vld [vmem:[%s0 + $0x254] sm:$0xff]
  %v101 = vld [vmem:[%s0 + $0x25c] sm:$0xff]
  %v102 = vld [vmem:[%s0 + $0x264] sm:$0xf]
  %v103 = vld [vmem:[%s0 + $0x268] sm:$0xff]
  %v104 = vld [vmem:[%s0 + $0x270] sm:$0xff]
  %v105 = vld [vmem:[%s0 + $0x278] sm:$0xff]
  %v106 = vld [vmem:[%s0 + $0x280] sm:$0xf]
  %v107 = vld [vmem:[%s0 + $0x284] sm:$0xff]
  %v108 = vld [vmem:[%s0 + $0x28c] sm:$0xff]
  %v109 = vld [vmem:[%s0 + $0x294] sm:$0xff]
  %v110 = vld [vmem:[%s0 + $0x29c] sm:$0xf]
  %v111 = vld [vmem:[%s0 + $0x2a0] sm:$0xff]
  %v112 = vld [vmem:[%s0 + $0x2a8] sm:$0xff]
  %v113 = vld [vmem:[%s0 + $0x2b0] sm:$0xff]
  %v114 = vld [vmem:[%s0 + $0x2b8] sm:$0xf]
  %v115 = vld [vmem:[%s0 + $0x2bc] sm:$0xff]
  %v116 = vld [vmem:[%s0 + $0x2c4] sm:$0xff]
  %v117 = vld [vmem:[%s0 + $0x2cc] sm:$0xff]
  %v118 = vld [vmem:[%s0 + $0x2d4] sm:$0xf]
  %v119 = vld [vmem:[%s0 + $0x2d8] sm:$0xff]
  %v120 = vld [vmem:[%s0 + $0x2e0] sm:$0xff]
  %v121 = vld [vmem:[%s0 + $0x2e8] sm:$0xff]
  %v122 = vld [vmem:[%s0 + $0x2f0] sm:$0xf]
  %v123 = vld [vmem:[%s0 + $0x2f4] sm:$0xff]
  %v124 = vld [vmem:[%s0 + $0x2fc] sm:$0xff]
  %v125 = vld [vmem:[%s0 + $0x304] sm:$0xff]
  %v126 = vld [vmem:[%s0 + $0x30c] sm:$0xf]
  %v127 = vld [vmem:[%s0 + $0x310] sm:$0xff]
  %v128 = vld [vmem:[%s0 + $0x318] sm:$0xff]
  %v129 = vld [vmem:[%s0 + $0x320] sm:$0xff]
  %v130 = vld [vmem:[%s0 + $0x328] sm:$0xf]
  %v131 = vld [vmem:[%s0 + $0x32c] sm:$0xff]
  %v132 = vld [vmem:[%s0 + $0x334] sm:$0xff]
  %v133 = vld [vmem:[%s0 + $0x33c] sm:$0xff]
  %v134 = vld [vmem:[%s0 + $0x344] sm:$0xf]
  %v135 = vld [vmem:[%s0 + $0x348] sm:$0xff]
  %v136 = vld [vmem:[%s0 + $0x350] sm:$0xff]
  %v137 = vld [vmem:[%s0 + $0x358] sm:$0xff]
  %v138 = vld [vmem:[%s0 + $0x360] sm:$0xf]
  %v139 = vld [vmem:[%s0 + $0x364] sm:$0xff]
  %v140 = vld [vmem:[%s0 + $0x36c] sm:$0xff]
  %v141 = vld [vmem:[%s0 + $0x374] sm:$0xff]
  %v142 = vld [vmem:[%s0 + $0x37c] sm:$0xf]
  %v143 = vld [vmem:[%s0 + $0x380] sm:$0xff]
  %v144 = vld [vmem:[%s0 + $0x388] sm:$0xff]
  %v145 = vld [vmem:[%s0 + $0x390] sm:$0xff]
  %v146 = vld [vmem:[%s0 + $0x398] sm:$0xf]
  %v147 = vld [vmem:[%s0 + $0x39c] sm:$0xff]
  %v148 = vld [vmem:[%s0 + $0x3a4] sm:$0xff]
  %v149 = vld [vmem:[%s0 + $0x3ac] sm:$0xff]
  %v150 = vld [vmem:[%s0 + $0x3b4] sm:$0xf]
  %v151 = vld [vmem:[%s0 + $0x3b8] sm:$0xff]
  %v152 = vld [vmem:[%s0 + $0x3c0] sm:$0xff]
  %v153 = vld [vmem:[%s0 + $0x3c8] sm:$0xff]
  %v154 = vld [vmem:[%s0 + $0x3d0] sm:$0xf]
  %v155 = vld [vmem:[%s0 + $0x3d4] sm:$0xff]
  %v156 = vld [vmem:[%s0 + $0x3dc] sm:$0xff]
  %v157 = vld [vmem:[%s0 + $0x3e4] sm:$0xff]
  %v158 = vld [vmem:[%s0 + $0x3ec] sm:$0xf]
  %v159 = vld [vmem:[%s0 + $0x3f0] sm:$0xff]
  %v160 = vld [vmem:[%s0 + $0x3f8] sm:$0xff]
  %v161 = vld [vmem:[%s0 + $0x400] sm:$0xff]
  %v162 = vld [vmem:[%s0 + $0x408] sm:$0xf]
  %v163 = vld [vmem:[%s0 + $0x40c] sm:$0xff]
  %v164 = vld [vmem:[%s0 + $0x414] sm:$0xff]
  %v165 = vld [vmem:[%s0 + $0x41c] sm:$0xff]
  %v166 = vld [vmem:[%s0 + $0x424] sm:$0xf]
  %v167 = vld [vmem:[%s0 + $0x428] sm:$0xff]
  %v168 = vld [vmem:[%s0 + $0x430] sm:$0xff]
  %v169 = vld [vmem:[%s0 + $0x438] sm:$0xff]
  %v170 = vld [vmem:[%s0 + $0x440] sm:$0xf]
  %v171 = vld [vmem:[%s0 + $0x444] sm:$0xff]
  %v172 = vld [vmem:[%s0 + $0x44c] sm:$0xff]
  %v173 = vld [vmem:[%s0 + $0x454] sm:$0xff]
  %v174 = vld [vmem:[%s0 + $0x45c] sm:$0xf]
  %v175 = vld [vmem:[%s0 + $0x460] sm:$0xff]
  %v176 = vld [vmem:[%s0 + $0x468] sm:$0xff]
  %v177 = vld [vmem:[%s0 + $0x470] sm:$0xff]
  %v178 = vld [vmem:[%s0 + $0x478] sm:$0xf]
  %v179 = vld [vmem:[%s0 + $0x47c] sm:$0xff]
  %v180 = vld [vmem:[%s0 + $0x484] sm:$0xff]
  %v181 = vld [vmem:[%s0 + $0x48c] sm:$0xff]
  %v182 = vld [vmem:[%s0 + $0x494] sm:$0xf]
  %v183 = vld [vmem:[%s0 + $0x498] sm:$0xff]
  %v184 = vld [vmem:[%s0 + $0x4a0] sm:$0xff]
  %v185 = vld [vmem:[%s0 + $0x4a8] sm:$0xff]
  %v186 = vld [vmem:[%s0 + $0x4b0] sm:$0xf]
  %v187 = vld [vmem:[%s0 + $0x4b4] sm:$0xff]
  %v188 = vld [vmem:[%s0 + $0x4bc] sm:$0xff]
  %v189 = vld [vmem:[%s0 + $0x4c4] sm:$0xff]
  %v190 = vld [vmem:[%s0 + $0x4cc] sm:$0xf]
  %v191 = vld [vmem:[%s0 + $0x4d0] sm:$0xff]
  %v192 = vld [vmem:[%s0 + $0x4d8] sm:$0xff]
  %v193 = vld [vmem:[%s0 + $0x4e0] sm:$0xff]
  %v194 = vld [vmem:[%s0 + $0x4e8] sm:$0xf]
  %v195 = vld [vmem:[%s0 + $0x4ec] sm:$0xff]
  %v196 = vld [vmem:[%s0 + $0x4f4] sm:$0xff]
  %v197 = vld [vmem:[%s0 + $0x4fc] sm:$0xff]
  %v198 = vld [vmem:[%s0 + $0x504] sm:$0xf]
  %v199 = vld [vmem:[%s0 + $0x508] sm:$0xff]
  %v200 = vld [vmem:[%s0 + $0x510] sm:$0xff]
  %v201 = vld [vmem:[%s0 + $0x518] sm:$0xff]
  %v202 = vld [vmem:[%s0 + $0x520] sm:$0xf]
  %v203 = vld [vmem:[%s0 + $0x524] sm:$0xff]
  %v204 = vld [vmem:[%s0 + $0x52c] sm:$0xff]
  %v205 = vld [vmem:[%s0 + $0x534] sm:$0xff]
  %v206 = vld [vmem:[%s0 + $0x53c] sm:$0xf]
  %v207 = vld [vmem:[%s0 + $0x540] sm:$0xff]
  %v208 = vld [vmem:[%s0 + $0x548] sm:$0xff]
  %v209 = vld [vmem:[%s0 + $0x550] sm:$0xff]
  %v210 = vld [vmem:[%s0 + $0x558] sm:$0xf]
  %v211 = vld [vmem:[%s0 + $0x55c] sm:$0xff]
  %v212 = vld [vmem:[%s0 + $0x564] sm:$0xff]
  %v213 = vld [vmem:[%s0 + $0x56c] sm:$0xff]
  %v214 = vld [vmem:[%s0 + $0x574] sm:$0xf]
  %v215 = vld [vmem:[%s0 + $0x578] sm:$0xff]
  %v216 = vld [vmem:[%s0 + $0x580] sm:$0xff]
  %v217 = vld [vmem:[%s0 + $0x588] sm:$0xff]
  %v218 = vld [vmem:[%s0 + $0x590] sm:$0xf]
  %v219 = vld [vmem:[%s0 + $0x594] sm:$0xff]
  %v220 = vld [vmem:[%s0 + $0x59c] sm:$0xff]
  %v221 = vld [vmem:[%s0 + $0x5a4] sm:$0xff]
  %v222 = vld [vmem:[%s0 + $0x5ac] sm:$0xf]
  %v223 = vld [vmem:[%s0 + $0x5b0] sm:$0xff]
  %v224 = vld [vmem:[%s0 + $0x5b8] sm:$0xff]
  %v225 = vld [vmem:[%s0 + $0x5c0] sm:$0xff]
  %v226 = vld [vmem:[%s0 + $0x5c8] sm:$0xf]
  %v227 = vld [vmem:[%s0 + $0x5cc] sm:$0xff]
  %v228 = vld [vmem:[%s0 + $0x5d4] sm:$0xff]
  %v229 = vld [vmem:[%s0 + $0x5dc] sm:$0xff]
  %v230 = vld [vmem:[%s0 + $0x5e4] sm:$0xf]
  %v231 = vld [vmem:[%s0 + $0x5e8] sm:$0xff]
  %v232 = vld [vmem:[%s0 + $0x5f0] sm:$0xff]
  %v233 = vld [vmem:[%s0 + $0x5f8] sm:$0xff]
  %v234 = vld [vmem:[%s0 + $0x600] sm:$0xf]
  %v235 = vld [vmem:[%s0 + $0x604] sm:$0xff]
  %v236 = vld [vmem:[%s0 + $0x60c] sm:$0xff]
  %v237 = vld [vmem:[%s0 + $0x614] sm:$0xff]
  %v238 = vld [vmem:[%s0 + $0x61c] sm:$0xf]
  %v239 = vld [vmem:[%s0 + $0x620] sm:$0xff]
  %v240 = vld [vmem:[%s0 + $0x628] sm:$0xff]
  %v241 = vld [vmem:[%s0 + $0x630] sm:$0xff]
  %v242 = vld [vmem:[%s0 + $0x638] sm:$0xf]
  %v243 = vld [vmem:[%s0 + $0x63c] sm:$0xff]
  %v244 = vld [vmem:[%s0 + $0x644] sm:$0xff]
  %v245 = vld [vmem:[%s0 + $0x64c] sm:$0xff]
  %v246 = vld [vmem:[%s0 + $0x654] sm:$0xf]
  %v247 = vld [vmem:[%s0 + $0x658] sm:$0xff]
  %v248 = vld [vmem:[%s0 + $0x660] sm:$0xff]
  %v249 = vld [vmem:[%s0 + $0x668] sm:$0xff]
  %v250 = vld [vmem:[%s0 + $0x670] sm:$0xf]
  %v251 = vld [vmem:[%s0 + $0x674] sm:$0xff]
  %v252 = vld [vmem:[%s0 + $0x67c] sm:$0xff]
  %v253 = vld [vmem:[%s0 + $0x684] sm:$0xff]
  %v254 = vld [vmem:[%s0 + $0x68c] sm:$0xf]
  %v255 = vld [vmem:[%s0 + $0x690] sm:$0xff]
  %v256 = vld [vmem:[%s0 + $0x698] sm:$0xff]
  %v257 = vld [vmem:[%s0 + $0x6a0] sm:$0xff]
  %v258 = vld [vmem:[%s0 + $0x6a8] sm:$0xf]
  %v259 = vld [vmem:[%s0 + $0x6ac] sm:$0xff]
  %v260 = vld [vmem:[%s0 + $0x6b4] sm:$0xff]
  %v261 = vld [vmem:[%s0 + $0x6bc] sm:$0xff]
  %v262 = vld [vmem:[%s0 + $0x6c4] sm:$0xf]
  %v263 = vld [vmem:[%s0 + $0x6c8] sm:$0xff]
  %v264 = vld [vmem:[%s0 + $0x6d0] sm:$0xff]
  %v265 = vld [vmem:[%s0 + $0x6d8] sm:$0xff]
  %v266 = vld [vmem:[%s0 + $0x6e0] sm:$0xf]
  %v267 = vld [vmem:[%s0 + $0x6e4] sm:$0xff]
  %v268 = vld [vmem:[%s0 + $0x6ec] sm:$0xff]
  %v269 = vld [vmem:[%s0 + $0x6f4] sm:$0xff]
  %v270 = vld [vmem:[%s0 + $0x6fc] sm:$0xf]
  %v271 = vld [vmem:[%s1] sm:$0xf]
  %v272 = vld [vmem:[%s1 + $0x4] sm:$0xf]
  %v273 = vld [vmem:[%s1 + $0x8] sm:$0xf]
  %v274 = vld [vmem:[%s1 + $0xc] sm:$0xf]
  %v275 = vld [vmem:[%s1 + $0x10] sm:$0xf]
  %v276 = vld [vmem:[%s1 + $0x14] sm:$0xf]
  %v277 = vld [vmem:[%s1 + $0x18] sm:$0xf]
  %v278 = vld [vmem:[%s1 + $0x1c] sm:$0xf]
  %v279 = vld [vmem:[%s1 + $0x20] sm:$0xf]
  %v280 = vld [vmem:[%s1 + $0x24] sm:$0xf]
  %v281 = vld [vmem:[%s1 + $0x28] sm:$0xf]
  %v282 = vld [vmem:[%s1 + $0x2c] sm:$0xf]
  %v283 = vld [vmem:[%s1 + $0x30] sm:$0xf]
  %v284 = vld [vmem:[%s1 + $0x34] sm:$0xf]
  %v285 = vld [vmem:[%s1 + $0x38] sm:$0xf]
  %v286 = vld [vmem:[%s1 + $0x3c] sm:$0xf]
  %v287 = vld [vmem:[%s1 + $0x40] sm:$0xf]
  %v288 = vld [vmem:[%s1 + $0x44] sm:$0xf]
  %v289 = vld [vmem:[%s1 + $0x48] sm:$0xf]
  %v290 = vld [vmem:[%s1 + $0x4c] sm:$0xf]
  %v291 = vld [vmem:[%s1 + $0x50] sm:$0xf]
  %v292 = vld [vmem:[%s1 + $0x54] sm:$0xf]
  %v293 = vld [vmem:[%s1 + $0x58] sm:$0xf]
  %v294 = vld [vmem:[%s1 + $0x5c] sm:$0xf]
  %v295 = vld [vmem:[%s1 + $0x60] sm:$0xf]
  %v296 = vld [vmem:[%s1 + $0x64] sm:$0xf]
  %v297 = vld [vmem:[%s1 + $0x68] sm:$0xf]
  %v298 = vld [vmem:[%s1 + $0x6c] sm:$0xf]
  %v299 = vld [vmem:[%s1 + $0x70] sm:$0xf]
  %v300 = vld [vmem:[%s1 + $0x74] sm:$0xf]
  %v301 = vld [vmem:[%s1 + $0x78] sm:$0xf]
  %v302 = vld [vmem:[%s1 + $0x7c] sm:$0xf]
  %v303 = vld [vmem:[%s1 + $0x80] sm:$0xf]
  %v304 = vld [vmem:[%s1 + $0x84] sm:$0xf]
  %v305 = vld [vmem:[%s1 + $0x88] sm:$0xf]
  %v306 = vld [vmem:[%s1 + $0x8c] sm:$0xf]
  %v307 = vld [vmem:[%s1 + $0x90] sm:$0xf]
  %v308 = vld [vmem:[%s1 + $0x94] sm:$0xf]
  %v309 = vld [vmem:[%s1 + $0x98] sm:$0xf]
  %v310 = vld [vmem:[%s1 + $0x9c] sm:$0xf]
  %v311 = vld [vmem:[%s1 + $0xa0] sm:$0xf]
  %v312 = vld [vmem:[%s1 + $0xa4] sm:$0xf]
  %v313 = vld [vmem:[%s1 + $0xa8] sm:$0xf]
  %v314 = vld [vmem:[%s1 + $0xac] sm:$0xf]
  %v315 = vld [vmem:[%s1 + $0xb0] sm:$0xf]
  %v316 = vld [vmem:[%s1 + $0xb4] sm:$0xf]
  %v317 = vld [vmem:[%s1 + $0xb8] sm:$0xf]
  %v318 = vld [vmem:[%s1 + $0xbc] sm:$0xf]
  %v319 = vld [vmem:[%s1 + $0xc0] sm:$0xf]
  %v320 = vld [vmem:[%s1 + $0xc4] sm:$0xf]
  %v321 = vld [vmem:[%s1 + $0xc8] sm:$0xf]
  %v322 = vld [vmem:[%s1 + $0xcc] sm:$0xf]
  %v323 = vld [vmem:[%s1 + $0xd0] sm:$0xf]
  %v324 = vld [vmem:[%s1 + $0xd4] sm:$0xf]
  %v325 = vld [vmem:[%s1 + $0xd8] sm:$0xf]
  %v326 = vld [vmem:[%s1 + $0xdc] sm:$0xf]
  %v327 = vld [vmem:[%s1 + $0xe0] sm:$0xf]
  %v328 = vld [vmem:[%s1 + $0xe4] sm:$0xf]
  %v329 = vld [vmem:[%s1 + $0xe8] sm:$0xf]
  %v330 = vld [vmem:[%s1 + $0xec] sm:$0xf]
  %v331 = vld [vmem:[%s1 + $0xf0] sm:$0xf]
  %v332 = vld [vmem:[%s1 + $0xf4] sm:$0xf]
  %v333 = vld [vmem:[%s1 + $0xf8] sm:$0xf]
  %v334 = vld [vmem:[%s1 + $0xfc] sm:$0xf]
  %v335 = vld [vmem:[%s1 + $0x100] sm:$0xf]
  %v336 = vld [vmem:[%s1 + $0x104] sm:$0xf]
  %v337 = vld [vmem:[%s1 + $0x108] sm:$0xf]
  %v338 = vld [vmem:[%s1 + $0x10c] sm:$0xf]
  %v339 = vld [vmem:[%s1 + $0x110] sm:$0xf]
  %v340 = vld [vmem:[%s1 + $0x114] sm:$0xf]
  %v341 = vld [vmem:[%s1 + $0x118] sm:$0xf]
  %v342 = vld [vmem:[%s1 + $0x11c] sm:$0xf]
  %v343 = vld [vmem:[%s1 + $0x120] sm:$0xf]
  %v344 = vld [vmem:[%s1 + $0x124] sm:$0xf]
  %v345 = vld [vmem:[%s1 + $0x128] sm:$0xf]
  %v346 = vld [vmem:[%s1 + $0x12c] sm:$0xf]
  %v347 = vld [vmem:[%s1 + $0x130] sm:$0xf]
  %v348 = vld [vmem:[%s1 + $0x134] sm:$0xf]
  %v349 = vld [vmem:[%s1 + $0x138] sm:$0xf]
  %v350 = vld [vmem:[%s1 + $0x13c] sm:$0xf]
  %v351 = vld [vmem:[%s1 + $0x140] sm:$0xf]
  %v352 = vld [vmem:[%s1 + $0x144] sm:$0xf]
  %v353 = vld [vmem:[%s1 + $0x148] sm:$0xf]
  %v354 = vld [vmem:[%s1 + $0x14c] sm:$0xf]
  %v355 = vld [vmem:[%s1 + $0x150] sm:$0xf]
  %v356 = vld [vmem:[%s1 + $0x154] sm:$0xf]
  %v357 = vld [vmem:[%s1 + $0x158] sm:$0xf]
  %v358 = vld [vmem:[%s1 + $0x15c] sm:$0xf]
  %v359 = vld [vmem:[%s1 + $0x160] sm:$0xf]
  %v360 = vld [vmem:[%s1 + $0x164] sm:$0xf]
  %v361 = vld [vmem:[%s1 + $0x168] sm:$0xf]
  %v362 = vld [vmem:[%s1 + $0x16c] sm:$0xf]
  %v363 = vld [vmem:[%s1 + $0x170] sm:$0xf]
  %v364 = vld [vmem:[%s1 + $0x174] sm:$0xf]
  %v365 = vld [vmem:[%s1 + $0x178] sm:$0xf]
  %v366 = vld [vmem:[%s1 + $0x17c] sm:$0xf]
  %v367 = vld [vmem:[%s1 + $0x180] sm:$0xf]
  %v368 = vld [vmem:[%s1 + $0x184] sm:$0xf]
  %v369 = vld [vmem:[%s1 + $0x188] sm:$0xf]
  %v370 = vld [vmem:[%s1 + $0x18c] sm:$0xf]
  %v371 = vld [vmem:[%s1 + $0x190] sm:$0xf]
  %v372 = vld [vmem:[%s1 + $0x194] sm:$0xf]
  %v373 = vld [vmem:[%s1 + $0x198] sm:$0xf]
  %v374 = vld [vmem:[%s1 + $0x19c] sm:$0xf]
  %v375 = vld [vmem:[%s1 + $0x1a0] sm:$0xf]
  %v376 = vld [vmem:[%s1 + $0x1a4] sm:$0xf]
  %v377 = vld [vmem:[%s1 + $0x1a8] sm:$0xf]
  %v378 = vld [vmem:[%s1 + $0x1ac] sm:$0xf]
  %v379 = vld [vmem:[%s2] sm:$0x1]
  %v381 = vlaneseq
  %v382 = vshrl.u32 %v381, 7
  %v383 = vsub.s32 0, %v382
  %v384 = vrot.slane %v379, %v383
  %v642 = vunpack.c.l.b16 %v15
  %v643 = vunpack.c.h.b16 %v15
  %v644 = vunpack.c.l.b16 %v16
  %v645 = vunpack.c.h.b16 %v16
  %v646 = vunpack.c.l.b16 %v17
  %v647 = vunpack.c.h.b16 %v17
  %v648 = vunpack.c.l.b16 %v18
  %v649 = vunpack.c.l.b16 %v19
  %v650 = vunpack.c.h.b16 %v19
  %v651 = vunpack.c.l.b16 %v20
  %v652 = vunpack.c.h.b16 %v20
  %v653 = vunpack.c.l.b16 %v21
  %v654 = vunpack.c.h.b16 %v21
  %v655 = vunpack.c.l.b16 %v22
  %v656 = vunpack.c.l.b16 %v23
  %v657 = vunpack.c.h.b16 %v23
  %v658 = vunpack.c.l.b16 %v24
  %v659 = vunpack.c.h.b16 %v24
  %v660 = vunpack.c.l.b16 %v25
  %v661 = vunpack.c.h.b16 %v25
  %v662 = vunpack.c.l.b16 %v26
  %v663 = vunpack.c.l.b16 %v27
  %v664 = vunpack.c.h.b16 %v27
  %v665 = vunpack.c.l.b16 %v28
  %v666 = vunpack.c.h.b16 %v28
  %v667 = vunpack.c.l.b16 %v29
  %v668 = vunpack.c.h.b16 %v29
  %v669 = vunpack.c.l.b16 %v30
  %v670 = vunpack.c.l.b16 %v31
  %v671 = vunpack.c.h.b16 %v31
  %v672 = vunpack.c.l.b16 %v32
  %v673 = vunpack.c.h.b16 %v32
  %v674 = vunpack.c.l.b16 %v33
  %v675 = vunpack.c.h.b16 %v33
  %v676 = vunpack.c.l.b16 %v34
  %v677 = vunpack.c.l.b16 %v35
  %v678 = vunpack.c.h.b16 %v35
  %v679 = vunpack.c.l.b16 %v36
  %v680 = vunpack.c.h.b16 %v36
  %v681 = vunpack.c.l.b16 %v37
  %v682 = vunpack.c.h.b16 %v37
  %v683 = vunpack.c.l.b16 %v38
  %v684 = vunpack.c.l.b16 %v39
  %v685 = vunpack.c.h.b16 %v39
  %v686 = vunpack.c.l.b16 %v40
  %v687 = vunpack.c.h.b16 %v40
  %v688 = vunpack.c.l.b16 %v41
  %v689 = vunpack.c.h.b16 %v41
  %v690 = vunpack.c.l.b16 %v42
  %v691 = vunpack.c.l.b16 %v43
  %v692 = vunpack.c.h.b16 %v43
  %v693 = vunpack.c.l.b16 %v44
  %v694 = vunpack.c.h.b16 %v44
  %v695 = vunpack.c.l.b16 %v45
  %v696 = vunpack.c.h.b16 %v45
  %v697 = vunpack.c.l.b16 %v46
  %v698 = vunpack.c.l.b16 %v47
  %v699 = vunpack.c.h.b16 %v47
  %v700 = vunpack.c.l.b16 %v48
  %v701 = vunpack.c.h.b16 %v48
  %v702 = vunpack.c.l.b16 %v49
  %v703 = vunpack.c.h.b16 %v49
  %v704 = vunpack.c.l.b16 %v50
  %v705 = vunpack.c.l.b16 %v51
  %v706 = vunpack.c.h.b16 %v51
  %v707 = vunpack.c.l.b16 %v52
  %v708 = vunpack.c.h.b16 %v52
  %v709 = vunpack.c.l.b16 %v53
  %v710 = vunpack.c.h.b16 %v53
  %v711 = vunpack.c.l.b16 %v54
  %v712 = vunpack.c.l.b16 %v55
  %v713 = vunpack.c.h.b16 %v55
  %v714 = vunpack.c.l.b16 %v56
  %v715 = vunpack.c.h.b16 %v56
  %v716 = vunpack.c.l.b16 %v57
  %v717 = vunpack.c.h.b16 %v57
  %v718 = vunpack.c.l.b16 %v58
  %v719 = vunpack.c.l.b16 %v59
  %v720 = vunpack.c.h.b16 %v59
  %v721 = vunpack.c.l.b16 %v60
  %v722 = vunpack.c.h.b16 %v60
  %v723 = vunpack.c.l.b16 %v61
  %v724 = vunpack.c.h.b16 %v61
  %v725 = vunpack.c.l.b16 %v62
  %v726 = vunpack.c.l.b16 %v63
  %v727 = vunpack.c.h.b16 %v63
  %v728 = vunpack.c.l.b16 %v64
  %v729 = vunpack.c.h.b16 %v64
  %v730 = vunpack.c.l.b16 %v65
  %v731 = vunpack.c.h.b16 %v65
  %v732 = vunpack.c.l.b16 %v66
  %v733 = vunpack.c.l.b16 %v67
  %v734 = vunpack.c.h.b16 %v67
  %v735 = vunpack.c.l.b16 %v68
  %v736 = vunpack.c.h.b16 %v68
  %v737 = vunpack.c.l.b16 %v69
  %v738 = vunpack.c.h.b16 %v69
  %v739 = vunpack.c.l.b16 %v70
  %v740 = vunpack.c.l.b16 %v71
  %v741 = vunpack.c.h.b16 %v71
  %v742 = vunpack.c.l.b16 %v72
  %v743 = vunpack.c.h.b16 %v72
  %v744 = vunpack.c.l.b16 %v73
  %v745 = vunpack.c.h.b16 %v73
  %v746 = vunpack.c.l.b16 %v74
  %v747 = vunpack.c.l.b16 %v75
  %v748 = vunpack.c.h.b16 %v75
  %v749 = vunpack.c.l.b16 %v76
  %v750 = vunpack.c.h.b16 %v76
  %v751 = vunpack.c.l.b16 %v77
  %v752 = vunpack.c.h.b16 %v77
  %v753 = vunpack.c.l.b16 %v78
  %v754 = vunpack.c.l.b16 %v79
  %v755 = vunpack.c.h.b16 %v79
  %v756 = vunpack.c.l.b16 %v80
  %v757 = vunpack.c.h.b16 %v80
  %v758 = vunpack.c.l.b16 %v81
  %v759 = vunpack.c.h.b16 %v81
  %v760 = vunpack.c.l.b16 %v82
  %v761 = vunpack.c.l.b16 %v83
  %v762 = vunpack.c.h.b16 %v83
  %v763 = vunpack.c.l.b16 %v84
  %v764 = vunpack.c.h.b16 %v84
  %v765 = vunpack.c.l.b16 %v85
  %v766 = vunpack.c.h.b16 %v85
  %v767 = vunpack.c.l.b16 %v86
  %v768 = vunpack.c.l.b16 %v87
  %v769 = vunpack.c.h.b16 %v87
  %v770 = vunpack.c.l.b16 %v88
  %v771 = vunpack.c.h.b16 %v88
  %v772 = vunpack.c.l.b16 %v89
  %v773 = vunpack.c.h.b16 %v89
  %v774 = vunpack.c.l.b16 %v90
  %v775 = vunpack.c.l.b16 %v91
  %v776 = vunpack.c.h.b16 %v91
  %v777 = vunpack.c.l.b16 %v92
  %v778 = vunpack.c.h.b16 %v92
  %v779 = vunpack.c.l.b16 %v93
  %v780 = vunpack.c.h.b16 %v93
  %v781 = vunpack.c.l.b16 %v94
  %v782 = vunpack.c.l.b16 %v95
  %v783 = vunpack.c.h.b16 %v95
  %v784 = vunpack.c.l.b16 %v96
  %v785 = vunpack.c.h.b16 %v96
  %v786 = vunpack.c.l.b16 %v97
  %v787 = vunpack.c.h.b16 %v97
  %v788 = vunpack.c.l.b16 %v98
  %v789 = vunpack.c.l.b16 %v99
  %v790 = vunpack.c.h.b16 %v99
  %v791 = vunpack.c.l.b16 %v100
  %v792 = vunpack.c.h.b16 %v100
  %v793 = vunpack.c.l.b16 %v101
  %v794 = vunpack.c.h.b16 %v101
  %v795 = vunpack.c.l.b16 %v102
  %v796 = vunpack.c.l.b16 %v103
  %v797 = vunpack.c.h.b16 %v103
  %v798 = vunpack.c.l.b16 %v104
  %v799 = vunpack.c.h.b16 %v104
  %v800 = vunpack.c.l.b16 %v105
  %v801 = vunpack.c.h.b16 %v105
  %v802 = vunpack.c.l.b16 %v106
  %v803 = vunpack.c.l.b16 %v107
  %v804 = vunpack.c.h.b16 %v107
  %v805 = vunpack.c.l.b16 %v108
  %v806 = vunpack.c.h.b16 %v108
  %v807 = vunpack.c.l.b16 %v109
  %v808 = vunpack.c.h.b16 %v109
  %v809 = vunpack.c.l.b16 %v110
  %v810 = vunpack.c.l.b16 %v111
  %v811 = vunpack.c.h.b16 %v111
  %v812 = vunpack.c.l.b16 %v112
  %v813 = vunpack.c.h.b16 %v112
  %v814 = vunpack.c.l.b16 %v113
  %v815 = vunpack.c.h.b16 %v113
  %v816 = vunpack.c.l.b16 %v114
  %v817 = vunpack.c.l.b16 %v115
  %v818 = vunpack.c.h.b16 %v115
  %v819 = vunpack.c.l.b16 %v116
  %v820 = vunpack.c.h.b16 %v116
  %v821 = vunpack.c.l.b16 %v117
  %v822 = vunpack.c.h.b16 %v117
  %v823 = vunpack.c.l.b16 %v118
  %v824 = vunpack.c.l.b16 %v119
  %v825 = vunpack.c.h.b16 %v119
  %v826 = vunpack.c.l.b16 %v120
  %v827 = vunpack.c.h.b16 %v120
  %v828 = vunpack.c.l.b16 %v121
  %v829 = vunpack.c.h.b16 %v121
  %v830 = vunpack.c.l.b16 %v122
  %v831 = vunpack.c.l.b16 %v123
  %v832 = vunpack.c.h.b16 %v123
  %v833 = vunpack.c.l.b16 %v124
  %v834 = vunpack.c.h.b16 %v124
  %v835 = vunpack.c.l.b16 %v125
  %v836 = vunpack.c.h.b16 %v125
  %v837 = vunpack.c.l.b16 %v126
  %v838 = vunpack.c.l.b16 %v127
  %v839 = vunpack.c.h.b16 %v127
  %v840 = vunpack.c.l.b16 %v128
  %v841 = vunpack.c.h.b16 %v128
  %v842 = vunpack.c.l.b16 %v129
  %v843 = vunpack.c.h.b16 %v129
  %v844 = vunpack.c.l.b16 %v130
  %v845 = vunpack.c.l.b16 %v131
  %v846 = vunpack.c.h.b16 %v131
  %v847 = vunpack.c.l.b16 %v132
  %v848 = vunpack.c.h.b16 %v132
  %v849 = vunpack.c.l.b16 %v133
  %v850 = vunpack.c.h.b16 %v133
  %v851 = vunpack.c.l.b16 %v134
  %v852 = vunpack.c.l.b16 %v135
  %v853 = vunpack.c.h.b16 %v135
  %v854 = vunpack.c.l.b16 %v136
  %v855 = vunpack.c.h.b16 %v136
  %v856 = vunpack.c.l.b16 %v137
  %v857 = vunpack.c.h.b16 %v137
  %v858 = vunpack.c.l.b16 %v138
  %v859 = vunpack.c.l.b16 %v139
  %v860 = vunpack.c.h.b16 %v139
  %v861 = vunpack.c.l.b16 %v140
  %v862 = vunpack.c.h.b16 %v140
  %v863 = vunpack.c.l.b16 %v141
  %v864 = vunpack.c.h.b16 %v141
  %v865 = vunpack.c.l.b16 %v142
  %v866 = vunpack.c.l.b16 %v143
  %v867 = vunpack.c.h.b16 %v143
  %v868 = vunpack.c.l.b16 %v144
  %v869 = vunpack.c.h.b16 %v144
  %v870 = vunpack.c.l.b16 %v145
  %v871 = vunpack.c.h.b16 %v145
  %v872 = vunpack.c.l.b16 %v146
  %v873 = vunpack.c.l.b16 %v147
  %v874 = vunpack.c.h.b16 %v147
  %v875 = vunpack.c.l.b16 %v148
  %v876 = vunpack.c.h.b16 %v148
  %v877 = vunpack.c.l.b16 %v149
  %v878 = vunpack.c.h.b16 %v149
  %v879 = vunpack.c.l.b16 %v150
  %v880 = vunpack.c.l.b16 %v151
  %v881 = vunpack.c.h.b16 %v151
  %v882 = vunpack.c.l.b16 %v152
  %v883 = vunpack.c.h.b16 %v152
  %v884 = vunpack.c.l.b16 %v153
  %v885 = vunpack.c.h.b16 %v153
  %v886 = vunpack.c.l.b16 %v154
  %v887 = vunpack.c.l.b16 %v155
  %v888 = vunpack.c.h.b16 %v155
  %v889 = vunpack.c.l.b16 %v156
  %v890 = vunpack.c.h.b16 %v156
  %v891 = vunpack.c.l.b16 %v157
  %v892 = vunpack.c.h.b16 %v157
  %v893 = vunpack.c.l.b16 %v158
  %v894 = vunpack.c.l.b16 %v159
  %v895 = vunpack.c.h.b16 %v159
  %v896 = vunpack.c.l.b16 %v160
  %v897 = vunpack.c.h.b16 %v160
  %v898 = vunpack.c.l.b16 %v161
  %v899 = vunpack.c.h.b16 %v161
  %v900 = vunpack.c.l.b16 %v162
  %v901 = vunpack.c.l.b16 %v163
  %v902 = vunpack.c.h.b16 %v163
  %v903 = vunpack.c.l.b16 %v164
  %v904 = vunpack.c.h.b16 %v164
  %v905 = vunpack.c.l.b16 %v165
  %v906 = vunpack.c.h.b16 %v165
  %v907 = vunpack.c.l.b16 %v166
  %v908 = vunpack.c.l.b16 %v167
  %v909 = vunpack.c.h.b16 %v167
  %v910 = vunpack.c.l.b16 %v168
  %v911 = vunpack.c.h.b16 %v168
  %v912 = vunpack.c.l.b16 %v169
  %v913 = vunpack.c.h.b16 %v169
  %v914 = vunpack.c.l.b16 %v170
  %v915 = vunpack.c.l.b16 %v171
  %v916 = vunpack.c.h.b16 %v171
  %v917 = vunpack.c.l.b16 %v172
  %v918 = vunpack.c.h.b16 %v172
  %v919 = vunpack.c.l.b16 %v173
  %v920 = vunpack.c.h.b16 %v173
  %v921 = vunpack.c.l.b16 %v174
  %v922 = vunpack.c.l.b16 %v175
  %v923 = vunpack.c.h.b16 %v175
  %v924 = vunpack.c.l.b16 %v176
  %v925 = vunpack.c.h.b16 %v176
  %v926 = vunpack.c.l.b16 %v177
  %v927 = vunpack.c.h.b16 %v177
  %v928 = vunpack.c.l.b16 %v178
  %v929 = vunpack.c.l.b16 %v179
  %v930 = vunpack.c.h.b16 %v179
  %v931 = vunpack.c.l.b16 %v180
  %v932 = vunpack.c.h.b16 %v180
  %v933 = vunpack.c.l.b16 %v181
  %v934 = vunpack.c.h.b16 %v181
  %v935 = vunpack.c.l.b16 %v182
  %v936 = vunpack.c.l.b16 %v183
  %v937 = vunpack.c.h.b16 %v183
  %v938 = vunpack.c.l.b16 %v184
  %v939 = vunpack.c.h.b16 %v184
  %v940 = vunpack.c.l.b16 %v185
  %v941 = vunpack.c.h.b16 %v185
  %v942 = vunpack.c.l.b16 %v186
  %v943 = vunpack.c.l.b16 %v187
  %v944 = vunpack.c.h.b16 %v187
  %v945 = vunpack.c.l.b16 %v188
  %v946 = vunpack.c.h.b16 %v188
  %v947 = vunpack.c.l.b16 %v189
  %v948 = vunpack.c.h.b16 %v189
  %v949 = vunpack.c.l.b16 %v190
  %v950 = vunpack.c.l.b16 %v191
  %v951 = vunpack.c.h.b16 %v191
  %v952 = vunpack.c.l.b16 %v192
  %v953 = vunpack.c.h.b16 %v192
  %v954 = vunpack.c.l.b16 %v193
  %v955 = vunpack.c.h.b16 %v193
  %v956 = vunpack.c.l.b16 %v194
  %v957 = vunpack.c.l.b16 %v195
  %v958 = vunpack.c.h.b16 %v195
  %v959 = vunpack.c.l.b16 %v196
  %v960 = vunpack.c.h.b16 %v196
  %v961 = vunpack.c.l.b16 %v197
  %v962 = vunpack.c.h.b16 %v197
  %v963 = vunpack.c.l.b16 %v198
  %v964 = vunpack.c.l.b16 %v199
  %v965 = vunpack.c.h.b16 %v199
  %v966 = vunpack.c.l.b16 %v200
  %v967 = vunpack.c.h.b16 %v200
  %v968 = vunpack.c.l.b16 %v201
  %v969 = vunpack.c.h.b16 %v201
  %v970 = vunpack.c.l.b16 %v202
  %v971 = vunpack.c.l.b16 %v203
  %v972 = vunpack.c.h.b16 %v203
  %v973 = vunpack.c.l.b16 %v204
  %v974 = vunpack.c.h.b16 %v204
  %v975 = vunpack.c.l.b16 %v205
  %v976 = vunpack.c.h.b16 %v205
  %v977 = vunpack.c.l.b16 %v206
  %v978 = vunpack.c.l.b16 %v207
  %v979 = vunpack.c.h.b16 %v207
  %v980 = vunpack.c.l.b16 %v208
  %v981 = vunpack.c.h.b16 %v208
  %v982 = vunpack.c.l.b16 %v209
  %v983 = vunpack.c.h.b16 %v209
  %v984 = vunpack.c.l.b16 %v210
  %v985 = vunpack.c.l.b16 %v211
  %v986 = vunpack.c.h.b16 %v211
  %v987 = vunpack.c.l.b16 %v212
  %v988 = vunpack.c.h.b16 %v212
  %v989 = vunpack.c.l.b16 %v213
  %v990 = vunpack.c.h.b16 %v213
  %v991 = vunpack.c.l.b16 %v214
  %v992 = vunpack.c.l.b16 %v215
  %v993 = vunpack.c.h.b16 %v215
  %v994 = vunpack.c.l.b16 %v216
  %v995 = vunpack.c.h.b16 %v216
  %v996 = vunpack.c.l.b16 %v217
  %v997 = vunpack.c.h.b16 %v217
  %v998 = vunpack.c.l.b16 %v218
  %v999 = vunpack.c.l.b16 %v219
  %v1000 = vunpack.c.h.b16 %v219
  %v1001 = vunpack.c.l.b16 %v220
  %v1002 = vunpack.c.h.b16 %v220
  %v1003 = vunpack.c.l.b16 %v221
  %v1004 = vunpack.c.h.b16 %v221
  %v1005 = vunpack.c.l.b16 %v222
  %v1006 = vunpack.c.l.b16 %v223
  %v1007 = vunpack.c.h.b16 %v223
  %v1008 = vunpack.c.l.b16 %v224
  %v1009 = vunpack.c.h.b16 %v224
  %v1010 = vunpack.c.l.b16 %v225
  %v1011 = vunpack.c.h.b16 %v225
  %v1012 = vunpack.c.l.b16 %v226
  %v1013 = vunpack.c.l.b16 %v227
  %v1014 = vunpack.c.h.b16 %v227
  %v1015 = vunpack.c.l.b16 %v228
  %v1016 = vunpack.c.h.b16 %v228
  %v1017 = vunpack.c.l.b16 %v229
  %v1018 = vunpack.c.h.b16 %v229
  %v1019 = vunpack.c.l.b16 %v230
  %v1020 = vunpack.c.l.b16 %v231
  %v1021 = vunpack.c.h.b16 %v231
  %v1022 = vunpack.c.l.b16 %v232
  %v1023 = vunpack.c.h.b16 %v232
  %v1024 = vunpack.c.l.b16 %v233
  %v1025 = vunpack.c.h.b16 %v233
  %v1026 = vunpack.c.l.b16 %v234
  %v1027 = vunpack.c.l.b16 %v235
  %v1028 = vunpack.c.h.b16 %v235
  %v1029 = vunpack.c.l.b16 %v236
  %v1030 = vunpack.c.h.b16 %v236
  %v1031 = vunpack.c.l.b16 %v237
  %v1032 = vunpack.c.h.b16 %v237
  %v1033 = vunpack.c.l.b16 %v238
  %v1034 = vunpack.c.l.b16 %v239
  %v1035 = vunpack.c.h.b16 %v239
  %v1036 = vunpack.c.l.b16 %v240
  %v1037 = vunpack.c.h.b16 %v240
  %v1038 = vunpack.c.l.b16 %v241
  %v1039 = vunpack.c.h.b16 %v241
  %v1040 = vunpack.c.l.b16 %v242
  %v1041 = vunpack.c.l.b16 %v243
  %v1042 = vunpack.c.h.b16 %v243
  %v1043 = vunpack.c.l.b16 %v244
  %v1044 = vunpack.c.h.b16 %v244
  %v1045 = vunpack.c.l.b16 %v245
  %v1046 = vunpack.c.h.b16 %v245
  %v1047 = vunpack.c.l.b16 %v246
  %v1048 = vunpack.c.l.b16 %v247
  %v1049 = vunpack.c.h.b16 %v247
  %v1050 = vunpack.c.l.b16 %v248
  %v1051 = vunpack.c.h.b16 %v248
  %v1052 = vunpack.c.l.b16 %v249
  %v1053 = vunpack.c.h.b16 %v249
  %v1054 = vunpack.c.l.b16 %v250
  %v1055 = vunpack.c.l.b16 %v251
  %v1056 = vunpack.c.h.b16 %v251
  %v1057 = vunpack.c.l.b16 %v252
  %v1058 = vunpack.c.h.b16 %v252
  %v1059 = vunpack.c.l.b16 %v253
  %v1060 = vunpack.c.h.b16 %v253
  %v1061 = vunpack.c.l.b16 %v254
  %v1062 = vunpack.c.l.b16 %v255
  %v1063 = vunpack.c.h.b16 %v255
  %v1064 = vunpack.c.l.b16 %v256
  %v1065 = vunpack.c.h.b16 %v256
  %v1066 = vunpack.c.l.b16 %v257
  %v1067 = vunpack.c.h.b16 %v257
  %v1068 = vunpack.c.l.b16 %v258
  %v1069 = vunpack.c.l.b16 %v259
  %v1070 = vunpack.c.h.b16 %v259
  %v1071 = vunpack.c.l.b16 %v260
  %v1072 = vunpack.c.h.b16 %v260
  %v1073 = vunpack.c.l.b16 %v261
  %v1074 = vunpack.c.h.b16 %v261
  %v1075 = vunpack.c.l.b16 %v262
  %v1076 = vunpack.c.l.b16 %v263
  %v1077 = vunpack.c.h.b16 %v263
  %v1078 = vunpack.c.l.b16 %v264
  %v1079 = vunpack.c.h.b16 %v264
  %v1080 = vunpack.c.l.b16 %v265
  %v1081 = vunpack.c.h.b16 %v265
  %v1082 = vunpack.c.l.b16 %v266
  %v1083 = vunpack.c.l.b16 %v267
  %v1084 = vunpack.c.h.b16 %v267
  %v1085 = vunpack.c.l.b16 %v268
  %v1086 = vunpack.c.h.b16 %v268
  %v1087 = vunpack.c.l.b16 %v269
  %v1088 = vunpack.c.h.b16 %v269
  %v1089 = vunpack.c.l.b16 %v270
  %v1090 = vpack.c.b16 %v649, %v642
  %v1091 = vpack.c.b16 %v650, %v643
  %v1092 = vpack.c.b16 %v651, %v644
  %v1093 = vpack.c.b16 %v652, %v645
  %v1094 = vpack.c.b16 %v653, %v646
  %v1095 = vpack.c.b16 %v654, %v647
  %v1096 = vpack.c.b16 %v655, %v648
  %v1097 = vpack.c.b16 %v663, %v656
  %v1098 = vpack.c.b16 %v664, %v657
  %v1099 = vpack.c.b16 %v665, %v658
  %v1100 = vpack.c.b16 %v666, %v659
  %v1101 = vpack.c.b16 %v667, %v660
  %v1102 = vpack.c.b16 %v668, %v661
  %v1103 = vpack.c.b16 %v669, %v662
  %v1104 = vpack.c.b16 %v677, %v670
  %v1105 = vpack.c.b16 %v678, %v671
  %v1106 = vpack.c.b16 %v679, %v672
  %v1107 = vpack.c.b16 %v680, %v673
  %v1108 = vpack.c.b16 %v681, %v674
  %v1109 = vpack.c.b16 %v682, %v675
  %v1110 = vpack.c.b16 %v683, %v676
  %v1111 = vpack.c.b16 %v691, %v684
  %v1112 = vpack.c.b16 %v692, %v685
  %v1113 = vpack.c.b16 %v693, %v686
  %v1114 = vpack.c.b16 %v694, %v687
  %v1115 = vpack.c.b16 %v695, %v688
  %v1116 = vpack.c.b16 %v696, %v689
  %v1117 = vpack.c.b16 %v697, %v690
  %v1118 = vpack.c.b16 %v705, %v698
  %v1119 = vpack.c.b16 %v706, %v699
  %v1120 = vpack.c.b16 %v707, %v700
  %v1121 = vpack.c.b16 %v708, %v701
  %v1122 = vpack.c.b16 %v709, %v702
  %v1123 = vpack.c.b16 %v710, %v703
  %v1124 = vpack.c.b16 %v711, %v704
  %v1125 = vpack.c.b16 %v719, %v712
  %v1126 = vpack.c.b16 %v720, %v713
  %v1127 = vpack.c.b16 %v721, %v714
  %v1128 = vpack.c.b16 %v722, %v715
  %v1129 = vpack.c.b16 %v723, %v716
  %v1130 = vpack.c.b16 %v724, %v717
  %v1131 = vpack.c.b16 %v725, %v718
  %v1132 = vpack.c.b16 %v733, %v726
  %v1133 = vpack.c.b16 %v734, %v727
  %v1134 = vpack.c.b16 %v735, %v728
  %v1135 = vpack.c.b16 %v736, %v729
  %v1136 = vpack.c.b16 %v737, %v730
  %v1137 = vpack.c.b16 %v738, %v731
  %v1138 = vpack.c.b16 %v739, %v732
  %v1139 = vpack.c.b16 %v747, %v740
  %v1140 = vpack.c.b16 %v748, %v741
  %v1141 = vpack.c.b16 %v749, %v742
  %v1142 = vpack.c.b16 %v750, %v743
  %v1143 = vpack.c.b16 %v751, %v744
  %v1144 = vpack.c.b16 %v752, %v745
  %v1145 = vpack.c.b16 %v753, %v746
  %v1146 = vpack.c.b16 %v761, %v754
  %v1147 = vpack.c.b16 %v762, %v755
  %v1148 = vpack.c.b16 %v763, %v756
  %v1149 = vpack.c.b16 %v764, %v757
  %v1150 = vpack.c.b16 %v765, %v758
  %v1151 = vpack.c.b16 %v766, %v759
  %v1152 = vpack.c.b16 %v767, %v760
  %v1153 = vpack.c.b16 %v775, %v768
  %v1154 = vpack.c.b16 %v776, %v769
  %v1155 = vpack.c.b16 %v777, %v770
  %v1156 = vpack.c.b16 %v778, %v771
  %v1157 = vpack.c.b16 %v779, %v772
  %v1158 = vpack.c.b16 %v780, %v773
  %v1159 = vpack.c.b16 %v781, %v774
  %v1160 = vpack.c.b16 %v789, %v782
  %v1161 = vpack.c.b16 %v790, %v783
  %v1162 = vpack.c.b16 %v791, %v784
  %v1163 = vpack.c.b16 %v792, %v785
  %v1164 = vpack.c.b16 %v793, %v786
  %v1165 = vpack.c.b16 %v794, %v787
  %v1166 = vpack.c.b16 %v795, %v788
  %v1167 = vpack.c.b16 %v803, %v796
  %v1168 = vpack.c.b16 %v804, %v797
  %v1169 = vpack.c.b16 %v805, %v798
  %v1170 = vpack.c.b16 %v806, %v799
  %v1171 = vpack.c.b16 %v807, %v800
  %v1172 = vpack.c.b16 %v808, %v801
  %v1173 = vpack.c.b16 %v809, %v802
  %v1174 = vpack.c.b16 %v817, %v810
  %v1175 = vpack.c.b16 %v818, %v811
  %v1176 = vpack.c.b16 %v819, %v812
  %v1177 = vpack.c.b16 %v820, %v813
  %v1178 = vpack.c.b16 %v821, %v814
  %v1179 = vpack.c.b16 %v822, %v815
  %v1180 = vpack.c.b16 %v823, %v816
  %v1181 = vpack.c.b16 %v831, %v824
  %v1182 = vpack.c.b16 %v832, %v825
  %v1183 = vpack.c.b16 %v833, %v826
  %v1184 = vpack.c.b16 %v834, %v827
  %v1185 = vpack.c.b16 %v835, %v828
  %v1186 = vpack.c.b16 %v836, %v829
  %v1187 = vpack.c.b16 %v837, %v830
  %v1188 = vpack.c.b16 %v845, %v838
  %v1189 = vpack.c.b16 %v846, %v839
  %v1190 = vpack.c.b16 %v847, %v840
  %v1191 = vpack.c.b16 %v848, %v841
  %v1192 = vpack.c.b16 %v849, %v842
  %v1193 = vpack.c.b16 %v850, %v843
  %v1194 = vpack.c.b16 %v851, %v844
  %v1195 = vpack.c.b16 %v859, %v852
  %v1196 = vpack.c.b16 %v860, %v853
  %v1197 = vpack.c.b16 %v861, %v854
  %v1198 = vpack.c.b16 %v862, %v855
  %v1199 = vpack.c.b16 %v863, %v856
  %v1200 = vpack.c.b16 %v864, %v857
  %v1201 = vpack.c.b16 %v865, %v858
  %v1202 = vpack.c.b16 %v873, %v866
  %v1203 = vpack.c.b16 %v874, %v867
  %v1204 = vpack.c.b16 %v875, %v868
  %v1205 = vpack.c.b16 %v876, %v869
  %v1206 = vpack.c.b16 %v877, %v870
  %v1207 = vpack.c.b16 %v878, %v871
  %v1208 = vpack.c.b16 %v879, %v872
  %v1209 = vpack.c.b16 %v887, %v880
  %v1210 = vpack.c.b16 %v888, %v881
  %v1211 = vpack.c.b16 %v889, %v882
  %v1212 = vpack.c.b16 %v890, %v883
  %v1213 = vpack.c.b16 %v891, %v884
  %v1214 = vpack.c.b16 %v892, %v885
  %v1215 = vpack.c.b16 %v893, %v886
  %v1216 = vpack.c.b16 %v901, %v894
  %v1217 = vpack.c.b16 %v902, %v895
  %v1218 = vpack.c.b16 %v903, %v896
  %v1219 = vpack.c.b16 %v904, %v897
  %v1220 = vpack.c.b16 %v905, %v898
  %v1221 = vpack.c.b16 %v906, %v899
  %v1222 = vpack.c.b16 %v907, %v900
  %v1223 = vpack.c.b16 %v915, %v908
  %v1224 = vpack.c.b16 %v916, %v909
  %v1225 = vpack.c.b16 %v917, %v910
  %v1226 = vpack.c.b16 %v918, %v911
  %v1227 = vpack.c.b16 %v919, %v912
  %v1228 = vpack.c.b16 %v920, %v913
  %v1229 = vpack.c.b16 %v921, %v914
  %v1230 = vpack.c.b16 %v929, %v922
  %v1231 = vpack.c.b16 %v930, %v923
  %v1232 = vpack.c.b16 %v931, %v924
  %v1233 = vpack.c.b16 %v932, %v925
  %v1234 = vpack.c.b16 %v933, %v926
  %v1235 = vpack.c.b16 %v934, %v927
  %v1236 = vpack.c.b16 %v935, %v928
  %v1237 = vpack.c.b16 %v943, %v936
  %v1238 = vpack.c.b16 %v944, %v937
  %v1239 = vpack.c.b16 %v945, %v938
  %v1240 = vpack.c.b16 %v946, %v939
  %v1241 = vpack.c.b16 %v947, %v940
  %v1242 = vpack.c.b16 %v948, %v941
  %v1243 = vpack.c.b16 %v949, %v942
  %v1244 = vpack.c.b16 %v957, %v950
  %v1245 = vpack.c.b16 %v958, %v951
  %v1246 = vpack.c.b16 %v959, %v952
  %v1247 = vpack.c.b16 %v960, %v953
  %v1248 = vpack.c.b16 %v961, %v954
  %v1249 = vpack.c.b16 %v962, %v955
  %v1250 = vpack.c.b16 %v963, %v956
  %v1251 = vpack.c.b16 %v971, %v964
  %v1252 = vpack.c.b16 %v972, %v965
  %v1253 = vpack.c.b16 %v973, %v966
  %v1254 = vpack.c.b16 %v974, %v967
  %v1255 = vpack.c.b16 %v975, %v968
  %v1256 = vpack.c.b16 %v976, %v969
  %v1257 = vpack.c.b16 %v977, %v970
  %v1258 = vpack.c.b16 %v985, %v978
  %v1259 = vpack.c.b16 %v986, %v979
  %v1260 = vpack.c.b16 %v987, %v980
  %v1261 = vpack.c.b16 %v988, %v981
  %v1262 = vpack.c.b16 %v989, %v982
  %v1263 = vpack.c.b16 %v990, %v983
  %v1264 = vpack.c.b16 %v991, %v984
  %v1265 = vpack.c.b16 %v999, %v992
  %v1266 = vpack.c.b16 %v1000, %v993
  %v1267 = vpack.c.b16 %v1001, %v994
  %v1268 = vpack.c.b16 %v1002, %v995
  %v1269 = vpack.c.b16 %v1003, %v996
  %v1270 = vpack.c.b16 %v1004, %v997
  %v1271 = vpack.c.b16 %v1005, %v998
  %v1272 = vpack.c.b16 %v1013, %v1006
  %v1273 = vpack.c.b16 %v1014, %v1007
  %v1274 = vpack.c.b16 %v1015, %v1008
  %v1275 = vpack.c.b16 %v1016, %v1009
  %v1276 = vpack.c.b16 %v1017, %v1010
  %v1277 = vpack.c.b16 %v1018, %v1011
  %v1278 = vpack.c.b16 %v1019, %v1012
  %v1279 = vpack.c.b16 %v1027, %v1020
  %v1280 = vpack.c.b16 %v1028, %v1021
  %v1281 = vpack.c.b16 %v1029, %v1022
  %v1282 = vpack.c.b16 %v1030, %v1023
  %v1283 = vpack.c.b16 %v1031, %v1024
  %v1284 = vpack.c.b16 %v1032, %v1025
  %v1285 = vpack.c.b16 %v1033, %v1026
  %v1286 = vpack.c.b16 %v1041, %v1034
  %v1287 = vpack.c.b16 %v1042, %v1035
  %v1288 = vpack.c.b16 %v1043, %v1036
  %v1289 = vpack.c.b16 %v1044, %v1037
  %v1290 = vpack.c.b16 %v1045, %v1038
  %v1291 = vpack.c.b16 %v1046, %v1039
  %v1292 = vpack.c.b16 %v1047, %v1040
  %v1293 = vpack.c.b16 %v1055, %v1048
  %v1294 = vpack.c.b16 %v1056, %v1049
  %v1295 = vpack.c.b16 %v1057, %v1050
  %v1296 = vpack.c.b16 %v1058, %v1051
  %v1297 = vpack.c.b16 %v1059, %v1052
  %v1298 = vpack.c.b16 %v1060, %v1053
  %v1299 = vpack.c.b16 %v1061, %v1054
  %v1300 = vpack.c.b16 %v1069, %v1062
  %v1301 = vpack.c.b16 %v1070, %v1063
  %v1302 = vpack.c.b16 %v1071, %v1064
  %v1303 = vpack.c.b16 %v1072, %v1065
  %v1304 = vpack.c.b16 %v1073, %v1066
  %v1305 = vpack.c.b16 %v1074, %v1067
  %v1306 = vpack.c.b16 %v1075, %v1068
  %v1307 = vpack.c.b16 %v1083, %v1076
  %v1308 = vpack.c.b16 %v1084, %v1077
  %v1309 = vpack.c.b16 %v1085, %v1078
  %v1310 = vpack.c.b16 %v1086, %v1079
  %v1311 = vpack.c.b16 %v1087, %v1080
  %v1312 = vpack.c.b16 %v1088, %v1081
  %v1313 = vpack.c.b16 %v1089, %v1082
  %v1614 = vunpack.c.l.b16 %v271
  %v1615 = vunpack.c.l.b16 %v272
  %v1616 = vunpack.c.l.b16 %v273
  %v1617 = vunpack.c.l.b16 %v274
  %v1618 = vunpack.c.l.b16 %v275
  %v1619 = vunpack.c.l.b16 %v276
  %v1620 = vunpack.c.l.b16 %v277
  %v1621 = vunpack.c.l.b16 %v278
  %v1622 = vunpack.c.l.b16 %v279
  %v1623 = vunpack.c.l.b16 %v280
  %v1624 = vunpack.c.l.b16 %v281
  %v1625 = vunpack.c.l.b16 %v282
  %v1626 = vunpack.c.l.b16 %v283
  %v1627 = vunpack.c.l.b16 %v284
  %v1628 = vunpack.c.l.b16 %v285
  %v1629 = vunpack.c.l.b16 %v286
  %v1630 = vunpack.c.l.b16 %v287
  %v1631 = vunpack.c.l.b16 %v288
  %v1632 = vunpack.c.l.b16 %v289
  %v1633 = vunpack.c.l.b16 %v290
  %v1634 = vunpack.c.l.b16 %v291
  %v1635 = vunpack.c.l.b16 %v292
  %v1636 = vunpack.c.l.b16 %v293
  %v1637 = vunpack.c.l.b16 %v294
  %v1638 = vunpack.c.l.b16 %v295
  %v1639 = vunpack.c.l.b16 %v296
  %v1640 = vunpack.c.l.b16 %v297
  %v1641 = vunpack.c.l.b16 %v298
  %v1642 = vunpack.c.l.b16 %v299
  %v1643 = vunpack.c.l.b16 %v300
  %v1644 = vunpack.c.l.b16 %v301
  %v1645 = vunpack.c.l.b16 %v302
  %v1646 = vunpack.c.l.b16 %v303
  %v1647 = vunpack.c.l.b16 %v304
  %v1648 = vunpack.c.l.b16 %v305
  %v1649 = vunpack.c.l.b16 %v306
  %v1650 = vunpack.c.l.b16 %v307
  %v1651 = vunpack.c.l.b16 %v308
  %v1652 = vunpack.c.l.b16 %v309
  %v1653 = vunpack.c.l.b16 %v310
  %v1654 = vunpack.c.l.b16 %v311
  %v1655 = vunpack.c.l.b16 %v312
  %v1656 = vunpack.c.l.b16 %v313
  %v1657 = vunpack.c.l.b16 %v314
  %v1658 = vunpack.c.l.b16 %v315
  %v1659 = vunpack.c.l.b16 %v316
  %v1660 = vunpack.c.l.b16 %v317
  %v1661 = vunpack.c.l.b16 %v318
  %v1662 = vunpack.c.l.b16 %v319
  %v1663 = vunpack.c.l.b16 %v320
  %v1664 = vunpack.c.l.b16 %v321
  %v1665 = vunpack.c.l.b16 %v322
  %v1666 = vunpack.c.l.b16 %v323
  %v1667 = vunpack.c.l.b16 %v324
  %v1668 = vunpack.c.l.b16 %v325
  %v1669 = vunpack.c.l.b16 %v326
  %v1670 = vunpack.c.l.b16 %v327
  %v1671 = vunpack.c.l.b16 %v328
  %v1672 = vunpack.c.l.b16 %v329
  %v1673 = vunpack.c.l.b16 %v330
  %v1674 = vunpack.c.l.b16 %v331
  %v1675 = vunpack.c.l.b16 %v332
  %v1676 = vunpack.c.l.b16 %v333
  %v1677 = vunpack.c.l.b16 %v334
  %v1678 = vunpack.c.l.b16 %v335
  %v1679 = vunpack.c.l.b16 %v336
  %v1680 = vunpack.c.l.b16 %v337
  %v1681 = vunpack.c.l.b16 %v338
  %v1682 = vunpack.c.l.b16 %v339
  %v1683 = vunpack.c.l.b16 %v340
  %v1684 = vunpack.c.l.b16 %v341
  %v1685 = vunpack.c.l.b16 %v342
  %v1686 = vunpack.c.l.b16 %v343
  %v1687 = vunpack.c.l.b16 %v344
  %v1688 = vunpack.c.l.b16 %v345
  %v1689 = vunpack.c.l.b16 %v346
  %v1690 = vunpack.c.l.b16 %v347
  %v1691 = vunpack.c.l.b16 %v348
  %v1692 = vunpack.c.l.b16 %v349
  %v1693 = vunpack.c.l.b16 %v350
  %v1694 = vunpack.c.l.b16 %v351
  %v1695 = vunpack.c.l.b16 %v352
  %v1696 = vunpack.c.l.b16 %v353
  %v1697 = vunpack.c.l.b16 %v354
  %v1698 = vunpack.c.l.b16 %v355
  %v1699 = vunpack.c.l.b16 %v356
  %v1700 = vunpack.c.l.b16 %v357
  %v1701 = vunpack.c.l.b16 %v358
  %v1702 = vunpack.c.l.b16 %v359
  %v1703 = vunpack.c.l.b16 %v360
  %v1704 = vunpack.c.l.b16 %v361
  %v1705 = vunpack.c.l.b16 %v362
  %v1706 = vunpack.c.l.b16 %v363
  %v1707 = vunpack.c.l.b16 %v364
  %v1708 = vunpack.c.l.b16 %v365
  %v1709 = vunpack.c.l.b16 %v366
  %v1710 = vunpack.c.l.b16 %v367
  %v1711 = vunpack.c.l.b16 %v368
  %v1712 = vunpack.c.l.b16 %v369
  %v1713 = vunpack.c.l.b16 %v370
  %v1714 = vunpack.c.l.b16 %v371
  %v1715 = vunpack.c.l.b16 %v372
  %v1716 = vunpack.c.l.b16 %v373
  %v1717 = vunpack.c.l.b16 %v374
  %v1718 = vunpack.c.l.b16 %v375
  %v1719 = vunpack.c.l.b16 %v376
  %v1720 = vunpack.c.l.b16 %v377
  %v1721 = vunpack.c.l.b16 %v378
  %v1722 = vpack.c.b16 %v1615, %v1614
  %v1723 = vpack.c.b16 %v1617, %v1616
  %v1724 = vpack.c.b16 %v1619, %v1618
  %v1725 = vpack.c.b16 %v1621, %v1620
  %v1726 = vpack.c.b16 %v1623, %v1622
  %v1727 = vpack.c.b16 %v1625, %v1624
  %v1728 = vpack.c.b16 %v1627, %v1626
  %v1729 = vpack.c.b16 %v1629, %v1628
  %v1730 = vpack.c.b16 %v1631, %v1630
  %v1731 = vpack.c.b16 %v1633, %v1632
  %v1732 = vpack.c.b16 %v1635, %v1634
  %v1733 = vpack.c.b16 %v1637, %v1636
  %v1734 = vpack.c.b16 %v1639, %v1638
  %v1735 = vpack.c.b16 %v1641, %v1640
  %v1736 = vpack.c.b16 %v1643, %v1642
  %v1737 = vpack.c.b16 %v1645, %v1644
  %v1738 = vpack.c.b16 %v1647, %v1646
  %v1739 = vpack.c.b16 %v1649, %v1648
  %v1740 = vpack.c.b16 %v1651, %v1650
  %v1741 = vpack.c.b16 %v1653, %v1652
  %v1742 = vpack.c.b16 %v1655, %v1654
  %v1743 = vpack.c.b16 %v1657, %v1656
  %v1744 = vpack.c.b16 %v1659, %v1658
  %v1745 = vpack.c.b16 %v1661, %v1660
  %v1746 = vpack.c.b16 %v1663, %v1662
  %v1747 = vpack.c.b16 %v1665, %v1664
  %v1748 = vpack.c.b16 %v1667, %v1666
  %v1749 = vpack.c.b16 %v1669, %v1668
  %v1750 = vpack.c.b16 %v1671, %v1670
  %v1751 = vpack.c.b16 %v1673, %v1672
  %v1752 = vpack.c.b16 %v1675, %v1674
  %v1753 = vpack.c.b16 %v1677, %v1676
  %v1754 = vpack.c.b16 %v1679, %v1678
  %v1755 = vpack.c.b16 %v1681, %v1680
  %v1756 = vpack.c.b16 %v1683, %v1682
  %v1757 = vpack.c.b16 %v1685, %v1684
  %v1758 = vpack.c.b16 %v1687, %v1686
  %v1759 = vpack.c.b16 %v1689, %v1688
  %v1760 = vpack.c.b16 %v1691, %v1690
  %v1761 = vpack.c.b16 %v1693, %v1692
  %v1762 = vpack.c.b16 %v1695, %v1694
  %v1763 = vpack.c.b16 %v1697, %v1696
  %v1764 = vpack.c.b16 %v1699, %v1698
  %v1765 = vpack.c.b16 %v1701, %v1700
  %v1766 = vpack.c.b16 %v1703, %v1702
  %v1767 = vpack.c.b16 %v1705, %v1704
  %v1768 = vpack.c.b16 %v1707, %v1706
  %v1769 = vpack.c.b16 %v1709, %v1708
  %v1770 = vpack.c.b16 %v1711, %v1710
  %v1771 = vpack.c.b16 %v1713, %v1712
  %v1772 = vpack.c.b16 %v1715, %v1714
  %v1773 = vpack.c.b16 %v1717, %v1716
  %v1774 = vpack.c.b16 %v1719, %v1718
  %v1775 = vpack.c.b16 %v1721, %v1720
  %vm1830 = vcmask 785408
  %v1832 = vsel %vm1830, %v1096, 0
  %v1835 = vsel %vm1830, %v1103, 0
  %v1838 = vsel %vm1830, %v1110, 0
  %v1841 = vsel %vm1830, %v1117, 0
  %v1844 = vsel %vm1830, %v1124, 0
  %v1847 = vsel %vm1830, %v1131, 0
  %v1850 = vsel %vm1830, %v1138, 0
  %v1853 = vsel %vm1830, %v1145, 0
  %v1856 = vsel %vm1830, %v1152, 0
  %v1859 = vsel %vm1830, %v1159, 0
  %v1862 = vsel %vm1830, %v1166, 0
  %v1865 = vsel %vm1830, %v1173, 0
  %v1868 = vsel %vm1830, %v1180, 0
  %v1871 = vsel %vm1830, %v1187, 0
  %v1874 = vsel %vm1830, %v1194, 0
  %v1877 = vsel %vm1830, %v1201, 0
  %v1880 = vsel %vm1830, %v1208, 0
  %v1883 = vsel %vm1830, %v1215, 0
  %v1886 = vsel %vm1830, %v1222, 0
  %v1889 = vsel %vm1830, %v1229, 0
  %v1892 = vsel %vm1830, %v1236, 0
  %v1895 = vsel %vm1830, %v1243, 0
  %v1898 = vsel %vm1830, %v1250, 0
  %v1901 = vsel %vm1830, %v1257, 0
  %v1904 = vsel %vm1830, %v1264, 0
  %v1907 = vsel %vm1830, %v1271, 0
  %v1910 = vsel %vm1830, %v1278, 0
  %v1913 = vsel %vm1830, %v1285, 0
  %v1916 = vsel %vm1830, %v1292, 0
  %v1919 = vsel %vm1830, %v1299, 0
  %v1922 = vsel %vm1830, %v1306, 0
  %v1925 = vsel %vm1830, %v1313, 0
  %1927 = vmatprep.subr.bf16.mxu0 0
  %1928 = vmatpush1.bf16.msra.mxu0 %v1722
  %1929 = vmatprep.subr.bf16.mxu0 0
  %1930 = vmatpush1.bf16.msra.mxu0 %v1723
  %1931 = vmatprep.subr.bf16.mxu0 0
  %1932 = vmatpush1.bf16.msra.mxu0 %v1724
  %1933 = vmatprep.subr.bf16.mxu0 0
  %1934 = vmatpush1.bf16.msra.mxu0 %v1725
  %1935 = vmatprep.subr.bf16.mxu0 0
  %1936 = vmatpush1.bf16.msra.mxu0 %v1726
  %1937 = vmatprep.subr.bf16.mxu0 0
  %1938 = vmatpush1.bf16.msra.mxu0 %v1727
  %1939 = vmatprep.subr.bf16.mxu0 0
  %1940 = vmatpush1.bf16.msra.mxu0 %v1728
  %1941 = vmatprep.subr.bf16.mxu0 0
  %1942 = vmatpush1.bf16.msra.mxu0 %v1729
  %1943 = vmatprep.subr.bf16.mxu0 0
  %1944 = vmatpush1.bf16.msra.mxu0 %v1730
  %1945 = vmatprep.subr.bf16.mxu0 0
  %1946 = vmatpush1.bf16.msra.mxu0 %v1731
  %1947 = vmatprep.subr.bf16.mxu0 0
  %1948 = vmatpush1.bf16.msra.mxu0 %v1732
  %1949 = vmatprep.subr.bf16.mxu0 0
  %1950 = vmatpush1.bf16.msra.mxu0 %v1733
  %1951 = vmatprep.subr.bf16.mxu0 0
  %1952 = vmatpush1.bf16.msra.mxu0 %v1734
  %1953 = vmatprep.subr.bf16.mxu0 0
  %1954 = vmatpush1.bf16.msra.mxu0 %v1735
  %1955 = vmatprep.subr.bf16.mxu0 0
  %1956 = vmatpush1.bf16.msra.mxu0 %v1736
  %1957 = vmatprep.subr.bf16.mxu0 0
  %1958 = vmatpush1.bf16.msra.mxu0 %v1737
  %1959 = vmatprep.mubr.bf16.mxu0 %v1091
  %1960 = vmatmul.mubr.bf16.gmra.mrb[0].mxu0 %v1090
  %v1961 = vpop.f32.mrb[0].mxu0
  %v1962 = vadd.f32 %v384, %v1961
  %v1963 = vpop.f32.mrb[0].mxu0
  %v1964 = vpop.f32.mrb[0].mxu0
  %v1965 = vadd.f32 %v384, %v1964
  %v1966 = vpop.f32.mrb[0].mxu0
  %1967 = vmatprep.mubr.bf16.mxu0 %v1098
  %1968 = vmatmul.mubr.bf16.gmra.mrb[0].mxu0 %v1097
  %v1969 = vpop.f32.mrb[0].mxu0
  %v1970 = vadd.f32 %v384, %v1969
  %v1971 = vpop.f32.mrb[0].mxu0
  %v1972 = vpop.f32.mrb[0].mxu0
  %v1973 = vadd.f32 %v384, %v1972
  %v1974 = vpop.f32.mrb[0].mxu0
  %1975 = vmatprep.mubr.bf16.mxu0 %v1105
  %1976 = vmatmul.mubr.bf16.gmra.mrb[0].mxu0 %v1104
  %v1977 = vpop.f32.mrb[0].mxu0
  %v1978 = vadd.f32 %v384, %v1977
  %v1979 = vpop.f32.mrb[0].mxu0
  %v1980 = vpop.f32.mrb[0].mxu0
  %v1981 = vadd.f32 %v384, %v1980
  %v1982 = vpop.f32.mrb[0].mxu0
  %1983 = vmatprep.mubr.bf16.mxu0 %v1112
  %1984 = vmatmul.mubr.bf16.gmra.mrb[0].mxu0 %v1111
  %v1985 = vpop.f32.mrb[0].mxu0
  %v1986 = vadd.f32 %v384, %v1985
  %v1987 = vpop.f32.mrb[0].mxu0
  %v1988 = vpop.f32.mrb[0].mxu0
  %v1989 = vadd.f32 %v384, %v1988
  %v1990 = vpop.f32.mrb[0].mxu0
  %1991 = vmatprep.mubr.bf16.mxu0 %v1119
  %1992 = vmatmul.mubr.bf16.gmra.mrb[0].mxu0 %v1118
  %v1993 = vpop.f32.mrb[0].mxu0
  %v1994 = vadd.f32 %v384, %v1993
  %v1995 = vpop.f32.mrb[0].mxu0
  %v1996 = vpop.f32.mrb[0].mxu0
  %v1997 = vadd.f32 %v384, %v1996
  %v1998 = vpop.f32.mrb[0].mxu0
  %1999 = vmatprep.mubr.bf16.mxu0 %v1126
  %2000 = vmatmul.mubr.bf16.gmra.mrb[0].mxu0 %v1125
  %v2001 = vpop.f32.mrb[0].mxu0
  %v2002 = vadd.f32 %v384, %v2001
  %v2003 = vpop.f32.mrb[0].mxu0
  %v2004 = vpop.f32.mrb[0].mxu0
  %v2005 = vadd.f32 %v384, %v2004
  %v2006 = vpop.f32.mrb[0].mxu0
  %2007 = vmatprep.mubr.bf16.mxu0 %v1133
  %2008 = vmatmul.mubr.bf16.gmra.mrb[0].mxu0 %v1132
  %v2009 = vpop.f32.mrb[0].mxu0
  %v2010 = vadd.f32 %v384, %v2009
  %v2011 = vpop.f32.mrb[0].mxu0
  %v2012 = vpop.f32.mrb[0].mxu0
  %v2013 = vadd.f32 %v384, %v2012
  %v2014 = vpop.f32.mrb[0].mxu0
  %2015 = vmatprep.mubr.bf16.mxu0 %v1140
  %2016 = vmatmul.mubr.bf16.gmra.mrb[0].mxu0 %v1139
  %v2017 = vpop.f32.mrb[0].mxu0
  %v2018 = vadd.f32 %v384, %v2017
  %v2019 = vpop.f32.mrb[0].mxu0
  %v2020 = vpop.f32.mrb[0].mxu0
  %v2021 = vadd.f32 %v384, %v2020
  %v2022 = vpop.f32.mrb[0].mxu0
  %2023 = vmatprep.mubr.bf16.mxu0 %v1147
  %2024 = vmatmul.mubr.bf16.gmra.mrb[0].mxu0 %v1146
  %v2025 = vpop.f32.mrb[0].mxu0
  %v2026 = vadd.f32 %v384, %v2025
  %v2027 = vpop.f32.mrb[0].mxu0
  %v2028 = vpop.f32.mrb[0].mxu0
  %v2029 = vadd.f32 %v384, %v2028
  %v2030 = vpop.f32.mrb[0].mxu0
  %2031 = vmatprep.mubr.bf16.mxu0 %v1154
  %2032 = vmatmul.mubr.bf16.gmra.mrb[0].mxu0 %v1153
  %v2033 = vpop.f32.mrb[0].mxu0
  %v2034 = vadd.f32 %v384, %v2033
  %v2035 = vpop.f32.mrb[0].mxu0
  %v2036 = vpop.f32.mrb[0].mxu0
  %v2037 = vadd.f32 %v384, %v2036
  %v2038 = vpop.f32.mrb[0].mxu0
  %2039 = vmatprep.mubr.bf16.mxu0 %v1161
  %2040 = vmatmul.mubr.bf16.gmra.mrb[0].mxu0 %v1160
  %v2041 = vpop.f32.mrb[0].mxu0
  %v2042 = vadd.f32 %v384, %v2041
  %v2043 = vpop.f32.mrb[0].mxu0
  %v2044 = vpop.f32.mrb[0].mxu0
  %v2045 = vadd.f32 %v384, %v2044
  %v2046 = vpop.f32.mrb[0].mxu0
  %2047 = vmatprep.mubr.bf16.mxu0 %v1168
  %2048 = vmatmul.mubr.bf16.gmra.mrb[0].mxu0 %v1167
  %v2049 = vpop.f32.mrb[0].mxu0
  %v2050 = vadd.f32 %v384, %v2049
  %v2051 = vpop.f32.mrb[0].mxu0
  %v2052 = vpop.f32.mrb[0].mxu0
  %v2053 = vadd.f32 %v384, %v2052
  %v2054 = vpop.f32.mrb[0].mxu0
  %2055 = vmatprep.mubr.bf16.mxu0 %v1175
  %2056 = vmatmul.mubr.bf16.gmra.mrb[0].mxu0 %v1174
  %v2057 = vpop.f32.mrb[0].mxu0
  %v2058 = vadd.f32 %v384, %v2057
  %v2059 = vpop.f32.mrb[0].mxu0
  %v2060 = vpop.f32.mrb[0].mxu0
  %v2061 = vadd.f32 %v384, %v2060
  %v2062 = vpop.f32.mrb[0].mxu0
  %2063 = vmatprep.mubr.bf16.mxu0 %v1182
  %2064 = vmatmul.mubr.bf16.gmra.mrb[0].mxu0 %v1181
  %v2065 = vpop.f32.mrb[0].mxu0
  %v2066 = vadd.f32 %v384, %v2065
  %v2067 = vpop.f32.mrb[0].mxu0
  %v2068 = vpop.f32.mrb[0].mxu0
  %v2069 = vadd.f32 %v384, %v2068
  %v2070 = vpop.f32.mrb[0].mxu0
  %2071 = vmatprep.mubr.bf16.mxu0 %v1189
  %2072 = vmatmul.mubr.bf16.gmra.mrb[0].mxu0 %v1188
  %v2073 = vpop.f32.mrb[0].mxu0
  %v2074 = vadd.f32 %v384, %v2073
  %v2075 = vpop.f32.mrb[0].mxu0
  %v2076 = vpop.f32.mrb[0].mxu0
  %v2077 = vadd.f32 %v384, %v2076
  %v2078 = vpop.f32.mrb[0].mxu0
  %2079 = vmatprep.mubr.bf16.mxu0 %v1196
  %2080 = vmatmul.mubr.bf16.gmra.mrb[0].mxu0 %v1195
  %v2081 = vpop.f32.mrb[0].mxu0
  %v2082 = vadd.f32 %v384, %v2081
  %v2083 = vpop.f32.mrb[0].mxu0
  %v2084 = vpop.f32.mrb[0].mxu0
  %v2085 = vadd.f32 %v384, %v2084
  %v2086 = vpop.f32.mrb[0].mxu0
  %2087 = vmatprep.mubr.bf16.mxu0 %v1203
  %2088 = vmatmul.mubr.bf16.gmra.mrb[0].mxu0 %v1202
  %v2089 = vpop.f32.mrb[0].mxu0
  %v2090 = vadd.f32 %v384, %v2089
  %v2091 = vpop.f32.mrb[0].mxu0
  %v2092 = vpop.f32.mrb[0].mxu0
  %v2093 = vadd.f32 %v384, %v2092
  %v2094 = vpop.f32.mrb[0].mxu0
  %2095 = vmatprep.mubr.bf16.mxu0 %v1210
  %2096 = vmatmul.mubr.bf16.gmra.mrb[0].mxu0 %v1209
  %v2097 = vpop.f32.mrb[0].mxu0
  %v2098 = vadd.f32 %v384, %v2097
  %v2099 = vpop.f32.mrb[0].mxu0
  %v2100 = vpop.f32.mrb[0].mxu0
  %v2101 = vadd.f32 %v384, %v2100
  %v2102 = vpop.f32.mrb[0].mxu0
  %2103 = vmatprep.mubr.bf16.mxu0 %v1217
  %2104 = vmatmul.mubr.bf16.gmra.mrb[0].mxu0 %v1216
  %v2105 = vpop.f32.mrb[0].mxu0
  %v2106 = vadd.f32 %v384, %v2105
  %v2107 = vpop.f32.mrb[0].mxu0
  %v2108 = vpop.f32.mrb[0].mxu0
  %v2109 = vadd.f32 %v384, %v2108
  %v2110 = vpop.f32.mrb[0].mxu0
  %2111 = vmatprep.mubr.bf16.mxu0 %v1224
  %2112 = vmatmul.mubr.bf16.gmra.mrb[0].mxu0 %v1223
  %v2113 = vpop.f32.mrb[0].mxu0
  %v2114 = vadd.f32 %v384, %v2113
  %v2115 = vpop.f32.mrb[0].mxu0
  %v2116 = vpop.f32.mrb[0].mxu0
  %v2117 = vadd.f32 %v384, %v2116
  %v2118 = vpop.f32.mrb[0].mxu0
  %2119 = vmatprep.mubr.bf16.mxu0 %v1231
  %2120 = vmatmul.mubr.bf16.gmra.mrb[0].mxu0 %v1230
  %v2121 = vpop.f32.mrb[0].mxu0
  %v2122 = vadd.f32 %v384, %v2121
  %v2123 = vpop.f32.mrb[0].mxu0
  %v2124 = vpop.f32.mrb[0].mxu0
  %v2125 = vadd.f32 %v384, %v2124
  %v2126 = vpop.f32.mrb[0].mxu0
  %2127 = vmatprep.mubr.bf16.mxu0 %v1238
  %2128 = vmatmul.mubr.bf16.gmra.mrb[0].mxu0 %v1237
  %v2129 = vpop.f32.mrb[0].mxu0
  %v2130 = vadd.f32 %v384, %v2129
  %v2131 = vpop.f32.mrb[0].mxu0
  %v2132 = vpop.f32.mrb[0].mxu0
  %v2133 = vadd.f32 %v384, %v2132
  %v2134 = vpop.f32.mrb[0].mxu0
  %2135 = vmatprep.mubr.bf16.mxu0 %v1245
  %2136 = vmatmul.mubr.bf16.gmra.mrb[0].mxu0 %v1244
  %v2137 = vpop.f32.mrb[0].mxu0
  %v2138 = vadd.f32 %v384, %v2137
  %v2139 = vpop.f32.mrb[0].mxu0
  %v2140 = vpop.f32.mrb[0].mxu0
  %v2141 = vadd.f32 %v384, %v2140
  %v2142 = vpop.f32.mrb[0].mxu0
  %2143 = vmatprep.mubr.bf16.mxu0 %v1252
  %2144 = vmatmul.mubr.bf16.gmra.mrb[0].mxu0 %v1251
  %v2145 = vpop.f32.mrb[0].mxu0
  %v2146 = vadd.f32 %v384, %v2145
  %v2147 = vpop.f32.mrb[0].mxu0
  %v2148 = vpop.f32.mrb[0].mxu0
  %v2149 = vadd.f32 %v384, %v2148
  %v2150 = vpop.f32.mrb[0].mxu0
  %2151 = vmatprep.mubr.bf16.mxu0 %v1259
  %2152 = vmatmul.mubr.bf16.gmra.mrb[0].mxu0 %v1258
  %v2153 = vpop.f32.mrb[0].mxu0
  %v2154 = vadd.f32 %v384, %v2153
  %v2155 = vpop.f32.mrb[0].mxu0
  %v2156 = vpop.f32.mrb[0].mxu0
  %v2157 = vadd.f32 %v384, %v2156
  %v2158 = vpop.f32.mrb[0].mxu0
  %2159 = vmatprep.mubr.bf16.mxu0 %v1266
  %2160 = vmatmul.mubr.bf16.gmra.mrb[0].mxu0 %v1265
  %v2161 = vpop.f32.mrb[0].mxu0
  %v2162 = vadd.f32 %v384, %v2161
  %v2163 = vpop.f32.mrb[0].mxu0
  %v2164 = vpop.f32.mrb[0].mxu0
  %v2165 = vadd.f32 %v384, %v2164
  %v2166 = vpop.f32.mrb[0].mxu0
  %2167 = vmatprep.mubr.bf16.mxu0 %v1273
  %2168 = vmatmul.mubr.bf16.gmra.mrb[0].mxu0 %v1272
  %v2169 = vpop.f32.mrb[0].mxu0
  %v2170 = vadd.f32 %v384, %v2169
  %v2171 = vpop.f32.mrb[0].mxu0
  %v2172 = vpop.f32.mrb[0].mxu0
  %v2173 = vadd.f32 %v384, %v2172
  %v2174 = vpop.f32.mrb[0].mxu0
  %2175 = vmatprep.mubr.bf16.mxu0 %v1280
  %2176 = vmatmul.mubr.bf16.gmra.mrb[0].mxu0 %v1279
  %v2177 = vpop.f32.mrb[0].mxu0
  %v2178 = vadd.f32 %v384, %v2177
  %v2179 = vpop.f32.mrb[0].mxu0
  %v2180 = vpop.f32.mrb[0].mxu0
  %v2181 = vadd.f32 %v384, %v2180
  %v2182 = vpop.f32.mrb[0].mxu0
  %2183 = vmatprep.mubr.bf16.mxu0 %v1287
  %2184 = vmatmul.mubr.bf16.gmra.mrb[0].mxu0 %v1286
  %v2185 = vpop.f32.mrb[0].mxu0
  %v2186 = vadd.f32 %v384, %v2185
  %v2187 = vpop.f32.mrb[0].mxu0
  %v2188 = vpop.f32.mrb[0].mxu0
  %v2189 = vadd.f32 %v384, %v2188
  %v2190 = vpop.f32.mrb[0].mxu0
  %2191 = vmatprep.mubr.bf16.mxu0 %v1294
  %2192 = vmatmul.mubr.bf16.gmra.mrb[0].mxu0 %v1293
  %v2193 = vpop.f32.mrb[0].mxu0
  %v2194 = vadd.f32 %v384, %v2193
  %v2195 = vpop.f32.mrb[0].mxu0
  %v2196 = vpop.f32.mrb[0].mxu0
  %v2197 = vadd.f32 %v384, %v2196
  %v2198 = vpop.f32.mrb[0].mxu0
  %2199 = vmatprep.mubr.bf16.mxu0 %v1301
  %2200 = vmatmul.mubr.bf16.gmra.mrb[0].mxu0 %v1300
  %v2201 = vpop.f32.mrb[0].mxu0
  %v2202 = vadd.f32 %v384, %v2201
  %v2203 = vpop.f32.mrb[0].mxu0
  %v2204 = vpop.f32.mrb[0].mxu0
  %v2205 = vadd.f32 %v384, %v2204
  %v2206 = vpop.f32.mrb[0].mxu0
  %2207 = vmatprep.mubr.bf16.mxu0 %v1308
  %2208 = vmatmul.mubr.bf16.gmra.mrb[0].mxu0 %v1307
  %v2209 = vpop.f32.mrb[0].mxu0
  %v2210 = vadd.f32 %v384, %v2209
  %v2211 = vpop.f32.mrb[0].mxu0
  %v2212 = vpop.f32.mrb[0].mxu0
  %v2213 = vadd.f32 %v384, %v2212
  %v2214 = vpop.f32.mrb[0].mxu0
  %2215 = vdwg.mxu0
  %2216 = vmatprep.subr.bf16.mxu0 0
  %2217 = vmatpush1.bf16.msra.mxu0 %v1738
  %2218 = vmatprep.subr.bf16.mxu0 0
  %2219 = vmatpush1.bf16.msra.mxu0 %v1739
  %2220 = vmatprep.subr.bf16.mxu0 0
  %2221 = vmatpush1.bf16.msra.mxu0 %v1740
  %2222 = vmatprep.subr.bf16.mxu0 0
  %2223 = vmatpush1.bf16.msra.mxu0 %v1741
  %2224 = vmatprep.subr.bf16.mxu0 0
  %2225 = vmatpush1.bf16.msra.mxu0 %v1742
  %2226 = vmatprep.subr.bf16.mxu0 0
  %2227 = vmatpush1.bf16.msra.mxu0 %v1743
  %2228 = vmatprep.subr.bf16.mxu0 0
  %2229 = vmatpush1.bf16.msra.mxu0 %v1744
  %2230 = vmatprep.subr.bf16.mxu0 0
  %2231 = vmatpush1.bf16.msra.mxu0 %v1745
  %2232 = vmatprep.subr.bf16.mxu0 0
  %2233 = vmatpush1.bf16.msra.mxu0 %v1746
  %2234 = vmatprep.subr.bf16.mxu0 0
  %2235 = vmatpush1.bf16.msra.mxu0 %v1747
  %2236 = vmatprep.subr.bf16.mxu0 0
  %2237 = vmatpush1.bf16.msra.mxu0 %v1748
  %2238 = vmatprep.subr.bf16.mxu0 0
  %2239 = vmatpush1.bf16.msra.mxu0 %v1749
  %2240 = vmatprep.subr.bf16.mxu0 0
  %2241 = vmatpush1.bf16.msra.mxu0 %v1750
  %2242 = vmatprep.subr.bf16.mxu0 0
  %2243 = vmatpush1.bf16.msra.mxu0 %v1751
  %2244 = vmatprep.subr.bf16.mxu0 0
  %2245 = vmatpush1.bf16.msra.mxu0 %v1752
  %2246 = vmatprep.subr.bf16.mxu0 0
  %2247 = vmatpush1.bf16.msra.mxu0 %v1753
  %2248 = vmatprep.mubr.bf16.mxu0 %v1093
  %2249 = vmatmul.mubr.bf16.gmra.mrb[0].mxu0 %v1092
  %v2250 = vpop.f32.mrb[0].mxu0
  %v2251 = vadd.f32 %v1962, %v2250
  %v2252 = vpop.f32.mrb[0].mxu0
  %v2253 = vpop.f32.mrb[0].mxu0
  %v2254 = vadd.f32 %v1965, %v2253
  %v2255 = vpop.f32.mrb[0].mxu0
  %2256 = vmatprep.mubr.bf16.mxu0 %v1100
  %2257 = vmatmul.mubr.bf16.gmra.mrb[0].mxu0 %v1099
  %v2258 = vpop.f32.mrb[0].mxu0
  %v2259 = vadd.f32 %v1970, %v2258
  %v2260 = vpop.f32.mrb[0].mxu0
  %v2261 = vpop.f32.mrb[0].mxu0
  %v2262 = vadd.f32 %v1973, %v2261
  %v2263 = vpop.f32.mrb[0].mxu0
  %2264 = vmatprep.mubr.bf16.mxu0 %v1107
  %2265 = vmatmul.mubr.bf16.gmra.mrb[0].mxu0 %v1106
  %v2266 = vpop.f32.mrb[0].mxu0
  %v2267 = vadd.f32 %v1978, %v2266
  %v2268 = vpop.f32.mrb[0].mxu0
  %v2269 = vpop.f32.mrb[0].mxu0
  %v2270 = vadd.f32 %v1981, %v2269
  %v2271 = vpop.f32.mrb[0].mxu0
  %2272 = vmatprep.mubr.bf16.mxu0 %v1114
  %2273 = vmatmul.mubr.bf16.gmra.mrb[0].mxu0 %v1113
  %v2274 = vpop.f32.mrb[0].mxu0
  %v2275 = vadd.f32 %v1986, %v2274
  %v2276 = vpop.f32.mrb[0].mxu0
  %v2277 = vpop.f32.mrb[0].mxu0
  %v2278 = vadd.f32 %v1989, %v2277
  %v2279 = vpop.f32.mrb[0].mxu0
  %2280 = vmatprep.mubr.bf16.mxu0 %v1121
  %2281 = vmatmul.mubr.bf16.gmra.mrb[0].mxu0 %v1120
  %v2282 = vpop.f32.mrb[0].mxu0
  %v2283 = vadd.f32 %v1994, %v2282
  %v2284 = vpop.f32.mrb[0].mxu0
  %v2285 = vpop.f32.mrb[0].mxu0
  %v2286 = vadd.f32 %v1997, %v2285
  %v2287 = vpop.f32.mrb[0].mxu0
  %2288 = vmatprep.mubr.bf16.mxu0 %v1128
  %2289 = vmatmul.mubr.bf16.gmra.mrb[0].mxu0 %v1127
  %v2290 = vpop.f32.mrb[0].mxu0
  %v2291 = vadd.f32 %v2002, %v2290
  %v2292 = vpop.f32.mrb[0].mxu0
  %v2293 = vpop.f32.mrb[0].mxu0
  %v2294 = vadd.f32 %v2005, %v2293
  %v2295 = vpop.f32.mrb[0].mxu0
  %2296 = vmatprep.mubr.bf16.mxu0 %v1135
  %2297 = vmatmul.mubr.bf16.gmra.mrb[0].mxu0 %v1134
  %v2298 = vpop.f32.mrb[0].mxu0
  %v2299 = vadd.f32 %v2010, %v2298
  %v2300 = vpop.f32.mrb[0].mxu0
  %v2301 = vpop.f32.mrb[0].mxu0
  %v2302 = vadd.f32 %v2013, %v2301
  %v2303 = vpop.f32.mrb[0].mxu0
  %2304 = vmatprep.mubr.bf16.mxu0 %v1142
  %2305 = vmatmul.mubr.bf16.gmra.mrb[0].mxu0 %v1141
  %v2306 = vpop.f32.mrb[0].mxu0
  %v2307 = vadd.f32 %v2018, %v2306
  %v2308 = vpop.f32.mrb[0].mxu0
  %v2309 = vpop.f32.mrb[0].mxu0
  %v2310 = vadd.f32 %v2021, %v2309
  %v2311 = vpop.f32.mrb[0].mxu0
  %2312 = vmatprep.mubr.bf16.mxu0 %v1149
  %2313 = vmatmul.mubr.bf16.gmra.mrb[0].mxu0 %v1148
  %v2314 = vpop.f32.mrb[0].mxu0
  %v2315 = vadd.f32 %v2026, %v2314
  %v2316 = vpop.f32.mrb[0].mxu0
  %v2317 = vpop.f32.mrb[0].mxu0
  %v2318 = vadd.f32 %v2029, %v2317
  %v2319 = vpop.f32.mrb[0].mxu0
  %2320 = vmatprep.mubr.bf16.mxu0 %v1156
  %2321 = vmatmul.mubr.bf16.gmra.mrb[0].mxu0 %v1155
  %v2322 = vpop.f32.mrb[0].mxu0
  %v2323 = vadd.f32 %v2034, %v2322
  %v2324 = vpop.f32.mrb[0].mxu0
  %v2325 = vpop.f32.mrb[0].mxu0
  %v2326 = vadd.f32 %v2037, %v2325
  %v2327 = vpop.f32.mrb[0].mxu0
  %2328 = vmatprep.mubr.bf16.mxu0 %v1163
  %2329 = vmatmul.mubr.bf16.gmra.mrb[0].mxu0 %v1162
  %v2330 = vpop.f32.mrb[0].mxu0
  %v2331 = vadd.f32 %v2042, %v2330
  %v2332 = vpop.f32.mrb[0].mxu0
  %v2333 = vpop.f32.mrb[0].mxu0
  %v2334 = vadd.f32 %v2045, %v2333
  %v2335 = vpop.f32.mrb[0].mxu0
  %2336 = vmatprep.mubr.bf16.mxu0 %v1170
  %2337 = vmatmul.mubr.bf16.gmra.mrb[0].mxu0 %v1169
  %v2338 = vpop.f32.mrb[0].mxu0
  %v2339 = vadd.f32 %v2050, %v2338
  %v2340 = vpop.f32.mrb[0].mxu0
  %v2341 = vpop.f32.mrb[0].mxu0
  %v2342 = vadd.f32 %v2053, %v2341
  %v2343 = vpop.f32.mrb[0].mxu0
  %2344 = vmatprep.mubr.bf16.mxu0 %v1177
  %2345 = vmatmul.mubr.bf16.gmra.mrb[0].mxu0 %v1176
  %v2346 = vpop.f32.mrb[0].mxu0
  %v2347 = vadd.f32 %v2058, %v2346
  %v2348 = vpop.f32.mrb[0].mxu0
  %v2349 = vpop.f32.mrb[0].mxu0
  %v2350 = vadd.f32 %v2061, %v2349
  %v2351 = vpop.f32.mrb[0].mxu0
  %2352 = vmatprep.mubr.bf16.mxu0 %v1184
  %2353 = vmatmul.mubr.bf16.gmra.mrb[0].mxu0 %v1183
  %v2354 = vpop.f32.mrb[0].mxu0
  %v2355 = vadd.f32 %v2066, %v2354
  %v2356 = vpop.f32.mrb[0].mxu0
  %v2357 = vpop.f32.mrb[0].mxu0
  %v2358 = vadd.f32 %v2069, %v2357
  %v2359 = vpop.f32.mrb[0].mxu0
  %2360 = vmatprep.mubr.bf16.mxu0 %v1191
  %2361 = vmatmul.mubr.bf16.gmra.mrb[0].mxu0 %v1190
  %v2362 = vpop.f32.mrb[0].mxu0
  %v2363 = vadd.f32 %v2074, %v2362
  %v2364 = vpop.f32.mrb[0].mxu0
  %v2365 = vpop.f32.mrb[0].mxu0
  %v2366 = vadd.f32 %v2077, %v2365
  %v2367 = vpop.f32.mrb[0].mxu0
  %2368 = vmatprep.mubr.bf16.mxu0 %v1198
  %2369 = vmatmul.mubr.bf16.gmra.mrb[0].mxu0 %v1197
  %v2370 = vpop.f32.mrb[0].mxu0
  %v2371 = vadd.f32 %v2082, %v2370
  %v2372 = vpop.f32.mrb[0].mxu0
  %v2373 = vpop.f32.mrb[0].mxu0
  %v2374 = vadd.f32 %v2085, %v2373
  %v2375 = vpop.f32.mrb[0].mxu0
  %2376 = vmatprep.mubr.bf16.mxu0 %v1205
  %2377 = vmatmul.mubr.bf16.gmra.mrb[0].mxu0 %v1204
  %v2378 = vpop.f32.mrb[0].mxu0
  %v2379 = vadd.f32 %v2090, %v2378
  %v2380 = vpop.f32.mrb[0].mxu0
  %v2381 = vpop.f32.mrb[0].mxu0
  %v2382 = vadd.f32 %v2093, %v2381
  %v2383 = vpop.f32.mrb[0].mxu0
  %2384 = vmatprep.mubr.bf16.mxu0 %v1212
  %2385 = vmatmul.mubr.bf16.gmra.mrb[0].mxu0 %v1211
  %v2386 = vpop.f32.mrb[0].mxu0
  %v2387 = vadd.f32 %v2098, %v2386
  %v2388 = vpop.f32.mrb[0].mxu0
  %v2389 = vpop.f32.mrb[0].mxu0
  %v2390 = vadd.f32 %v2101, %v2389
  %v2391 = vpop.f32.mrb[0].mxu0
  %2392 = vmatprep.mubr.bf16.mxu0 %v1219
  %2393 = vmatmul.mubr.bf16.gmra.mrb[0].mxu0 %v1218
  %v2394 = vpop.f32.mrb[0].mxu0
  %v2395 = vadd.f32 %v2106, %v2394
  %v2396 = vpop.f32.mrb[0].mxu0
  %v2397 = vpop.f32.mrb[0].mxu0
  %v2398 = vadd.f32 %v2109, %v2397
  %v2399 = vpop.f32.mrb[0].mxu0
  %2400 = vmatprep.mubr.bf16.mxu0 %v1226
  %2401 = vmatmul.mubr.bf16.gmra.mrb[0].mxu0 %v1225
  %v2402 = vpop.f32.mrb[0].mxu0
  %v2403 = vadd.f32 %v2114, %v2402
  %v2404 = vpop.f32.mrb[0].mxu0
  %v2405 = vpop.f32.mrb[0].mxu0
  %v2406 = vadd.f32 %v2117, %v2405
  %v2407 = vpop.f32.mrb[0].mxu0
  %2408 = vmatprep.mubr.bf16.mxu0 %v1233
  %2409 = vmatmul.mubr.bf16.gmra.mrb[0].mxu0 %v1232
  %v2410 = vpop.f32.mrb[0].mxu0
  %v2411 = vadd.f32 %v2122, %v2410
  %v2412 = vpop.f32.mrb[0].mxu0
  %v2413 = vpop.f32.mrb[0].mxu0
  %v2414 = vadd.f32 %v2125, %v2413
  %v2415 = vpop.f32.mrb[0].mxu0
  %2416 = vmatprep.mubr.bf16.mxu0 %v1240
  %2417 = vmatmul.mubr.bf16.gmra.mrb[0].mxu0 %v1239
  %v2418 = vpop.f32.mrb[0].mxu0
  %v2419 = vadd.f32 %v2130, %v2418
  %v2420 = vpop.f32.mrb[0].mxu0
  %v2421 = vpop.f32.mrb[0].mxu0
  %v2422 = vadd.f32 %v2133, %v2421
  %v2423 = vpop.f32.mrb[0].mxu0
  %2424 = vmatprep.mubr.bf16.mxu0 %v1247
  %2425 = vmatmul.mubr.bf16.gmra.mrb[0].mxu0 %v1246
  %v2426 = vpop.f32.mrb[0].mxu0
  %v2427 = vadd.f32 %v2138, %v2426
  %v2428 = vpop.f32.mrb[0].mxu0
  %v2429 = vpop.f32.mrb[0].mxu0
  %v2430 = vadd.f32 %v2141, %v2429
  %v2431 = vpop.f32.mrb[0].mxu0
  %2432 = vmatprep.mubr.bf16.mxu0 %v1254
  %2433 = vmatmul.mubr.bf16.gmra.mrb[0].mxu0 %v1253
  %v2434 = vpop.f32.mrb[0].mxu0
  %v2435 = vadd.f32 %v2146, %v2434
  %v2436 = vpop.f32.mrb[0].mxu0
  %v2437 = vpop.f32.mrb[0].mxu0
  %v2438 = vadd.f32 %v2149, %v2437
  %v2439 = vpop.f32.mrb[0].mxu0
  %2440 = vmatprep.mubr.bf16.mxu0 %v1261
  %2441 = vmatmul.mubr.bf16.gmra.mrb[0].mxu0 %v1260
  %v2442 = vpop.f32.mrb[0].mxu0
  %v2443 = vadd.f32 %v2154, %v2442
  %v2444 = vpop.f32.mrb[0].mxu0
  %v2445 = vpop.f32.mrb[0].mxu0
  %v2446 = vadd.f32 %v2157, %v2445
  %v2447 = vpop.f32.mrb[0].mxu0
  %2448 = vmatprep.mubr.bf16.mxu0 %v1268
  %2449 = vmatmul.mubr.bf16.gmra.mrb[0].mxu0 %v1267
  %v2450 = vpop.f32.mrb[0].mxu0
  %v2451 = vadd.f32 %v2162, %v2450
  %v2452 = vpop.f32.mrb[0].mxu0
  %v2453 = vpop.f32.mrb[0].mxu0
  %v2454 = vadd.f32 %v2165, %v2453
  %v2455 = vpop.f32.mrb[0].mxu0
  %2456 = vmatprep.mubr.bf16.mxu0 %v1275
  %2457 = vmatmul.mubr.bf16.gmra.mrb[0].mxu0 %v1274
  %v2458 = vpop.f32.mrb[0].mxu0
  %v2459 = vadd.f32 %v2170, %v2458
  %v2460 = vpop.f32.mrb[0].mxu0
  %v2461 = vpop.f32.mrb[0].mxu0
  %v2462 = vadd.f32 %v2173, %v2461
  %v2463 = vpop.f32.mrb[0].mxu0
  %2464 = vmatprep.mubr.bf16.mxu0 %v1282
  %2465 = vmatmul.mubr.bf16.gmra.mrb[0].mxu0 %v1281
  %v2466 = vpop.f32.mrb[0].mxu0
  %v2467 = vadd.f32 %v2178, %v2466
  %v2468 = vpop.f32.mrb[0].mxu0
  %v2469 = vpop.f32.mrb[0].mxu0
  %v2470 = vadd.f32 %v2181, %v2469
  %v2471 = vpop.f32.mrb[0].mxu0
  %2472 = vmatprep.mubr.bf16.mxu0 %v1289
  %2473 = vmatmul.mubr.bf16.gmra.mrb[0].mxu0 %v1288
  %v2474 = vpop.f32.mrb[0].mxu0
  %v2475 = vadd.f32 %v2186, %v2474
  %v2476 = vpop.f32.mrb[0].mxu0
  %v2477 = vpop.f32.mrb[0].mxu0
  %v2478 = vadd.f32 %v2189, %v2477
  %v2479 = vpop.f32.mrb[0].mxu0
  %2480 = vmatprep.mubr.bf16.mxu0 %v1296
  %2481 = vmatmul.mubr.bf16.gmra.mrb[0].mxu0 %v1295
  %v2482 = vpop.f32.mrb[0].mxu0
  %v2483 = vadd.f32 %v2194, %v2482
  %v2484 = vpop.f32.mrb[0].mxu0
  %v2485 = vpop.f32.mrb[0].mxu0
  %v2486 = vadd.f32 %v2197, %v2485
  %v2487 = vpop.f32.mrb[0].mxu0
  %2488 = vmatprep.mubr.bf16.mxu0 %v1303
  %2489 = vmatmul.mubr.bf16.gmra.mrb[0].mxu0 %v1302
  %v2490 = vpop.f32.mrb[0].mxu0
  %v2491 = vadd.f32 %v2202, %v2490
  %v2492 = vpop.f32.mrb[0].mxu0
  %v2493 = vpop.f32.mrb[0].mxu0
  %v2494 = vadd.f32 %v2205, %v2493
  %v2495 = vpop.f32.mrb[0].mxu0
  %2496 = vmatprep.mubr.bf16.mxu0 %v1310
  %2497 = vmatmul.mubr.bf16.gmra.mrb[0].mxu0 %v1309
  %v2498 = vpop.f32.mrb[0].mxu0
  %v2499 = vadd.f32 %v2210, %v2498
  %v2500 = vpop.f32.mrb[0].mxu0
  %v2501 = vpop.f32.mrb[0].mxu0
  %v2502 = vadd.f32 %v2213, %v2501
  %v2503 = vpop.f32.mrb[0].mxu0
  %2504 = vdwg.mxu0
  %2505 = vmatprep.subr.bf16.mxu0 0
  %2506 = vmatpush1.bf16.msra.mxu0 %v1754
  %2507 = vmatprep.subr.bf16.mxu0 0
  %2508 = vmatpush1.bf16.msra.mxu0 %v1755
  %2509 = vmatprep.subr.bf16.mxu0 0
  %2510 = vmatpush1.bf16.msra.mxu0 %v1756
  %2511 = vmatprep.subr.bf16.mxu0 0
  %2512 = vmatpush1.bf16.msra.mxu0 %v1757
  %2513 = vmatprep.subr.bf16.mxu0 0
  %2514 = vmatpush1.bf16.msra.mxu0 %v1758
  %2515 = vmatprep.subr.bf16.mxu0 0
  %2516 = vmatpush1.bf16.msra.mxu0 %v1759
  %2517 = vmatprep.subr.bf16.mxu0 0
  %2518 = vmatpush1.bf16.msra.mxu0 %v1760
  %2519 = vmatprep.subr.bf16.mxu0 0
  %2520 = vmatpush1.bf16.msra.mxu0 %v1761
  %2521 = vmatprep.subr.bf16.mxu0 0
  %2522 = vmatpush1.bf16.msra.mxu0 %v1762
  %2523 = vmatprep.subr.bf16.mxu0 0
  %2524 = vmatpush1.bf16.msra.mxu0 %v1763
  %2525 = vmatprep.subr.bf16.mxu0 0
  %2526 = vmatpush1.bf16.msra.mxu0 %v1764
  %2527 = vmatprep.subr.bf16.mxu0 0
  %2528 = vmatpush1.bf16.msra.mxu0 %v1765
  %2529 = vmatprep.subr.bf16.mxu0 0
  %2530 = vmatpush1.bf16.msra.mxu0 %v1766
  %2531 = vmatprep.subr.bf16.mxu0 0
  %2532 = vmatpush1.bf16.msra.mxu0 %v1767
  %2533 = vmatprep.subr.bf16.mxu0 0
  %2534 = vmatpush1.bf16.msra.mxu0 %v1768
  %2535 = vmatprep.subr.bf16.mxu0 0
  %2536 = vmatpush1.bf16.msra.mxu0 %v1769
  %2537 = vmatprep.mubr.bf16.mxu0 %v1095
  %2538 = vmatmul.mubr.bf16.gmra.mrb[0].mxu0 %v1094
  %v2539 = vpop.f32.mrb[0].mxu0
  %v2540 = vadd.f32 %v2251, %v2539
  %v2541 = vpop.f32.mrb[0].mxu0
  %v2542 = vpop.f32.mrb[0].mxu0
  %v2543 = vadd.f32 %v2254, %v2542
  %v2544 = vpop.f32.mrb[0].mxu0
  %2545 = vmatprep.mubr.bf16.mxu0 %v1102
  %2546 = vmatmul.mubr.bf16.gmra.mrb[0].mxu0 %v1101
  %v2547 = vpop.f32.mrb[0].mxu0
  %v2548 = vadd.f32 %v2259, %v2547
  %v2549 = vpop.f32.mrb[0].mxu0
  %v2550 = vpop.f32.mrb[0].mxu0
  %v2551 = vadd.f32 %v2262, %v2550
  %v2552 = vpop.f32.mrb[0].mxu0
  %2553 = vmatprep.mubr.bf16.mxu0 %v1109
  %2554 = vmatmul.mubr.bf16.gmra.mrb[0].mxu0 %v1108
  %v2555 = vpop.f32.mrb[0].mxu0
  %v2556 = vadd.f32 %v2267, %v2555
  %v2557 = vpop.f32.mrb[0].mxu0
  %v2558 = vpop.f32.mrb[0].mxu0
  %v2559 = vadd.f32 %v2270, %v2558
  %v2560 = vpop.f32.mrb[0].mxu0
  %2561 = vmatprep.mubr.bf16.mxu0 %v1116
  %2562 = vmatmul.mubr.bf16.gmra.mrb[0].mxu0 %v1115
  %v2563 = vpop.f32.mrb[0].mxu0
  %v2564 = vadd.f32 %v2275, %v2563
  %v2565 = vpop.f32.mrb[0].mxu0
  %v2566 = vpop.f32.mrb[0].mxu0
  %v2567 = vadd.f32 %v2278, %v2566
  %v2568 = vpop.f32.mrb[0].mxu0
  %2569 = vmatprep.mubr.bf16.mxu0 %v1123
  %2570 = vmatmul.mubr.bf16.gmra.mrb[0].mxu0 %v1122
  %v2571 = vpop.f32.mrb[0].mxu0
  %v2572 = vadd.f32 %v2283, %v2571
  %v2573 = vpop.f32.mrb[0].mxu0
  %v2574 = vpop.f32.mrb[0].mxu0
  %v2575 = vadd.f32 %v2286, %v2574
  %v2576 = vpop.f32.mrb[0].mxu0
  %2577 = vmatprep.mubr.bf16.mxu0 %v1130
  %2578 = vmatmul.mubr.bf16.gmra.mrb[0].mxu0 %v1129
  %v2579 = vpop.f32.mrb[0].mxu0
  %v2580 = vadd.f32 %v2291, %v2579
  %v2581 = vpop.f32.mrb[0].mxu0
  %v2582 = vpop.f32.mrb[0].mxu0
  %v2583 = vadd.f32 %v2294, %v2582
  %v2584 = vpop.f32.mrb[0].mxu0
  %2585 = vmatprep.mubr.bf16.mxu0 %v1137
  %2586 = vmatmul.mubr.bf16.gmra.mrb[0].mxu0 %v1136
  %v2587 = vpop.f32.mrb[0].mxu0
  %v2588 = vadd.f32 %v2299, %v2587
  %v2589 = vpop.f32.mrb[0].mxu0
  %v2590 = vpop.f32.mrb[0].mxu0
  %v2591 = vadd.f32 %v2302, %v2590
  %v2592 = vpop.f32.mrb[0].mxu0
  %2593 = vmatprep.mubr.bf16.mxu0 %v1144
  %2594 = vmatmul.mubr.bf16.gmra.mrb[0].mxu0 %v1143
  %v2595 = vpop.f32.mrb[0].mxu0
  %v2596 = vadd.f32 %v2307, %v2595
  %v2597 = vpop.f32.mrb[0].mxu0
  %v2598 = vpop.f32.mrb[0].mxu0
  %v2599 = vadd.f32 %v2310, %v2598
  %v2600 = vpop.f32.mrb[0].mxu0
  %2601 = vmatprep.mubr.bf16.mxu0 %v1151
  %2602 = vmatmul.mubr.bf16.gmra.mrb[0].mxu0 %v1150
  %v2603 = vpop.f32.mrb[0].mxu0
  %v2604 = vadd.f32 %v2315, %v2603
  %v2605 = vpop.f32.mrb[0].mxu0
  %v2606 = vpop.f32.mrb[0].mxu0
  %v2607 = vadd.f32 %v2318, %v2606
  %v2608 = vpop.f32.mrb[0].mxu0
  %2609 = vmatprep.mubr.bf16.mxu0 %v1158
  %2610 = vmatmul.mubr.bf16.gmra.mrb[0].mxu0 %v1157
  %v2611 = vpop.f32.mrb[0].mxu0
  %v2612 = vadd.f32 %v2323, %v2611
  %v2613 = vpop.f32.mrb[0].mxu0
  %v2614 = vpop.f32.mrb[0].mxu0
  %v2615 = vadd.f32 %v2326, %v2614
  %v2616 = vpop.f32.mrb[0].mxu0
  %2617 = vmatprep.mubr.bf16.mxu0 %v1165
  %2618 = vmatmul.mubr.bf16.gmra.mrb[0].mxu0 %v1164
  %v2619 = vpop.f32.mrb[0].mxu0
  %v2620 = vadd.f32 %v2331, %v2619
  %v2621 = vpop.f32.mrb[0].mxu0
  %v2622 = vpop.f32.mrb[0].mxu0
  %v2623 = vadd.f32 %v2334, %v2622
  %v2624 = vpop.f32.mrb[0].mxu0
  %2625 = vmatprep.mubr.bf16.mxu0 %v1172
  %2626 = vmatmul.mubr.bf16.gmra.mrb[0].mxu0 %v1171
  %v2627 = vpop.f32.mrb[0].mxu0
  %v2628 = vadd.f32 %v2339, %v2627
  %v2629 = vpop.f32.mrb[0].mxu0
  %v2630 = vpop.f32.mrb[0].mxu0
  %v2631 = vadd.f32 %v2342, %v2630
  %v2632 = vpop.f32.mrb[0].mxu0
  %2633 = vmatprep.mubr.bf16.mxu0 %v1179
  %2634 = vmatmul.mubr.bf16.gmra.mrb[0].mxu0 %v1178
  %v2635 = vpop.f32.mrb[0].mxu0
  %v2636 = vadd.f32 %v2347, %v2635
  %v2637 = vpop.f32.mrb[0].mxu0
  %v2638 = vpop.f32.mrb[0].mxu0
  %v2639 = vadd.f32 %v2350, %v2638
  %v2640 = vpop.f32.mrb[0].mxu0
  %2641 = vmatprep.mubr.bf16.mxu0 %v1186
  %2642 = vmatmul.mubr.bf16.gmra.mrb[0].mxu0 %v1185
  %v2643 = vpop.f32.mrb[0].mxu0
  %v2644 = vadd.f32 %v2355, %v2643
  %v2645 = vpop.f32.mrb[0].mxu0
  %v2646 = vpop.f32.mrb[0].mxu0
  %v2647 = vadd.f32 %v2358, %v2646
  %v2648 = vpop.f32.mrb[0].mxu0
  %2649 = vmatprep.mubr.bf16.mxu0 %v1193
  %2650 = vmatmul.mubr.bf16.gmra.mrb[0].mxu0 %v1192
  %v2651 = vpop.f32.mrb[0].mxu0
  %v2652 = vadd.f32 %v2363, %v2651
  %v2653 = vpop.f32.mrb[0].mxu0
  %v2654 = vpop.f32.mrb[0].mxu0
  %v2655 = vadd.f32 %v2366, %v2654
  %v2656 = vpop.f32.mrb[0].mxu0
  %2657 = vmatprep.mubr.bf16.mxu0 %v1200
  %2658 = vmatmul.mubr.bf16.gmra.mrb[0].mxu0 %v1199
  %v2659 = vpop.f32.mrb[0].mxu0
  %v2660 = vadd.f32 %v2371, %v2659
  %v2661 = vpop.f32.mrb[0].mxu0
  %v2662 = vpop.f32.mrb[0].mxu0
  %v2663 = vadd.f32 %v2374, %v2662
  %v2664 = vpop.f32.mrb[0].mxu0
  %2665 = vmatprep.mubr.bf16.mxu0 %v1207
  %2666 = vmatmul.mubr.bf16.gmra.mrb[0].mxu0 %v1206
  %v2667 = vpop.f32.mrb[0].mxu0
  %v2668 = vadd.f32 %v2379, %v2667
  %v2669 = vpop.f32.mrb[0].mxu0
  %v2670 = vpop.f32.mrb[0].mxu0
  %v2671 = vadd.f32 %v2382, %v2670
  %v2672 = vpop.f32.mrb[0].mxu0
  %2673 = vmatprep.mubr.bf16.mxu0 %v1214
  %2674 = vmatmul.mubr.bf16.gmra.mrb[0].mxu0 %v1213
  %v2675 = vpop.f32.mrb[0].mxu0
  %v2676 = vadd.f32 %v2387, %v2675
  %v2677 = vpop.f32.mrb[0].mxu0
  %v2678 = vpop.f32.mrb[0].mxu0
  %v2679 = vadd.f32 %v2390, %v2678
  %v2680 = vpop.f32.mrb[0].mxu0
  %2681 = vmatprep.mubr.bf16.mxu0 %v1221
  %2682 = vmatmul.mubr.bf16.gmra.mrb[0].mxu0 %v1220
  %v2683 = vpop.f32.mrb[0].mxu0
  %v2684 = vadd.f32 %v2395, %v2683
  %v2685 = vpop.f32.mrb[0].mxu0
  %v2686 = vpop.f32.mrb[0].mxu0
  %v2687 = vadd.f32 %v2398, %v2686
  %v2688 = vpop.f32.mrb[0].mxu0
  %2689 = vmatprep.mubr.bf16.mxu0 %v1228
  %2690 = vmatmul.mubr.bf16.gmra.mrb[0].mxu0 %v1227
  %v2691 = vpop.f32.mrb[0].mxu0
  %v2692 = vadd.f32 %v2403, %v2691
  %v2693 = vpop.f32.mrb[0].mxu0
  %v2694 = vpop.f32.mrb[0].mxu0
  %v2695 = vadd.f32 %v2406, %v2694
  %v2696 = vpop.f32.mrb[0].mxu0
  %2697 = vmatprep.mubr.bf16.mxu0 %v1235
  %2698 = vmatmul.mubr.bf16.gmra.mrb[0].mxu0 %v1234
  %v2699 = vpop.f32.mrb[0].mxu0
  %v2700 = vadd.f32 %v2411, %v2699
  %v2701 = vpop.f32.mrb[0].mxu0
  %v2702 = vpop.f32.mrb[0].mxu0
  %v2703 = vadd.f32 %v2414, %v2702
  %v2704 = vpop.f32.mrb[0].mxu0
  %2705 = vmatprep.mubr.bf16.mxu0 %v1242
  %2706 = vmatmul.mubr.bf16.gmra.mrb[0].mxu0 %v1241
  %v2707 = vpop.f32.mrb[0].mxu0
  %v2708 = vadd.f32 %v2419, %v2707
  %v2709 = vpop.f32.mrb[0].mxu0
  %v2710 = vpop.f32.mrb[0].mxu0
  %v2711 = vadd.f32 %v2422, %v2710
  %v2712 = vpop.f32.mrb[0].mxu0
  %2713 = vmatprep.mubr.bf16.mxu0 %v1249
  %2714 = vmatmul.mubr.bf16.gmra.mrb[0].mxu0 %v1248
  %v2715 = vpop.f32.mrb[0].mxu0
  %v2716 = vadd.f32 %v2427, %v2715
  %v2717 = vpop.f32.mrb[0].mxu0
  %v2718 = vpop.f32.mrb[0].mxu0
  %v2719 = vadd.f32 %v2430, %v2718
  %v2720 = vpop.f32.mrb[0].mxu0
  %2721 = vmatprep.mubr.bf16.mxu0 %v1256
  %2722 = vmatmul.mubr.bf16.gmra.mrb[0].mxu0 %v1255
  %v2723 = vpop.f32.mrb[0].mxu0
  %v2724 = vadd.f32 %v2435, %v2723
  %v2725 = vpop.f32.mrb[0].mxu0
  %v2726 = vpop.f32.mrb[0].mxu0
  %v2727 = vadd.f32 %v2438, %v2726
  %v2728 = vpop.f32.mrb[0].mxu0
  %2729 = vmatprep.mubr.bf16.mxu0 %v1263
  %2730 = vmatmul.mubr.bf16.gmra.mrb[0].mxu0 %v1262
  %v2731 = vpop.f32.mrb[0].mxu0
  %v2732 = vadd.f32 %v2443, %v2731
  %v2733 = vpop.f32.mrb[0].mxu0
  %v2734 = vpop.f32.mrb[0].mxu0
  %v2735 = vadd.f32 %v2446, %v2734
  %v2736 = vpop.f32.mrb[0].mxu0
  %2737 = vmatprep.mubr.bf16.mxu0 %v1270
  %2738 = vmatmul.mubr.bf16.gmra.mrb[0].mxu0 %v1269
  %v2739 = vpop.f32.mrb[0].mxu0
  %v2740 = vadd.f32 %v2451, %v2739
  %v2741 = vpop.f32.mrb[0].mxu0
  %v2742 = vpop.f32.mrb[0].mxu0
  %v2743 = vadd.f32 %v2454, %v2742
  %v2744 = vpop.f32.mrb[0].mxu0
  %2745 = vmatprep.mubr.bf16.mxu0 %v1277
  %2746 = vmatmul.mubr.bf16.gmra.mrb[0].mxu0 %v1276
  %v2747 = vpop.f32.mrb[0].mxu0
  %v2748 = vadd.f32 %v2459, %v2747
  %v2749 = vpop.f32.mrb[0].mxu0
  %v2750 = vpop.f32.mrb[0].mxu0
  %v2751 = vadd.f32 %v2462, %v2750
  %v2752 = vpop.f32.mrb[0].mxu0
  %2753 = vmatprep.mubr.bf16.mxu0 %v1284
  %2754 = vmatmul.mubr.bf16.gmra.mrb[0].mxu0 %v1283
  %v2755 = vpop.f32.mrb[0].mxu0
  %v2756 = vadd.f32 %v2467, %v2755
  %v2757 = vpop.f32.mrb[0].mxu0
  %v2758 = vpop.f32.mrb[0].mxu0
  %v2759 = vadd.f32 %v2470, %v2758
  %v2760 = vpop.f32.mrb[0].mxu0
  %2761 = vmatprep.mubr.bf16.mxu0 %v1291
  %2762 = vmatmul.mubr.bf16.gmra.mrb[0].mxu0 %v1290
  %v2763 = vpop.f32.mrb[0].mxu0
  %v2764 = vadd.f32 %v2475, %v2763
  %v2765 = vpop.f32.mrb[0].mxu0
  %v2766 = vpop.f32.mrb[0].mxu0
  %v2767 = vadd.f32 %v2478, %v2766
  %v2768 = vpop.f32.mrb[0].mxu0
  %2769 = vmatprep.mubr.bf16.mxu0 %v1298
  %2770 = vmatmul.mubr.bf16.gmra.mrb[0].mxu0 %v1297
  %v2771 = vpop.f32.mrb[0].mxu0
  %v2772 = vadd.f32 %v2483, %v2771
  %v2773 = vpop.f32.mrb[0].mxu0
  %v2774 = vpop.f32.mrb[0].mxu0
  %v2775 = vadd.f32 %v2486, %v2774
  %v2776 = vpop.f32.mrb[0].mxu0
  %2777 = vmatprep.mubr.bf16.mxu0 %v1305
  %2778 = vmatmul.mubr.bf16.gmra.mrb[0].mxu0 %v1304
  %v2779 = vpop.f32.mrb[0].mxu0
  %v2780 = vadd.f32 %v2491, %v2779
  %v2781 = vpop.f32.mrb[0].mxu0
  %v2782 = vpop.f32.mrb[0].mxu0
  %v2783 = vadd.f32 %v2494, %v2782
  %v2784 = vpop.f32.mrb[0].mxu0
  %2785 = vmatprep.mubr.bf16.mxu0 %v1312
  %2786 = vmatmul.mubr.bf16.gmra.mrb[0].mxu0 %v1311
  %v2787 = vpop.f32.mrb[0].mxu0
  %v2788 = vadd.f32 %v2499, %v2787
  %v2789 = vpop.f32.mrb[0].mxu0
  %v2790 = vpop.f32.mrb[0].mxu0
  %v2791 = vadd.f32 %v2502, %v2790
  %v2792 = vpop.f32.mrb[0].mxu0
  %2793 = vdwg.mxu0
  %2794 = vmatprep.subr.bf16.mxu0 0
  %2795 = vmatpush1.bf16.msra.mxu0 %v1770
  %2796 = vmatprep.subr.bf16.mxu0 0
  %2797 = vmatpush1.bf16.msra.mxu0 %v1771
  %2798 = vmatprep.subr.bf16.mxu0 0
  %2799 = vmatpush1.bf16.msra.mxu0 %v1772
  %2800 = vmatprep.subr.bf16.mxu0 0
  %2801 = vmatpush1.bf16.msra.mxu0 %v1773
  %2802 = vmatprep.subr.bf16.mxu0 0
  %2803 = vmatpush1.bf16.msra.mxu0 %v1774
  %2804 = vmatprep.subr.bf16.mxu0 0
  %2805 = vmatpush1.bf16.msra.mxu0 %v1775
  %2806 = vmatprep.subr.bf16.mxu0 0
  %2807 = vmatpush1.bf16.msra.mxu0 0
  %2808 = vmatprep.subr.bf16.mxu0 0
  %2809 = vmatpush1.bf16.msra.mxu0 0
  %2810 = vmatprep.subr.bf16.mxu0 0
  %2811 = vmatpush1.bf16.msra.mxu0 0
  %2812 = vmatprep.subr.bf16.mxu0 0
  %2813 = vmatpush1.bf16.msra.mxu0 0
  %2814 = vmatprep.subr.bf16.mxu0 0
  %2815 = vmatpush1.bf16.msra.mxu0 0
  %2816 = vmatprep.subr.bf16.mxu0 0
  %2817 = vmatpush1.bf16.msra.mxu0 0
  %2818 = vmatprep.subr.bf16.mxu0 0
  %2819 = vmatpush1.bf16.msra.mxu0 0
  %2820 = vmatprep.subr.bf16.mxu0 0
  %2821 = vmatpush1.bf16.msra.mxu0 0
  %2822 = vmatprep.subr.bf16.mxu0 0
  %2823 = vmatpush1.bf16.msra.mxu0 0
  %2824 = vmatprep.subr.bf16.mxu0 0
  %2825 = vmatpush1.bf16.msra.mxu0 0
  %2826 = vmatprep.mubr.bf16.mxu0 0
  %2827 = vmatmul.mubr.bf16.gmra.mrb[0].mxu0 %v1832
  %v2828 = vpop.f32.mrb[0].mxu0
  %v2829 = vadd.f32 %v2540, %v2828
  %v2830 = vpop.f32.mrb[0].mxu0
  %v2831 = vpop.f32.mrb[0].mxu0
  %v2832 = vadd.f32 %v2543, %v2831
  %v2833 = vpop.f32.mrb[0].mxu0
  %2834 = vmatprep.mubr.bf16.mxu0 0
  %2835 = vmatmul.mubr.bf16.gmra.mrb[0].mxu0 %v1835
  %v2836 = vpop.f32.mrb[0].mxu0
  %v2837 = vadd.f32 %v2548, %v2836
  %v2838 = vpop.f32.mrb[0].mxu0
  %v2839 = vpop.f32.mrb[0].mxu0
  %v2840 = vadd.f32 %v2551, %v2839
  %v2841 = vpop.f32.mrb[0].mxu0
  %2842 = vmatprep.mubr.bf16.mxu0 0
  %2843 = vmatmul.mubr.bf16.gmra.mrb[0].mxu0 %v1838
  %v2844 = vpop.f32.mrb[0].mxu0
  %v2845 = vadd.f32 %v2556, %v2844
  %v2846 = vpop.f32.mrb[0].mxu0
  %v2847 = vpop.f32.mrb[0].mxu0
  %v2848 = vadd.f32 %v2559, %v2847
  %v2849 = vpop.f32.mrb[0].mxu0
  %2850 = vmatprep.mubr.bf16.mxu0 0
  %2851 = vmatmul.mubr.bf16.gmra.mrb[0].mxu0 %v1841
  %v2852 = vpop.f32.mrb[0].mxu0
  %v2853 = vadd.f32 %v2564, %v2852
  %v2854 = vpop.f32.mrb[0].mxu0
  %v2855 = vpop.f32.mrb[0].mxu0
  %v2856 = vadd.f32 %v2567, %v2855
  %v2857 = vpop.f32.mrb[0].mxu0
  %2858 = vmatprep.mubr.bf16.mxu0 0
  %2859 = vmatmul.mubr.bf16.gmra.mrb[0].mxu0 %v1844
  %v2860 = vpop.f32.mrb[0].mxu0
  %v2861 = vadd.f32 %v2572, %v2860
  %v2862 = vpop.f32.mrb[0].mxu0
  %v2863 = vpop.f32.mrb[0].mxu0
  %v2864 = vadd.f32 %v2575, %v2863
  %v2865 = vpop.f32.mrb[0].mxu0
  %2866 = vmatprep.mubr.bf16.mxu0 0
  %2867 = vmatmul.mubr.bf16.gmra.mrb[0].mxu0 %v1847
  %v2868 = vpop.f32.mrb[0].mxu0
  %v2869 = vadd.f32 %v2580, %v2868
  %v2870 = vpop.f32.mrb[0].mxu0
  %v2871 = vpop.f32.mrb[0].mxu0
  %v2872 = vadd.f32 %v2583, %v2871
  %v2873 = vpop.f32.mrb[0].mxu0
  %2874 = vmatprep.mubr.bf16.mxu0 0
  %2875 = vmatmul.mubr.bf16.gmra.mrb[0].mxu0 %v1850
  %v2876 = vpop.f32.mrb[0].mxu0
  %v2877 = vadd.f32 %v2588, %v2876
  %v2878 = vpop.f32.mrb[0].mxu0
  %v2879 = vpop.f32.mrb[0].mxu0
  %v2880 = vadd.f32 %v2591, %v2879
  %v2881 = vpop.f32.mrb[0].mxu0
  %2882 = vmatprep.mubr.bf16.mxu0 0
  %2883 = vmatmul.mubr.bf16.gmra.mrb[0].mxu0 %v1853
  %v2884 = vpop.f32.mrb[0].mxu0
  %v2885 = vadd.f32 %v2596, %v2884
  %v2886 = vpop.f32.mrb[0].mxu0
  %v2887 = vpop.f32.mrb[0].mxu0
  %v2888 = vadd.f32 %v2599, %v2887
  %v2889 = vpop.f32.mrb[0].mxu0
  %2890 = vmatprep.mubr.bf16.mxu0 0
  %2891 = vmatmul.mubr.bf16.gmra.mrb[0].mxu0 %v1856
  %v2892 = vpop.f32.mrb[0].mxu0
  %v2893 = vadd.f32 %v2604, %v2892
  %v2894 = vpop.f32.mrb[0].mxu0
  %v2895 = vpop.f32.mrb[0].mxu0
  %v2896 = vadd.f32 %v2607, %v2895
  %v2897 = vpop.f32.mrb[0].mxu0
  %2898 = vmatprep.mubr.bf16.mxu0 0
  %2899 = vmatmul.mubr.bf16.gmra.mrb[0].mxu0 %v1859
  %v2900 = vpop.f32.mrb[0].mxu0
  %v2901 = vadd.f32 %v2612, %v2900
  %v2902 = vpop.f32.mrb[0].mxu0
  %v2903 = vpop.f32.mrb[0].mxu0
  %v2904 = vadd.f32 %v2615, %v2903
  %v2905 = vpop.f32.mrb[0].mxu0
  %2906 = vmatprep.mubr.bf16.mxu0 0
  %2907 = vmatmul.mubr.bf16.gmra.mrb[0].mxu0 %v1862
  %v2908 = vpop.f32.mrb[0].mxu0
  %v2909 = vadd.f32 %v2620, %v2908
  %v2910 = vpop.f32.mrb[0].mxu0
  %v2911 = vpop.f32.mrb[0].mxu0
  %v2912 = vadd.f32 %v2623, %v2911
  %v2913 = vpop.f32.mrb[0].mxu0
  %2914 = vmatprep.mubr.bf16.mxu0 0
  %2915 = vmatmul.mubr.bf16.gmra.mrb[0].mxu0 %v1865
  %v2916 = vpop.f32.mrb[0].mxu0
  %v2917 = vadd.f32 %v2628, %v2916
  %v2918 = vpop.f32.mrb[0].mxu0
  %v2919 = vpop.f32.mrb[0].mxu0
  %v2920 = vadd.f32 %v2631, %v2919
  %v2921 = vpop.f32.mrb[0].mxu0
  %2922 = vmatprep.mubr.bf16.mxu0 0
  %2923 = vmatmul.mubr.bf16.gmra.mrb[0].mxu0 %v1868
  %v2924 = vpop.f32.mrb[0].mxu0
  %v2925 = vadd.f32 %v2636, %v2924
  %v2926 = vpop.f32.mrb[0].mxu0
  %v2927 = vpop.f32.mrb[0].mxu0
  %v2928 = vadd.f32 %v2639, %v2927
  %v2929 = vpop.f32.mrb[0].mxu0
  %2930 = vmatprep.mubr.bf16.mxu0 0
  %2931 = vmatmul.mubr.bf16.gmra.mrb[0].mxu0 %v1871
  %v2932 = vpop.f32.mrb[0].mxu0
  %v2933 = vadd.f32 %v2644, %v2932
  %v2934 = vpop.f32.mrb[0].mxu0
  %v2935 = vpop.f32.mrb[0].mxu0
  %v2936 = vadd.f32 %v2647, %v2935
  %v2937 = vpop.f32.mrb[0].mxu0
  %2938 = vmatprep.mubr.bf16.mxu0 0
  %2939 = vmatmul.mubr.bf16.gmra.mrb[0].mxu0 %v1874
  %v2940 = vpop.f32.mrb[0].mxu0
  %v2941 = vadd.f32 %v2652, %v2940
  %v2942 = vpop.f32.mrb[0].mxu0
  %v2943 = vpop.f32.mrb[0].mxu0
  %v2944 = vadd.f32 %v2655, %v2943
  %v2945 = vpop.f32.mrb[0].mxu0
  %2946 = vmatprep.mubr.bf16.mxu0 0
  %2947 = vmatmul.mubr.bf16.gmra.mrb[0].mxu0 %v1877
  %v2948 = vpop.f32.mrb[0].mxu0
  %v2949 = vadd.f32 %v2660, %v2948
  %v2950 = vpop.f32.mrb[0].mxu0
  %v2951 = vpop.f32.mrb[0].mxu0
  %v2952 = vadd.f32 %v2663, %v2951
  %v2953 = vpop.f32.mrb[0].mxu0
  %2954 = vmatprep.mubr.bf16.mxu0 0
  %2955 = vmatmul.mubr.bf16.gmra.mrb[0].mxu0 %v1880
  %v2956 = vpop.f32.mrb[0].mxu0
  %v2957 = vadd.f32 %v2668, %v2956
  %v2958 = vpop.f32.mrb[0].mxu0
  %v2959 = vpop.f32.mrb[0].mxu0
  %v2960 = vadd.f32 %v2671, %v2959
  %v2961 = vpop.f32.mrb[0].mxu0
  %2962 = vmatprep.mubr.bf16.mxu0 0
  %2963 = vmatmul.mubr.bf16.gmra.mrb[0].mxu0 %v1883
  %v2964 = vpop.f32.mrb[0].mxu0
  %v2965 = vadd.f32 %v2676, %v2964
  %v2966 = vpop.f32.mrb[0].mxu0
  %v2967 = vpop.f32.mrb[0].mxu0
  %v2968 = vadd.f32 %v2679, %v2967
  %v2969 = vpop.f32.mrb[0].mxu0
  %2970 = vmatprep.mubr.bf16.mxu0 0
  %2971 = vmatmul.mubr.bf16.gmra.mrb[0].mxu0 %v1886
  %v2972 = vpop.f32.mrb[0].mxu0
  %v2973 = vadd.f32 %v2684, %v2972
  %v2974 = vpop.f32.mrb[0].mxu0
  %v2975 = vpop.f32.mrb[0].mxu0
  %v2976 = vadd.f32 %v2687, %v2975
  %v2977 = vpop.f32.mrb[0].mxu0
  %2978 = vmatprep.mubr.bf16.mxu0 0
  %2979 = vmatmul.mubr.bf16.gmra.mrb[0].mxu0 %v1889
  %v2980 = vpop.f32.mrb[0].mxu0
  %v2981 = vadd.f32 %v2692, %v2980
  %v2982 = vpop.f32.mrb[0].mxu0
  %v2983 = vpop.f32.mrb[0].mxu0
  %v2984 = vadd.f32 %v2695, %v2983
  %v2985 = vpop.f32.mrb[0].mxu0
  %2986 = vmatprep.mubr.bf16.mxu0 0
  %2987 = vmatmul.mubr.bf16.gmra.mrb[0].mxu0 %v1892
  %v2988 = vpop.f32.mrb[0].mxu0
  %v2989 = vadd.f32 %v2700, %v2988
  %v2990 = vpop.f32.mrb[0].mxu0
  %v2991 = vpop.f32.mrb[0].mxu0
  %v2992 = vadd.f32 %v2703, %v2991
  %v2993 = vpop.f32.mrb[0].mxu0
  %2994 = vmatprep.mubr.bf16.mxu0 0
  %2995 = vmatmul.mubr.bf16.gmra.mrb[0].mxu0 %v1895
  %v2996 = vpop.f32.mrb[0].mxu0
  %v2997 = vadd.f32 %v2708, %v2996
  %v2998 = vpop.f32.mrb[0].mxu0
  %v2999 = vpop.f32.mrb[0].mxu0
  %v3000 = vadd.f32 %v2711, %v2999
  %v3001 = vpop.f32.mrb[0].mxu0
  %3002 = vmatprep.mubr.bf16.mxu0 0
  %3003 = vmatmul.mubr.bf16.gmra.mrb[0].mxu0 %v1898
  %v3004 = vpop.f32.mrb[0].mxu0
  %v3005 = vadd.f32 %v2716, %v3004
  %v3006 = vpop.f32.mrb[0].mxu0
  %v3007 = vpop.f32.mrb[0].mxu0
  %v3008 = vadd.f32 %v2719, %v3007
  %v3009 = vpop.f32.mrb[0].mxu0
  %3010 = vmatprep.mubr.bf16.mxu0 0
  %3011 = vmatmul.mubr.bf16.gmra.mrb[0].mxu0 %v1901
  %v3012 = vpop.f32.mrb[0].mxu0
  %v3013 = vadd.f32 %v2724, %v3012
  %v3014 = vpop.f32.mrb[0].mxu0
  %v3015 = vpop.f32.mrb[0].mxu0
  %v3016 = vadd.f32 %v2727, %v3015
  %v3017 = vpop.f32.mrb[0].mxu0
  %3018 = vmatprep.mubr.bf16.mxu0 0
  %3019 = vmatmul.mubr.bf16.gmra.mrb[0].mxu0 %v1904
  %v3020 = vpop.f32.mrb[0].mxu0
  %v3021 = vadd.f32 %v2732, %v3020
  %v3022 = vpop.f32.mrb[0].mxu0
  %v3023 = vpop.f32.mrb[0].mxu0
  %v3024 = vadd.f32 %v2735, %v3023
  %v3025 = vpop.f32.mrb[0].mxu0
  %3026 = vmatprep.mubr.bf16.mxu0 0
  %3027 = vmatmul.mubr.bf16.gmra.mrb[0].mxu0 %v1907
  %v3028 = vpop.f32.mrb[0].mxu0
  %v3029 = vadd.f32 %v2740, %v3028
  %v3030 = vpop.f32.mrb[0].mxu0
  %v3031 = vpop.f32.mrb[0].mxu0
  %v3032 = vadd.f32 %v2743, %v3031
  %v3033 = vpop.f32.mrb[0].mxu0
  %3034 = vmatprep.mubr.bf16.mxu0 0
  %3035 = vmatmul.mubr.bf16.gmra.mrb[0].mxu0 %v1910
  %v3036 = vpop.f32.mrb[0].mxu0
  %v3037 = vadd.f32 %v2748, %v3036
  %v3038 = vpop.f32.mrb[0].mxu0
  %v3039 = vpop.f32.mrb[0].mxu0
  %v3040 = vadd.f32 %v2751, %v3039
  %v3041 = vpop.f32.mrb[0].mxu0
  %3042 = vmatprep.mubr.bf16.mxu0 0
  %3043 = vmatmul.mubr.bf16.gmra.mrb[0].mxu0 %v1913
  %v3044 = vpop.f32.mrb[0].mxu0
  %v3045 = vadd.f32 %v2756, %v3044
  %v3046 = vpop.f32.mrb[0].mxu0
  %v3047 = vpop.f32.mrb[0].mxu0
  %v3048 = vadd.f32 %v2759, %v3047
  %v3049 = vpop.f32.mrb[0].mxu0
  %3050 = vmatprep.mubr.bf16.mxu0 0
  %3051 = vmatmul.mubr.bf16.gmra.mrb[0].mxu0 %v1916
  %v3052 = vpop.f32.mrb[0].mxu0
  %v3053 = vadd.f32 %v2764, %v3052
  %v3054 = vpop.f32.mrb[0].mxu0
  %v3055 = vpop.f32.mrb[0].mxu0
  %v3056 = vadd.f32 %v2767, %v3055
  %v3057 = vpop.f32.mrb[0].mxu0
  %3058 = vmatprep.mubr.bf16.mxu0 0
  %3059 = vmatmul.mubr.bf16.gmra.mrb[0].mxu0 %v1919
  %v3060 = vpop.f32.mrb[0].mxu0
  %v3061 = vadd.f32 %v2772, %v3060
  %v3062 = vpop.f32.mrb[0].mxu0
  %v3063 = vpop.f32.mrb[0].mxu0
  %v3064 = vadd.f32 %v2775, %v3063
  %v3065 = vpop.f32.mrb[0].mxu0
  %3066 = vmatprep.mubr.bf16.mxu0 0
  %3067 = vmatmul.mubr.bf16.gmra.mrb[0].mxu0 %v1922
  %v3068 = vpop.f32.mrb[0].mxu0
  %v3069 = vadd.f32 %v2780, %v3068
  %v3070 = vpop.f32.mrb[0].mxu0
  %v3071 = vpop.f32.mrb[0].mxu0
  %v3072 = vadd.f32 %v2783, %v3071
  %v3073 = vpop.f32.mrb[0].mxu0
  %3074 = vmatprep.mubr.bf16.mxu0 0
  %3075 = vmatmul.mubr.bf16.gmra.mrb[0].mxu0 %v1925
  %v3076 = vpop.f32.mrb[0].mxu0
  %v3077 = vadd.f32 %v2788, %v3076
  %v3078 = vpop.f32.mrb[0].mxu0
  %v3079 = vpop.f32.mrb[0].mxu0
  %v3080 = vadd.f32 %v2791, %v3079
  %v3081 = vpop.f32.mrb[0].mxu0
  %3082 = vdwg.mxu0
  %vm3083 = vcmask 97280
  %3084 = vst.msk [vmem:[%s3] sm:$0xff] %vm3083, %v2829
  %3085 = vst.msk [vmem:[%s3 + $0x8] sm:$0xff] %vm3083, %v2832
  %3086 = vst.msk [vmem:[%s3 + $0x10] sm:$0xff] %vm3083, %v2837
  %3087 = vst.msk [vmem:[%s3 + $0x18] sm:$0xff] %vm3083, %v2840
  %3088 = vst.msk [vmem:[%s3 + $0x20] sm:$0xff] %vm3083, %v2845
  %3089 = vst.msk [vmem:[%s3 + $0x28] sm:$0xff] %vm3083, %v2848
  %3090 = vst.msk [vmem:[%s3 + $0x30] sm:$0xff] %vm3083, %v2853
  %3091 = vst.msk [vmem:[%s3 + $0x38] sm:$0xff] %vm3083, %v2856
  %3092 = vst.msk [vmem:[%s3 + $0x40] sm:$0xff] %vm3083, %v2861
  %3093 = vst.msk [vmem:[%s3 + $0x48] sm:$0xff] %vm3083, %v2864
  %3094 = vst.msk [vmem:[%s3 + $0x50] sm:$0xff] %vm3083, %v2869
  %3095 = vst.msk [vmem:[%s3 + $0x58] sm:$0xff] %vm3083, %v2872
  %3096 = vst.msk [vmem:[%s3 + $0x60] sm:$0xff] %vm3083, %v2877
  %3097 = vst.msk [vmem:[%s3 + $0x68] sm:$0xff] %vm3083, %v2880
  %3098 = vst.msk [vmem:[%s3 + $0x70] sm:$0xff] %vm3083, %v2885
  %3099 = vst.msk [vmem:[%s3 + $0x78] sm:$0xff] %vm3083, %v2888
  %3100 = vst.msk [vmem:[%s3 + $0x80] sm:$0xff] %vm3083, %v2893
  %3101 = vst.msk [vmem:[%s3 + $0x88] sm:$0xff] %vm3083, %v2896
  %3102 = vst.msk [vmem:[%s3 + $0x90] sm:$0xff] %vm3083, %v2901
  %3103 = vst.msk [vmem:[%s3 + $0x98] sm:$0xff] %vm3083, %v2904
  %3104 = vst.msk [vmem:[%s3 + $0xa0] sm:$0xff] %vm3083, %v2909
  %3105 = vst.msk [vmem:[%s3 + $0xa8] sm:$0xff] %vm3083, %v2912
  %3106 = vst.msk [vmem:[%s3 + $0xb0] sm:$0xff] %vm3083, %v2917
  %3107 = vst.msk [vmem:[%s3 + $0xb8] sm:$0xff] %vm3083, %v2920
  %3108 = vst.msk [vmem:[%s3 + $0xc0] sm:$0xff] %vm3083, %v2925
  %3109 = vst.msk [vmem:[%s3 + $0xc8] sm:$0xff] %vm3083, %v2928
  %3110 = vst.msk [vmem:[%s3 + $0xd0] sm:$0xff] %vm3083, %v2933
  %3111 = vst.msk [vmem:[%s3 + $0xd8] sm:$0xff] %vm3083, %v2936
  %3112 = vst.msk [vmem:[%s3 + $0xe0] sm:$0xff] %vm3083, %v2941
  %3113 = vst.msk [vmem:[%s3 + $0xe8] sm:$0xff] %vm3083, %v2944
  %3114 = vst.msk [vmem:[%s3 + $0xf0] sm:$0xff] %vm3083, %v2949
  %3115 = vst.msk [vmem:[%s3 + $0xf8] sm:$0xff] %vm3083, %v2952
  %3116 = vst.msk [vmem:[%s3 + $0x100] sm:$0xff] %vm3083, %v2957
  %3117 = vst.msk [vmem:[%s3 + $0x108] sm:$0xff] %vm3083, %v2960
  %3118 = vst.msk [vmem:[%s3 + $0x110] sm:$0xff] %vm3083, %v2965
  %3119 = vst.msk [vmem:[%s3 + $0x118] sm:$0xff] %vm3083, %v2968
  %3120 = vst.msk [vmem:[%s3 + $0x120] sm:$0xff] %vm3083, %v2973
  %3121 = vst.msk [vmem:[%s3 + $0x128] sm:$0xff] %vm3083, %v2976
  %3122 = vst.msk [vmem:[%s3 + $0x130] sm:$0xff] %vm3083, %v2981
  %3123 = vst.msk [vmem:[%s3 + $0x138] sm:$0xff] %vm3083, %v2984
  %3124 = vst.msk [vmem:[%s3 + $0x140] sm:$0xff] %vm3083, %v2989
  %3125 = vst.msk [vmem:[%s3 + $0x148] sm:$0xff] %vm3083, %v2992
  %3126 = vst.msk [vmem:[%s3 + $0x150] sm:$0xff] %vm3083, %v2997
  %3127 = vst.msk [vmem:[%s3 + $0x158] sm:$0xff] %vm3083, %v3000
  %3128 = vst.msk [vmem:[%s3 + $0x160] sm:$0xff] %vm3083, %v3005
  %3129 = vst.msk [vmem:[%s3 + $0x168] sm:$0xff] %vm3083, %v3008
  %3130 = vst.msk [vmem:[%s3 + $0x170] sm:$0xff] %vm3083, %v3013
  %3131 = vst.msk [vmem:[%s3 + $0x178] sm:$0xff] %vm3083, %v3016
  %3132 = vst.msk [vmem:[%s3 + $0x180] sm:$0xff] %vm3083, %v3021
  %3133 = vst.msk [vmem:[%s3 + $0x188] sm:$0xff] %vm3083, %v3024
  %3134 = vst.msk [vmem:[%s3 + $0x190] sm:$0xff] %vm3083, %v3029
  %3135 = vst.msk [vmem:[%s3 + $0x198] sm:$0xff] %vm3083, %v3032
  %3136 = vst.msk [vmem:[%s3 + $0x1a0] sm:$0xff] %vm3083, %v3037
  %3137 = vst.msk [vmem:[%s3 + $0x1a8] sm:$0xff] %vm3083, %v3040
  %3138 = vst.msk [vmem:[%s3 + $0x1b0] sm:$0xff] %vm3083, %v3045
  %3139 = vst.msk [vmem:[%s3 + $0x1b8] sm:$0xff] %vm3083, %v3048
  %3140 = vst.msk [vmem:[%s3 + $0x1c0] sm:$0xff] %vm3083, %v3053
  %3141 = vst.msk [vmem:[%s3 + $0x1c8] sm:$0xff] %vm3083, %v3056
  %3142 = vst.msk [vmem:[%s3 + $0x1d0] sm:$0xff] %vm3083, %v3061
  %3143 = vst.msk [vmem:[%s3 + $0x1d8] sm:$0xff] %vm3083, %v3064
  %3144 = vst.msk [vmem:[%s3 + $0x1e0] sm:$0xff] %vm3083, %v3069
  %3145 = vst.msk [vmem:[%s3 + $0x1e8] sm:$0xff] %vm3083, %v3072
  %3146 = vst.msk [vmem:[%s3 + $0x1f0] sm:$0xff] %vm3083, %v3077
  %3147 = vst.msk [vmem:[%s3 + $0x1f8] sm:$0xff] %vm3083, %v3080
  // Predicated region
  $region14: #{decoder_forward.27} parent=0 // pred_check
    _
  $region15: #{decoder_forward.27} parent=0 // pred_check_branch
    %3149 = sbr.rel (0) target = $region17
  $region16: #{decoder_forward.27} parent=0 // pred_region
    _
  $region17: #{decoder_forward.27} parent=0 // pred_fallthru
    _
  // Predicated region
  $region18: #{decoder_forward.27} parent=0 // pred_check
    _
  $region19: #{decoder_forward.27} parent=0 // pred_check_branch
    %3151 = sbr.rel (0) target = $region21
  $region20: #{decoder_forward.27} parent=0 // pred_region
    _
  $region21: #{decoder_forward.27} parent=0 // pred_fallthru
    _

</llo_original>
